<compile_context>
chip_gen: v7x
topology: tpu7x:2x2x1
jax: 0.10.0
libtpu: 0.0.40
codegen_flags: <defaults>
</compile_context>

<pallas_src>
import math
import functools

import jax
import jax.numpy as jnp
from jax.experimental import pallas as pl
from jax.experimental.pallas import tpu as pltpu

NEG_INF = -1e30           # stand-in for float('-inf'); added in f32 *after* the bf16 dot
LN_EPS = 1e-5
VMEM_LIMIT = 32 * 1024 * 1024   # explicit budget, safe on v5e/v6e/v7x


# ----------------------------- fused attention block -----------------------------

def _mha_kernel(*refs, num_heads, self_attn, eps):
    """Fused: QKV projection -> per-head attention -> out projection -> residual + LN.

    Self-attention:  refs = (x, kpm, wqkv, bqkv, wo, bo, ln_g, ln_b, out)
    Cross-attention: refs = (x, kv,  wqkv, bqkv, wo, bo, ln_g, ln_b, out)
    """
    if self_attn:
        x_ref, kpm_ref, wqkv_ref, bqkv_ref, wo_ref, bo_ref, g_ref, b_ref, o_ref = refs
        kv_ref = x_ref
    else:
        x_ref, kv_ref, wqkv_ref, bqkv_ref, wo_ref, bo_ref, g_ref, b_ref, o_ref = refs
        kpm_ref = None

    x = x_ref[0]                                  # (T, E) f32
    T, E = x.shape
    H = num_heads
    dh = E // H

    wqkv = wqkv_ref[...]                          # (E, 3E) bf16
    bqkv = bqkv_ref[...]                          # (1, 3E) f32
    x_bf = x.astype(jnp.bfloat16)

    if self_attn:
        # single fused QKV matmul
        qkv = jnp.dot(x_bf, wqkv, preferred_element_type=jnp.float32) + bqkv
        q = qkv[:, :E]
        k = qkv[:, E:2 * E]
        v = qkv[:, 2 * E:]
        Tk = T
    else:
        kv = kv_ref[0]                            # (Tk, E)
        Tk = kv.shape[0]
        q = jnp.dot(x_bf, wqkv[:, :E], preferred_element_type=jnp.float32) + bqkv[:, :E]
        kvp = jnp.dot(kv.astype(jnp.bfloat16), wqkv[:, E:],
                      preferred_element_type=jnp.float32) + bqkv[:, E:]
        k = kvp[:, :E]
        v = kvp[:, E:]

    # additive mask (f32), generated in-kernel; only self-attention is masked in this model
    if self_attn:
        row = jax.lax.broadcasted_iota(jnp.int32, (T, Tk), 0)
        col = jax.lax.broadcasted_iota(jnp.int32, (T, Tk), 1)
        add_mask = jnp.where(row >= col, 0.0, NEG_INF) + kpm_ref[0]   # (T, Tk) f32
    else:
        add_mask = None

    # per-head attention, statically unrolled inside the kernel (no extra launches / HBM trips)
    # NOTE: 1/sqrt(dh) is already folded into the Q weights & bias.
    contract_last = (((1,), (1,)), ((), ()))      # q @ k^T without materializing a transpose
    head_outs = []
    for h in range(H):
        qh = q[:, h * dh:(h + 1) * dh].astype(jnp.bfloat16)
        kh = k[:, h * dh:(h + 1) * dh].astype(jnp.bfloat16)
        vh = v[:, h * dh:(h + 1) * dh].astype(jnp.bfloat16)
        s = jax.lax.dot_general(qh, kh, contract_last,
                                preferred_element_type=jnp.float32)   # (T, Tk) f32
        if add_mask is not None:
            s = s + add_mask
        s_max = jnp.max(s, axis=-1, keepdims=True)
        p = jnp.exp(s - s_max)
        p = p * pl.reciprocal(jnp.sum(p, axis=-1, keepdims=True), approx=True)
        head_outs.append(jnp.dot(p.astype(jnp.bfloat16), vh,
                                 preferred_element_type=jnp.float32))  # (T, dh)
    attn = jnp.concatenate(head_outs, axis=-1)                         # (T, E) f32

    # output projection + residual + LayerNorm (post-norm), all in-register/VMEM
    attn = jnp.dot(attn.astype(jnp.bfloat16), wo_ref[...],
                   preferred_element_type=jnp.float32) + bo_ref[...]
    z = x + attn
    mu = jnp.mean(z, axis=-1, keepdims=True)
    var = jnp.mean((z - mu) ** 2, axis=-1, keepdims=True)
    y = ((z - mu) * jax.lax.rsqrt(var + eps)) * g_ref[...] + b_ref[...]
    o_ref[0] = y.astype(o_ref.dtype)


def _mha_call(x, kv, kpm_add, p, ln_g, ln_b, num_heads, self_attn):
    """x: (B, T, E); kv: (B, Tk, E); kpm_add: (B, 1, T) additive key-padding mask or None."""
    B, T, E = x.shape
    Tk = kv.shape[1]
    kernel = functools.partial(_mha_kernel, num_heads=num_heads,
                               self_attn=self_attn, eps=LN_EPS)

    in_specs = [pl.BlockSpec((1, T, E), lambda b: (b, 0, 0))]
    args = [x]
    if self_attn:
        in_specs.append(pl.BlockSpec((1, 1, T), lambda b: (b, 0, 0)))
        args.append(kpm_add)
    else:
        in_specs.append(pl.BlockSpec((1, Tk, E), lambda b: (b, 0, 0)))
        args.append(kv)
    # weights: constant block index -> stay resident in VMEM across the batch grid
    in_specs += [
        pl.BlockSpec((E, 3 * E), lambda b: (0, 0)),
        pl.BlockSpec((1, 3 * E), lambda b: (0, 0)),
        pl.BlockSpec((E, E), lambda b: (0, 0)),
        pl.BlockSpec((1, E), lambda b: (0, 0)),
        pl.BlockSpec((1, E), lambda b: (0, 0)),
        pl.BlockSpec((1, E), lambda b: (0, 0)),
    ]
    args += [p['wqkv'], p['bqkv'], p['wo'], p['bo'], ln_g, ln_b]

    return pl.pallas_call(
        kernel,
        out_shape=jax.ShapeDtypeStruct((B, T, E), jnp.float32),
        grid=(B,),
        in_specs=in_specs,
        out_specs=pl.BlockSpec((1, T, E), lambda b: (b, 0, 0)),
        compiler_params=pltpu.CompilerParams(
            dimension_semantics=("parallel",),
            vmem_limit_bytes=VMEM_LIMIT),
    )(*args)


# ----------------------------- fused feed-forward block -----------------------------

def _ffn_kernel(x_ref, w1_ref, b1_ref, w2_ref, b2_ref, g_ref, b_ref, o_ref, *, eps):
    x = x_ref[...]                                                     # (tm, E) f32
    h = jnp.dot(x.astype(jnp.bfloat16), w1_ref[...],
                preferred_element_type=jnp.float32) + b1_ref[...]
    h = jnp.maximum(h, 0.0)
    ff = jnp.dot(h.astype(jnp.bfloat16), w2_ref[...],
                 preferred_element_type=jnp.float32) + b2_ref[...]
    z = x + ff
    mu = jnp.mean(z, axis=-1, keepdims=True)
    var = jnp.mean((z - mu) ** 2, axis=-1, keepdims=True)
    o_ref[...] = (((z - mu) * jax.lax.rsqrt(var + eps)) * g_ref[...]
                  + b_ref[...]).astype(o_ref.dtype)


def fused_ffn(x, p):
    B, T, E = x.shape
    BT = B * T
    F = p['w1'].shape[1]
    xm = x.reshape(BT, E)
    tm = BT if BT <= 256 else 256
    out = pl.pallas_call(
        functools.partial(_ffn_kernel, eps=LN_EPS),
        out_shape=jax.ShapeDtypeStruct((BT, E), jnp.float32),
        grid=(pl.cdiv(BT, tm),),
        in_specs=[pl.BlockSpec((tm, E), lambda i: (i, 0)),
                  pl.BlockSpec((E, F), lambda i: (0, 0)),
                  pl.BlockSpec((1, F), lambda i: (0, 0)),
                  pl.BlockSpec((F, E), lambda i: (0, 0)),
                  pl.BlockSpec((1, E), lambda i: (0, 0)),
                  pl.BlockSpec((1, E), lambda i: (0, 0)),
                  pl.BlockSpec((1, E), lambda i: (0, 0))],
        out_specs=pl.BlockSpec((tm, E), lambda i: (i, 0)),
        compiler_params=pltpu.CompilerParams(
            dimension_semantics=("parallel",),
            vmem_limit_bytes=VMEM_LIMIT),
    )(xm, p['w1'], p['b1'], p['w2'], p['b2'], p['ln3_g'], p['ln3_b'])
    return out.reshape(B, T, E)


# ----------------------------- tiled vocab projection -----------------------------

def _logits_kernel(x_ref, w_ref, b_ref, o_ref):
    o_ref[...] = (jnp.dot(x_ref[...].astype(jnp.bfloat16), w_ref[...],
                          preferred_element_type=jnp.float32) + b_ref[...]).astype(o_ref.dtype)


def project_logits(x, w, b):
    """x: (M, E) f32, w: (E, V) bf16, b: (1, V) f32 -> (M, V) f32, tiled over (M, V)."""
    M, E = x.shape
    V = w.shape[1]
    tm = M if M <= 256 else 256
    tn = V if V <= 512 else 512
    return pl.pallas_call(
        _logits_kernel,
        out_shape=jax.ShapeDtypeStruct((M, V), jnp.float32),
        grid=(pl.cdiv(M, tm), pl.cdiv(V, tn)),
        in_specs=[pl.BlockSpec((tm, E), lambda i, j: (i, 0)),
                  pl.BlockSpec((E, tn), lambda i, j: (0, j)),
                  pl.BlockSpec((1, tn), lambda i, j: (0, j))],
        out_specs=pl.BlockSpec((tm, tn), lambda i, j: (i, j)),
        compiler_params=pltpu.CompilerParams(
            dimension_semantics=("parallel", "parallel"),
            vmem_limit_bytes=VMEM_LIMIT),
    )(x, w, b)


# ----------------------------- model glue -----------------------------

def decoder_forward(features, captions, params, num_heads):
    """Decoder.forward: returns (logits (T, B, V), pad_mask (B, T))."""
    B, T = captions.shape
    E = params['embedding'].shape[1]

    # embedding gather + scale + positional encoding (dropout = identity) stay in XLA:
    # launch overhead of a kernel would exceed its compute.
    emb = params['embedding'][captions]                                # (B, T, E)
    x = emb * math.sqrt(E) + params['pe'][:T][None, :, :]              # (B, T, E)

    # key-padding additive mask (B, 1, T); the causal part is generated in-kernel.
    kpm_add = jnp.where(captions == 0, NEG_INF, 0.0).astype(jnp.float32)[:, None, :]

    for lp in params['layers']:
        x = _mha_call(x, x, kpm_add, lp['sa'], lp['ln1_g'], lp['ln1_b'],
                      num_heads, self_attn=True)
        x = _mha_call(x, features, None, lp['ca'], lp['ln2_g'], lp['ln2_b'],
                      num_heads, self_attn=False)
        x = fused_ffn(x, lp)

    V = params['fc_w'].shape[1]
    logits = project_logits(x.reshape(B * T, E), params['fc_w'], params['fc_b'])
    logits = logits.reshape(B, T, V).transpose(1, 0, 2)                # (T, B, V), seq-first
    pad_mask = jnp.where(captions == 0, 0.0, 1.0).astype(jnp.float32)
    return logits, pad_mask


# ----------------------------- deterministic parameter init -----------------------------

def _lin_init(key, fan_in, fan_out):
    kw, kb = jax.random.split(key)
    bound = 1.0 / math.sqrt(fan_in)
    w = jax.random.uniform(kw, (fan_in, fan_out), jnp.float32, -bound, bound)
    b = jax.random.uniform(kb, (fan_out,), jnp.float32, -bound, bound)
    return w, b


def init_params(key, vocab_size, embed_size, num_heads, num_layers,
                dim_feedforward=2048, max_len=40):
    E = embed_size
    dh = E // num_heads
    scale = 1.0 / math.sqrt(dh)
    keys = iter(jax.random.split(key, 4 + num_layers * 12))

    # Decoder.init_weights(): embedding & fc_out uniform(-0.1, 0.1), fc_out bias zero
    emb = jax.random.uniform(next(keys), (vocab_size, E), jnp.float32, -0.1, 0.1)
    fc_w = jax.random.uniform(next(keys), (E, vocab_size), jnp.float32, -0.1, 0.1)
    fc_b = jnp.zeros((1, vocab_size), jnp.float32)

    # PositionalEncoding buffer
    pos = jnp.arange(max_len, dtype=jnp.float32)[:, None]
    div = jnp.exp(jnp.arange(0, E, 2, dtype=jnp.float32) * (-math.log(10000.0) / E))
    pe = jnp.zeros((max_len, E), jnp.float32)
    pe = pe.at[:, 0::2].set(jnp.sin(pos * div))
    pe = pe.at[:, 1::2].set(jnp.cos(pos * div))

    def attn_block():
        wq, bq = _lin_init(next(keys), E, E)
        wk, bk = _lin_init(next(keys), E, E)
        wv, bv = _lin_init(next(keys), E, E)
        wo, bo = _lin_init(next(keys), E, E)
        # fold the 1/sqrt(dh) attention scale into the Q projection
        wq = wq * scale
        bq = bq * scale
        wqkv = jnp.concatenate([wq, wk, wv], axis=1).astype(jnp.bfloat16)   # (E, 3E)
        bqkv = jnp.concatenate([bq, bk, bv])[None, :]                       # (1, 3E) f32
        return dict(wqkv=wqkv, bqkv=bqkv,
                    wo=wo.astype(jnp.bfloat16), bo=bo[None, :])

    layers = []
    for _ in range(num_layers):
        sa = attn_block()
        ca = attn_block()
        w1, b1 = _lin_init(next(keys), E, dim_feedforward)
        w2, b2 = _lin_init(next(keys), dim_feedforward, E)
        layers.append(dict(
            sa=sa, ca=ca,
            w1=w1.astype(jnp.bfloat16), b1=b1[None, :],
            w2=w2.astype(jnp.bfloat16), b2=b2[None, :],
            ln1_g=jnp.ones((1, E), jnp.float32), ln1_b=jnp.zeros((1, E), jnp.float32),
            ln2_g=jnp.ones((1, E), jnp.float32), ln2_b=jnp.zeros((1, E), jnp.float32),
            ln3_g=jnp.ones((1, E), jnp.float32), ln3_b=jnp.zeros((1, E), jnp.float32),
        ))

    return dict(embedding=emb, fc_w=fc_w.astype(jnp.bfloat16), fc_b=fc_b, pe=pe, layers=layers)


# ----------------------------- main -----------------------------

if __name__ == "__main__":
    B, T, S = 2, 8, 8          # batch, caption length, image-feature sequence length
    E, H, L, V = 32, 4, 2, 64  # embed size, heads, decoder layers, vocab size

    key = jax.random.PRNGKey(0)
    kf, kc, kp = jax.random.split(key, 3)

    features = jax.random.normal(kf, (B, S, E), jnp.float32)
    captions = jax.random.randint(kc, (B, T), 1, V).astype(jnp.int32)
    captions = captions.at[:, 0].set(59)    # start token
    captions = captions.at[:, -2:].set(0)   # tail padding to exercise the key-padding mask

    params = init_params(kp, V, E, H, L)

    fwd = jax.jit(decoder_forward, static_argnums=3)
    logits, pad_mask = fwd(features, captions, params, H)
    jax.block_until_ready((logits, pad_mask))

    assert logits.shape == (T, B, V), logits.shape
    assert pad_mask.shape == (B, T), pad_mask.shape
    assert bool(jnp.all(jnp.isfinite(logits)))

    # TODO(synk): dropout is stochastic in train mode; implemented as identity (eval mode).
    print("KERNEL_OK")
</pallas_src>

<mosaic_0001>
module attributes {stable_mosaic.version = 11 : i64} {
  func.func @_ffn_kernel(%arg0: i32, %arg1: memref<16x32xf32, #tpu.memory_space<vmem>>, %arg2: memref<32x2048xbf16, #tpu.memory_space<vmem>>, %arg3: memref<1x2048xf32, #tpu.memory_space<vmem>>, %arg4: memref<2048x32xbf16, #tpu.memory_space<vmem>>, %arg5: memref<1x32xf32, #tpu.memory_space<vmem>>, %arg6: memref<1x32xf32, #tpu.memory_space<vmem>>, %arg7: memref<1x32xf32, #tpu.memory_space<vmem>>, %arg8: memref<16x32xf32, #tpu.memory_space<vmem>>) attributes {dimension_semantics = [#tpu.dimension_semantics<parallel>], iteration_bounds = array<i64: 1>, scalar_prefetch = 0 : i64, scratch_operands = 0 : i64, tpu.core_type = #tpu.core_type<tc>, window_params = [{transform_indices = @transform_0, window_bounds = array<i64: 16, 32>}, {pipeline_mode = #tpu.pipeline_mode<synchronous>, transform_indices = @transform_1, window_bounds = array<i64: 32, 2048>}, {pipeline_mode = #tpu.pipeline_mode<synchronous>, transform_indices = @transform_2, window_bounds = array<i64: 1, 2048>}, {pipeline_mode = #tpu.pipeline_mode<synchronous>, transform_indices = @transform_3, window_bounds = array<i64: 2048, 32>}, {pipeline_mode = #tpu.pipeline_mode<synchronous>, transform_indices = @transform_4, window_bounds = array<i64: 1, 32>}, {pipeline_mode = #tpu.pipeline_mode<synchronous>, transform_indices = @transform_5, window_bounds = array<i64: 1, 32>}, {pipeline_mode = #tpu.pipeline_mode<synchronous>, transform_indices = @transform_6, window_bounds = array<i64: 1, 32>}, {transform_indices = @transform_7, window_bounds = array<i64: 16, 32>}]} {
    %c0 = arith.constant 0 : index
    %c0_0 = arith.constant 0 : index
    %0 = vector.load %arg1[%c0, %c0_0] : memref<16x32xf32, #tpu.memory_space<vmem>>, vector<16x32xf32>
    %1 = arith.truncf %0 : vector<16x32xf32> to vector<16x32xbf16>
    %c0_1 = arith.constant 0 : index
    %c0_2 = arith.constant 0 : index
    %2 = vector.load %arg2[%c0_1, %c0_2] : memref<32x2048xbf16, #tpu.memory_space<vmem>>, vector<32x2048xbf16>
    %cst = arith.constant dense<0.000000e+00> : vector<16x2048xf32>
    %3 = tpu.matmul %1, %2, %cst {dimension_numbers = #tpu.dot_dimension_numbers<[1], [0], [0], [1], [0, 0, 1, 1], [], []>} : vector<16x32xbf16>, vector<32x2048xbf16>, vector<16x2048xf32> -> vector<16x2048xf32>
    %c0_3 = arith.constant 0 : index
    %c0_4 = arith.constant 0 : index
    %4 = vector.load %arg3[%c0_3, %c0_4] : memref<1x2048xf32, #tpu.memory_space<vmem>>, vector<1x2048xf32>
    %5 = vector.broadcast %4 : vector<1x2048xf32> to vector<16x2048xf32>
    %6 = arith.addf %3, %5 : vector<16x2048xf32>
    %cst_5 = arith.constant 0.000000e+00 : f32
    %7 = vector.broadcast %cst_5 : f32 to vector<16x2048xf32>
    %8 = arith.maximumf %6, %7 : vector<16x2048xf32>
    %9 = arith.truncf %8 : vector<16x2048xf32> to vector<16x2048xbf16>
    %c0_6 = arith.constant 0 : index
    %c0_7 = arith.constant 0 : index
    %10 = vector.load %arg4[%c0_6, %c0_7] : memref<2048x32xbf16, #tpu.memory_space<vmem>>, vector<2048x32xbf16>
    %cst_8 = arith.constant dense<0.000000e+00> : vector<16x32xf32>
    %11 = tpu.matmul %9, %10, %cst_8 {dimension_numbers = #tpu.dot_dimension_numbers<[1], [0], [0], [1], [0, 0, 1, 1], [], []>} : vector<16x2048xbf16>, vector<2048x32xbf16>, vector<16x32xf32> -> vector<16x32xf32>
    %c0_9 = arith.constant 0 : index
    %c0_10 = arith.constant 0 : index
    %12 = vector.load %arg5[%c0_9, %c0_10] : memref<1x32xf32, #tpu.memory_space<vmem>>, vector<1x32xf32>
    %13 = vector.broadcast %12 : vector<1x32xf32> to vector<16x32xf32>
    %14 = arith.addf %11, %13 : vector<16x32xf32>
    %15 = arith.addf %0, %14 : vector<16x32xf32>
    %cst_11 = arith.constant dense<0.000000e+00> : vector<16xf32>
    %16 = vector.multi_reduction <add>, %15, %cst_11 [1] : vector<16x32xf32> to vector<16xf32>
    %17 = vector.shape_cast %16 : vector<16xf32> to vector<16x1xf32>
    %cst_12 = arith.constant 3.200000e+01 : f32
    %18 = vector.broadcast %cst_12 : f32 to vector<16x1xf32>
    %19 = arith.divf %17, %18 : vector<16x1xf32>
    %20 = vector.broadcast %19 : vector<16x1xf32> to vector<16x32xf32>
    %21 = arith.subf %15, %20 : vector<16x32xf32>
    %22 = arith.mulf %21, %21 : vector<16x32xf32>
    %cst_13 = arith.constant dense<0.000000e+00> : vector<16xf32>
    %23 = vector.multi_reduction <add>, %22, %cst_13 [1] : vector<16x32xf32> to vector<16xf32>
    %24 = vector.shape_cast %23 : vector<16xf32> to vector<16x1xf32>
    %cst_14 = arith.constant 3.200000e+01 : f32
    %25 = vector.broadcast %cst_14 : f32 to vector<16x1xf32>
    %26 = arith.divf %24, %25 : vector<16x1xf32>
    %27 = vector.broadcast %19 : vector<16x1xf32> to vector<16x32xf32>
    %28 = arith.subf %15, %27 : vector<16x32xf32>
    %cst_15 = arith.constant 9.99999974E-6 : f32
    %29 = vector.broadcast %cst_15 : f32 to vector<16x1xf32>
    %30 = arith.addf %26, %29 : vector<16x1xf32>
    %31 = math.rsqrt %30 : vector<16x1xf32>
    %32 = vector.broadcast %31 : vector<16x1xf32> to vector<16x32xf32>
    %33 = arith.mulf %28, %32 : vector<16x32xf32>
    %c0_16 = arith.constant 0 : index
    %c0_17 = arith.constant 0 : index
    %34 = vector.load %arg6[%c0_16, %c0_17] : memref<1x32xf32, #tpu.memory_space<vmem>>, vector<1x32xf32>
    %35 = vector.broadcast %34 : vector<1x32xf32> to vector<16x32xf32>
    %36 = arith.mulf %33, %35 : vector<16x32xf32>
    %c0_18 = arith.constant 0 : index
    %c0_19 = arith.constant 0 : index
    %37 = vector.load %arg7[%c0_18, %c0_19] : memref<1x32xf32, #tpu.memory_space<vmem>>, vector<1x32xf32>
    %38 = vector.broadcast %37 : vector<1x32xf32> to vector<16x32xf32>
    %39 = arith.addf %36, %38 : vector<16x32xf32>
    %c0_20 = arith.constant 0 : index
    %c0_21 = arith.constant 0 : index
    %40 = vector.load %arg8[%c0_20, %c0_21] : memref<16x32xf32, #tpu.memory_space<vmem>>, vector<16x32xf32>
    tpu.vector_store %arg8[%c0_20, %c0_21], %39 {strides = array<i32>} : memref<16x32xf32, #tpu.memory_space<vmem>>, vector<16x32xf32>,
    return
  }
  func.func @transform_0(%arg0: i32) -> (i32, i32) {
    %c0_i32 = arith.constant 0 : i32
    %c0_i32_0 = arith.constant 0 : i32
    return %arg0, %c0_i32 : i32, i32
  }
  func.func @transform_1(%arg0: i32) -> (i32, i32) {
    %c0_i32 = arith.constant 0 : i32
    %c0_i32_0 = arith.constant 0 : i32
    %c0_i32_1 = arith.constant 0 : i32
    return %c0_i32, %c0_i32_0 : i32, i32
  }
  func.func @transform_2(%arg0: i32) -> (i32, i32) {
    %c0_i32 = arith.constant 0 : i32
    %c0_i32_0 = arith.constant 0 : i32
    %c0_i32_1 = arith.constant 0 : i32
    return %c0_i32, %c0_i32_0 : i32, i32
  }
  func.func @transform_3(%arg0: i32) -> (i32, i32) {
    %c0_i32 = arith.constant 0 : i32
    %c0_i32_0 = arith.constant 0 : i32
    %c0_i32_1 = arith.constant 0 : i32
    return %c0_i32, %c0_i32_0 : i32, i32
  }
  func.func @transform_4(%arg0: i32) -> (i32, i32) {
    %c0_i32 = arith.constant 0 : i32
    %c0_i32_0 = arith.constant 0 : i32
    %c0_i32_1 = arith.constant 0 : i32
    return %c0_i32, %c0_i32_0 : i32, i32
  }
  func.func @transform_5(%arg0: i32) -> (i32, i32) {
    %c0_i32 = arith.constant 0 : i32
    %c0_i32_0 = arith.constant 0 : i32
    %c0_i32_1 = arith.constant 0 : i32
    return %c0_i32, %c0_i32_0 : i32, i32
  }
  func.func @transform_6(%arg0: i32) -> (i32, i32) {
    %c0_i32 = arith.constant 0 : i32
    %c0_i32_0 = arith.constant 0 : i32
    %c0_i32_1 = arith.constant 0 : i32
    return %c0_i32, %c0_i32_0 : i32, i32
  }
  func.func @transform_7(%arg0: i32) -> (i32, i32) {
    %c0_i32 = arith.constant 0 : i32
    %c0_i32_0 = arith.constant 0 : i32
    return %arg0, %c0_i32 : i32, i32
  }
}

module attributes {stable_mosaic.version = 11 : i64} {
  func.func @_mha_kernel(%arg0: i32, %arg1: memref<1x8x32xf32, #tpu.memory_space<vmem>>, %arg2: memref<1x1x8xf32, #tpu.memory_space<vmem>>, %arg3: memref<32x96xbf16, #tpu.memory_space<vmem>>, %arg4: memref<1x96xf32, #tpu.memory_space<vmem>>, %arg5: memref<32x32xbf16, #tpu.memory_space<vmem>>, %arg6: memref<1x32xf32, #tpu.memory_space<vmem>>, %arg7: memref<1x32xf32, #tpu.memory_space<vmem>>, %arg8: memref<1x32xf32, #tpu.memory_space<vmem>>, %arg9: memref<1x8x32xf32, #tpu.memory_space<vmem>>) attributes {dimension_semantics = [#tpu.dimension_semantics<parallel>], iteration_bounds = array<i64: 2>, scalar_prefetch = 0 : i64, scratch_operands = 0 : i64, tpu.core_type = #tpu.core_type<tc>, window_params = [{transform_indices = @transform_0, window_bounds = array<i64: 1, 8, 32>}, {transform_indices = @transform_1, window_bounds = array<i64: 1, 1, 8>}, {pipeline_mode = #tpu.pipeline_mode<synchronous>, transform_indices = @transform_2, window_bounds = array<i64: 32, 96>}, {pipeline_mode = #tpu.pipeline_mode<synchronous>, transform_indices = @transform_3, window_bounds = array<i64: 1, 96>}, {pipeline_mode = #tpu.pipeline_mode<synchronous>, transform_indices = @transform_4, window_bounds = array<i64: 32, 32>}, {pipeline_mode = #tpu.pipeline_mode<synchronous>, transform_indices = @transform_5, window_bounds = array<i64: 1, 32>}, {pipeline_mode = #tpu.pipeline_mode<synchronous>, transform_indices = @transform_6, window_bounds = array<i64: 1, 32>}, {pipeline_mode = #tpu.pipeline_mode<synchronous>, transform_indices = @transform_7, window_bounds = array<i64: 1, 32>}, {transform_indices = @transform_8, window_bounds = array<i64: 1, 8, 32>}]} {
    %c0 = arith.constant 0 : index
    %c0_0 = arith.constant 0 : index
    %c0_1 = arith.constant 0 : index
    %0 = vector.load %arg1[%c0, %c0_0, %c0_1] : memref<1x8x32xf32, #tpu.memory_space<vmem>>, vector<1x8x32xf32>
    %1 = vector.shape_cast %0 : vector<1x8x32xf32> to vector<8x32xf32>
    %c0_2 = arith.constant 0 : index
    %c0_3 = arith.constant 0 : index
    %2 = vector.load %arg3[%c0_2, %c0_3] : memref<32x96xbf16, #tpu.memory_space<vmem>>, vector<32x96xbf16>
    %c0_4 = arith.constant 0 : index
    %c0_5 = arith.constant 0 : index
    %3 = vector.load %arg4[%c0_4, %c0_5] : memref<1x96xf32, #tpu.memory_space<vmem>>, vector<1x96xf32>
    %4 = arith.truncf %1 : vector<8x32xf32> to vector<8x32xbf16>
    %cst = arith.constant dense<0.000000e+00> : vector<8x96xf32>
    %5 = tpu.matmul %4, %2, %cst {dimension_numbers = #tpu.dot_dimension_numbers<[1], [0], [0], [1], [0, 0, 1, 1], [], []>} : vector<8x32xbf16>, vector<32x96xbf16>, vector<8x96xf32> -> vector<8x96xf32>
    %6 = vector.broadcast %3 : vector<1x96xf32> to vector<8x96xf32>
    %7 = arith.addf %5, %6 : vector<8x96xf32>
    %8 = vector.extract_strided_slice %7 {offsets = [0, 0], sizes = [8, 32], strides = [1, 1]} : vector<8x96xf32> to vector<8x32xf32>
    %9 = vector.extract_strided_slice %7 {offsets = [0, 32], sizes = [8, 32], strides = [1, 1]} : vector<8x96xf32> to vector<8x32xf32>
    %10 = vector.extract_strided_slice %7 {offsets = [0, 64], sizes = [8, 32], strides = [1, 1]} : vector<8x96xf32> to vector<8x32xf32>
    %11 = tpu.iota {dimensions = array<i32: 0>} : vector<8x8xi32>
    %12 = tpu.iota {dimensions = array<i32: 1>} : vector<8x8xi32>
    %13 = arith.cmpi sge, %11, %12 : vector<8x8xi32>
    %cst_6 = arith.constant 0.000000e+00 : f32
    %cst_7 = arith.constant -1.000000e+30 : f32
    %14 = vector.broadcast %cst_6 : f32 to vector<8x8xf32>
    %15 = vector.broadcast %cst_7 : f32 to vector<8x8xf32>
    %16 = arith.select %13, %14, %15 : vector<8x8xi1>, vector<8x8xf32>
    %c0_8 = arith.constant 0 : index
    %c0_9 = arith.constant 0 : index
    %c0_10 = arith.constant 0 : index
    %17 = vector.load %arg2[%c0_8, %c0_9, %c0_10] : memref<1x1x8xf32, #tpu.memory_space<vmem>>, vector<1x1x8xf32>
    %18 = vector.shape_cast %17 : vector<1x1x8xf32> to vector<1x8xf32>
    %19 = vector.broadcast %18 : vector<1x8xf32> to vector<8x8xf32>
    %20 = arith.addf %16, %19 : vector<8x8xf32>
    %21 = vector.extract_strided_slice %8 {offsets = [0, 0], sizes = [8, 8], strides = [1, 1]} : vector<8x32xf32> to vector<8x8xf32>
    %22 = arith.truncf %21 : vector<8x8xf32> to vector<8x8xbf16>
    %23 = vector.extract_strided_slice %9 {offsets = [0, 0], sizes = [8, 8], strides = [1, 1]} : vector<8x32xf32> to vector<8x8xf32>
    %24 = arith.truncf %23 : vector<8x8xf32> to vector<8x8xbf16>
    %25 = vector.extract_strided_slice %10 {offsets = [0, 0], sizes = [8, 8], strides = [1, 1]} : vector<8x32xf32> to vector<8x8xf32>
    %26 = arith.truncf %25 : vector<8x8xf32> to vector<8x8xbf16>
    %cst_11 = arith.constant dense<0.000000e+00> : vector<8x8xf32>
    %27 = tpu.matmul %22, %24, %cst_11 {dimension_numbers = #tpu.dot_dimension_numbers<[1], [1], [0], [0], [0, 0, 1, 0], [], []>} : vector<8x8xbf16>, vector<8x8xbf16>, vector<8x8xf32> -> vector<8x8xf32>
    %28 = arith.addf %27, %20 : vector<8x8xf32>
    %cst_12 = arith.constant dense<0xFF800000> : vector<8xf32>
    %29 = vector.multi_reduction <maximumf>, %28, %cst_12 [1] : vector<8x8xf32> to vector<8xf32>
    %30 = vector.shape_cast %29 : vector<8xf32> to vector<8x1xf32>
    %31 = vector.broadcast %30 : vector<8x1xf32> to vector<8x8xf32>
    %32 = arith.subf %28, %31 : vector<8x8xf32>
    %33 = math.exp %32 : vector<8x8xf32>
    %cst_13 = arith.constant dense<0.000000e+00> : vector<8xf32>
    %34 = vector.multi_reduction <add>, %33, %cst_13 [1] : vector<8x8xf32> to vector<8xf32>
    %35 = vector.shape_cast %34 : vector<8xf32> to vector<8x1xf32>
    %36 = tpu.reciprocal %35 {approx = true} : vector<8x1xf32> -> vector<8x1xf32>
    %37 = vector.broadcast %36 : vector<8x1xf32> to vector<8x8xf32>
    %38 = arith.mulf %33, %37 : vector<8x8xf32>
    %39 = arith.truncf %38 : vector<8x8xf32> to vector<8x8xbf16>
    %cst_14 = arith.constant dense<0.000000e+00> : vector<8x8xf32>
    %40 = tpu.matmul %39, %26, %cst_14 {dimension_numbers = #tpu.dot_dimension_numbers<[1], [0], [0], [1], [0, 0, 1, 1], [], []>} : vector<8x8xbf16>, vector<8x8xbf16>, vector<8x8xf32> -> vector<8x8xf32>
    %41 = vector.extract_strided_slice %8 {offsets = [0, 8], sizes = [8, 8], strides = [1, 1]} : vector<8x32xf32> to vector<8x8xf32>
    %42 = arith.truncf %41 : vector<8x8xf32> to vector<8x8xbf16>
    %43 = vector.extract_strided_slice %9 {offsets = [0, 8], sizes = [8, 8], strides = [1, 1]} : vector<8x32xf32> to vector<8x8xf32>
    %44 = arith.truncf %43 : vector<8x8xf32> to vector<8x8xbf16>
    %45 = vector.extract_strided_slice %10 {offsets = [0, 8], sizes = [8, 8], strides = [1, 1]} : vector<8x32xf32> to vector<8x8xf32>
    %46 = arith.truncf %45 : vector<8x8xf32> to vector<8x8xbf16>
    %cst_15 = arith.constant dense<0.000000e+00> : vector<8x8xf32>
    %47 = tpu.matmul %42, %44, %cst_15 {dimension_numbers = #tpu.dot_dimension_numbers<[1], [1], [0], [0], [0, 0, 1, 0], [], []>} : vector<8x8xbf16>, vector<8x8xbf16>, vector<8x8xf32> -> vector<8x8xf32>
    %48 = arith.addf %47, %20 : vector<8x8xf32>
    %cst_16 = arith.constant dense<0xFF800000> : vector<8xf32>
    %49 = vector.multi_reduction <maximumf>, %48, %cst_16 [1] : vector<8x8xf32> to vector<8xf32>
    %50 = vector.shape_cast %49 : vector<8xf32> to vector<8x1xf32>
    %51 = vector.broadcast %50 : vector<8x1xf32> to vector<8x8xf32>
    %52 = arith.subf %48, %51 : vector<8x8xf32>
    %53 = math.exp %52 : vector<8x8xf32>
    %cst_17 = arith.constant dense<0.000000e+00> : vector<8xf32>
    %54 = vector.multi_reduction <add>, %53, %cst_17 [1] : vector<8x8xf32> to vector<8xf32>
    %55 = vector.shape_cast %54 : vector<8xf32> to vector<8x1xf32>
    %56 = tpu.reciprocal %55 {approx = true} : vector<8x1xf32> -> vector<8x1xf32>
    %57 = vector.broadcast %56 : vector<8x1xf32> to vector<8x8xf32>
    %58 = arith.mulf %53, %57 : vector<8x8xf32>
    %59 = arith.truncf %58 : vector<8x8xf32> to vector<8x8xbf16>
    %cst_18 = arith.constant dense<0.000000e+00> : vector<8x8xf32>
    %60 = tpu.matmul %59, %46, %cst_18 {dimension_numbers = #tpu.dot_dimension_numbers<[1], [0], [0], [1], [0, 0, 1, 1], [], []>} : vector<8x8xbf16>, vector<8x8xbf16>, vector<8x8xf32> -> vector<8x8xf32>
    %61 = vector.extract_strided_slice %8 {offsets = [0, 16], sizes = [8, 8], strides = [1, 1]} : vector<8x32xf32> to vector<8x8xf32>
    %62 = arith.truncf %61 : vector<8x8xf32> to vector<8x8xbf16>
    %63 = vector.extract_strided_slice %9 {offsets = [0, 16], sizes = [8, 8], strides = [1, 1]} : vector<8x32xf32> to vector<8x8xf32>
    %64 = arith.truncf %63 : vector<8x8xf32> to vector<8x8xbf16>
    %65 = vector.extract_strided_slice %10 {offsets = [0, 16], sizes = [8, 8], strides = [1, 1]} : vector<8x32xf32> to vector<8x8xf32>
    %66 = arith.truncf %65 : vector<8x8xf32> to vector<8x8xbf16>
    %cst_19 = arith.constant dense<0.000000e+00> : vector<8x8xf32>
    %67 = tpu.matmul %62, %64, %cst_19 {dimension_numbers = #tpu.dot_dimension_numbers<[1], [1], [0], [0], [0, 0, 1, 0], [], []>} : vector<8x8xbf16>, vector<8x8xbf16>, vector<8x8xf32> -> vector<8x8xf32>
    %68 = arith.addf %67, %20 : vector<8x8xf32>
    %cst_20 = arith.constant dense<0xFF800000> : vector<8xf32>
    %69 = vector.multi_reduction <maximumf>, %68, %cst_20 [1] : vector<8x8xf32> to vector<8xf32>
    %70 = vector.shape_cast %69 : vector<8xf32> to vector<8x1xf32>
    %71 = vector.broadcast %70 : vector<8x1xf32> to vector<8x8xf32>
    %72 = arith.subf %68, %71 : vector<8x8xf32>
    %73 = math.exp %72 : vector<8x8xf32>
    %cst_21 = arith.constant dense<0.000000e+00> : vector<8xf32>
    %74 = vector.multi_reduction <add>, %73, %cst_21 [1] : vector<8x8xf32> to vector<8xf32>
    %75 = vector.shape_cast %74 : vector<8xf32> to vector<8x1xf32>
    %76 = tpu.reciprocal %75 {approx = true} : vector<8x1xf32> -> vector<8x1xf32>
    %77 = vector.broadcast %76 : vector<8x1xf32> to vector<8x8xf32>
    %78 = arith.mulf %73, %77 : vector<8x8xf32>
    %79 = arith.truncf %78 : vector<8x8xf32> to vector<8x8xbf16>
    %cst_22 = arith.constant dense<0.000000e+00> : vector<8x8xf32>
    %80 = tpu.matmul %79, %66, %cst_22 {dimension_numbers = #tpu.dot_dimension_numbers<[1], [0], [0], [1], [0, 0, 1, 1], [], []>} : vector<8x8xbf16>, vector<8x8xbf16>, vector<8x8xf32> -> vector<8x8xf32>
    %81 = vector.extract_strided_slice %8 {offsets = [0, 24], sizes = [8, 8], strides = [1, 1]} : vector<8x32xf32> to vector<8x8xf32>
    %82 = arith.truncf %81 : vector<8x8xf32> to vector<8x8xbf16>
    %83 = vector.extract_strided_slice %9 {offsets = [0, 24], sizes = [8, 8], strides = [1, 1]} : vector<8x32xf32> to vector<8x8xf32>
    %84 = arith.truncf %83 : vector<8x8xf32> to vector<8x8xbf16>
    %85 = vector.extract_strided_slice %10 {offsets = [0, 24], sizes = [8, 8], strides = [1, 1]} : vector<8x32xf32> to vector<8x8xf32>
    %86 = arith.truncf %85 : vector<8x8xf32> to vector<8x8xbf16>
    %cst_23 = arith.constant dense<0.000000e+00> : vector<8x8xf32>
    %87 = tpu.matmul %82, %84, %cst_23 {dimension_numbers = #tpu.dot_dimension_numbers<[1], [1], [0], [0], [0, 0, 1, 0], [], []>} : vector<8x8xbf16>, vector<8x8xbf16>, vector<8x8xf32> -> vector<8x8xf32>
    %88 = arith.addf %87, %20 : vector<8x8xf32>
    %cst_24 = arith.constant dense<0xFF800000> : vector<8xf32>
    %89 = vector.multi_reduction <maximumf>, %88, %cst_24 [1] : vector<8x8xf32> to vector<8xf32>
    %90 = vector.shape_cast %89 : vector<8xf32> to vector<8x1xf32>
    %91 = vector.broadcast %90 : vector<8x1xf32> to vector<8x8xf32>
    %92 = arith.subf %88, %91 : vector<8x8xf32>
    %93 = math.exp %92 : vector<8x8xf32>
    %cst_25 = arith.constant dense<0.000000e+00> : vector<8xf32>
    %94 = vector.multi_reduction <add>, %93, %cst_25 [1] : vector<8x8xf32> to vector<8xf32>
    %95 = vector.shape_cast %94 : vector<8xf32> to vector<8x1xf32>
    %96 = tpu.reciprocal %95 {approx = true} : vector<8x1xf32> -> vector<8x1xf32>
    %97 = vector.broadcast %96 : vector<8x1xf32> to vector<8x8xf32>
    %98 = arith.mulf %93, %97 : vector<8x8xf32>
    %99 = arith.truncf %98 : vector<8x8xf32> to vector<8x8xbf16>
    %cst_26 = arith.constant dense<0.000000e+00> : vector<8x8xf32>
    %100 = tpu.matmul %99, %86, %cst_26 {dimension_numbers = #tpu.dot_dimension_numbers<[1], [0], [0], [1], [0, 0, 1, 1], [], []>} : vector<8x8xbf16>, vector<8x8xbf16>, vector<8x8xf32> -> vector<8x8xf32>
    %101 = tpu.concatenate %40, %60, %80, %100 in 1 : vector<8x8xf32>, vector<8x8xf32>, vector<8x8xf32>, vector<8x8xf32> -> vector<8x32xf32>
    %102 = arith.truncf %101 : vector<8x32xf32> to vector<8x32xbf16>
    %c0_27 = arith.constant 0 : index
    %c0_28 = arith.constant 0 : index
    %103 = vector.load %arg5[%c0_27, %c0_28] : memref<32x32xbf16, #tpu.memory_space<vmem>>, vector<32x32xbf16>
    %cst_29 = arith.constant dense<0.000000e+00> : vector<8x32xf32>
    %104 = tpu.matmul %102, %103, %cst_29 {dimension_numbers = #tpu.dot_dimension_numbers<[1], [0], [0], [1], [0, 0, 1, 1], [], []>} : vector<8x32xbf16>, vector<32x32xbf16>, vector<8x32xf32> -> vector<8x32xf32>
    %c0_30 = arith.constant 0 : index
    %c0_31 = arith.constant 0 : index
    %105 = vector.load %arg6[%c0_30, %c0_31] : memref<1x32xf32, #tpu.memory_space<vmem>>, vector<1x32xf32>
    %106 = vector.broadcast %105 : vector<1x32xf32> to vector<8x32xf32>
    %107 = arith.addf %104, %106 : vector<8x32xf32>
    %108 = arith.addf %1, %107 : vector<8x32xf32>
    %cst_32 = arith.constant dense<0.000000e+00> : vector<8xf32>
    %109 = vector.multi_reduction <add>, %108, %cst_32 [1] : vector<8x32xf32> to vector<8xf32>
    %110 = vector.shape_cast %109 : vector<8xf32> to vector<8x1xf32>
    %cst_33 = arith.constant 3.200000e+01 : f32
    %111 = vector.broadcast %cst_33 : f32 to vector<8x1xf32>
    %112 = arith.divf %110, %111 : vector<8x1xf32>
    %113 = vector.broadcast %112 : vector<8x1xf32> to vector<8x32xf32>
    %114 = arith.subf %108, %113 : vector<8x32xf32>
    %115 = arith.mulf %114, %114 : vector<8x32xf32>
    %cst_34 = arith.constant dense<0.000000e+00> : vector<8xf32>
    %116 = vector.multi_reduction <add>, %115, %cst_34 [1] : vector<8x32xf32> to vector<8xf32>
    %117 = vector.shape_cast %116 : vector<8xf32> to vector<8x1xf32>
    %cst_35 = arith.constant 3.200000e+01 : f32
    %118 = vector.broadcast %cst_35 : f32 to vector<8x1xf32>
    %119 = arith.divf %117, %118 : vector<8x1xf32>
    %120 = vector.broadcast %112 : vector<8x1xf32> to vector<8x32xf32>
    %121 = arith.subf %108, %120 : vector<8x32xf32>
    %cst_36 = arith.constant 9.99999974E-6 : f32
    %122 = vector.broadcast %cst_36 : f32 to vector<8x1xf32>
    %123 = arith.addf %119, %122 : vector<8x1xf32>
    %124 = math.rsqrt %123 : vector<8x1xf32>
    %125 = vector.broadcast %124 : vector<8x1xf32> to vector<8x32xf32>
    %126 = arith.mulf %121, %125 : vector<8x32xf32>
    %c0_37 = arith.constant 0 : index
    %c0_38 = arith.constant 0 : index
    %127 = vector.load %arg7[%c0_37, %c0_38] : memref<1x32xf32, #tpu.memory_space<vmem>>, vector<1x32xf32>
    %128 = vector.broadcast %127 : vector<1x32xf32> to vector<8x32xf32>
    %129 = arith.mulf %126, %128 : vector<8x32xf32>
    %c0_39 = arith.constant 0 : index
    %c0_40 = arith.constant 0 : index
    %130 = vector.load %arg8[%c0_39, %c0_40] : memref<1x32xf32, #tpu.memory_space<vmem>>, vector<1x32xf32>
    %131 = vector.broadcast %130 : vector<1x32xf32> to vector<8x32xf32>
    %132 = arith.addf %129, %131 : vector<8x32xf32>
    %c0_41 = arith.constant 0 : index
    %c0_42 = arith.constant 0 : index
    %c0_43 = arith.constant 0 : index
    %133 = vector.load %arg9[%c0_41, %c0_42, %c0_43] : memref<1x8x32xf32, #tpu.memory_space<vmem>>, vector<1x8x32xf32>
    %134 = vector.shape_cast %133 : vector<1x8x32xf32> to vector<8x32xf32>
    %135 = vector.shape_cast %132 : vector<8x32xf32> to vector<1x8x32xf32>
    tpu.vector_store %arg9[%c0_41, %c0_42, %c0_43], %135 {strides = array<i32>} : memref<1x8x32xf32, #tpu.memory_space<vmem>>, vector<1x8x32xf32>,
    return
  }
  func.func @transform_0(%arg0: i32) -> (i32, i32, i32) {
    %c0_i32 = arith.constant 0 : i32
    %c0_i32_0 = arith.constant 0 : i32
    %c0_i32_1 = arith.constant 0 : i32
    return %arg0, %c0_i32, %c0_i32_0 : i32, i32, i32
  }
  func.func @transform_1(%arg0: i32) -> (i32, i32, i32) {
    %c0_i32 = arith.constant 0 : i32
    %c0_i32_0 = arith.constant 0 : i32
    %c0_i32_1 = arith.constant 0 : i32
    return %arg0, %c0_i32, %c0_i32_0 : i32, i32, i32
  }
  func.func @transform_2(%arg0: i32) -> (i32, i32) {
    %c0_i32 = arith.constant 0 : i32
    %c0_i32_0 = arith.constant 0 : i32
    %c0_i32_1 = arith.constant 0 : i32
    return %c0_i32, %c0_i32_0 : i32, i32
  }
  func.func @transform_3(%arg0: i32) -> (i32, i32) {
    %c0_i32 = arith.constant 0 : i32
    %c0_i32_0 = arith.constant 0 : i32
    %c0_i32_1 = arith.constant 0 : i32
    return %c0_i32, %c0_i32_0 : i32, i32
  }
  func.func @transform_4(%arg0: i32) -> (i32, i32) {
    %c0_i32 = arith.constant 0 : i32
    %c0_i32_0 = arith.constant 0 : i32
    %c0_i32_1 = arith.constant 0 : i32
    return %c0_i32, %c0_i32_0 : i32, i32
  }
  func.func @transform_5(%arg0: i32) -> (i32, i32) {
    %c0_i32 = arith.constant 0 : i32
    %c0_i32_0 = arith.constant 0 : i32
    %c0_i32_1 = arith.constant 0 : i32
    return %c0_i32, %c0_i32_0 : i32, i32
  }
  func.func @transform_6(%arg0: i32) -> (i32, i32) {
    %c0_i32 = arith.constant 0 : i32
    %c0_i32_0 = arith.constant 0 : i32
    %c0_i32_1 = arith.constant 0 : i32
    return %c0_i32, %c0_i32_0 : i32, i32
  }
  func.func @transform_7(%arg0: i32) -> (i32, i32) {
    %c0_i32 = arith.constant 0 : i32
    %c0_i32_0 = arith.constant 0 : i32
    %c0_i32_1 = arith.constant 0 : i32
    return %c0_i32, %c0_i32_0 : i32, i32
  }
  func.func @transform_8(%arg0: i32) -> (i32, i32, i32) {
    %c0_i32 = arith.constant 0 : i32
    %c0_i32_0 = arith.constant 0 : i32
    %c0_i32_1 = arith.constant 0 : i32
    return %arg0, %c0_i32, %c0_i32_0 : i32, i32, i32
  }
}

module attributes {stable_mosaic.version = 11 : i64} {
  func.func @_mha_kernel(%arg0: i32, %arg1: memref<1x8x32xf32, #tpu.memory_space<vmem>>, %arg2: memref<1x8x32xf32, #tpu.memory_space<vmem>>, %arg3: memref<32x96xbf16, #tpu.memory_space<vmem>>, %arg4: memref<1x96xf32, #tpu.memory_space<vmem>>, %arg5: memref<32x32xbf16, #tpu.memory_space<vmem>>, %arg6: memref<1x32xf32, #tpu.memory_space<vmem>>, %arg7: memref<1x32xf32, #tpu.memory_space<vmem>>, %arg8: memref<1x32xf32, #tpu.memory_space<vmem>>, %arg9: memref<1x8x32xf32, #tpu.memory_space<vmem>>) attributes {dimension_semantics = [#tpu.dimension_semantics<parallel>], iteration_bounds = array<i64: 2>, scalar_prefetch = 0 : i64, scratch_operands = 0 : i64, tpu.core_type = #tpu.core_type<tc>, window_params = [{transform_indices = @transform_0, window_bounds = array<i64: 1, 8, 32>}, {transform_indices = @transform_1, window_bounds = array<i64: 1, 8, 32>}, {pipeline_mode = #tpu.pipeline_mode<synchronous>, transform_indices = @transform_2, window_bounds = array<i64: 32, 96>}, {pipeline_mode = #tpu.pipeline_mode<synchronous>, transform_indices = @transform_3, window_bounds = array<i64: 1, 96>}, {pipeline_mode = #tpu.pipeline_mode<synchronous>, transform_indices = @transform_4, window_bounds = array<i64: 32, 32>}, {pipeline_mode = #tpu.pipeline_mode<synchronous>, transform_indices = @transform_5, window_bounds = array<i64: 1, 32>}, {pipeline_mode = #tpu.pipeline_mode<synchronous>, transform_indices = @transform_6, window_bounds = array<i64: 1, 32>}, {pipeline_mode = #tpu.pipeline_mode<synchronous>, transform_indices = @transform_7, window_bounds = array<i64: 1, 32>}, {transform_indices = @transform_8, window_bounds = array<i64: 1, 8, 32>}]} {
    %c0 = arith.constant 0 : index
    %c0_0 = arith.constant 0 : index
    %c0_1 = arith.constant 0 : index
    %0 = vector.load %arg1[%c0, %c0_0, %c0_1] : memref<1x8x32xf32, #tpu.memory_space<vmem>>, vector<1x8x32xf32>
    %1 = vector.shape_cast %0 : vector<1x8x32xf32> to vector<8x32xf32>
    %c0_2 = arith.constant 0 : index
    %c0_3 = arith.constant 0 : index
    %2 = vector.load %arg3[%c0_2, %c0_3] : memref<32x96xbf16, #tpu.memory_space<vmem>>, vector<32x96xbf16>
    %c0_4 = arith.constant 0 : index
    %c0_5 = arith.constant 0 : index
    %3 = vector.load %arg4[%c0_4, %c0_5] : memref<1x96xf32, #tpu.memory_space<vmem>>, vector<1x96xf32>
    %4 = arith.truncf %1 : vector<8x32xf32> to vector<8x32xbf16>
    %c0_6 = arith.constant 0 : index
    %c0_7 = arith.constant 0 : index
    %c0_8 = arith.constant 0 : index
    %5 = vector.load %arg2[%c0_6, %c0_7, %c0_8] : memref<1x8x32xf32, #tpu.memory_space<vmem>>, vector<1x8x32xf32>
    %6 = vector.shape_cast %5 : vector<1x8x32xf32> to vector<8x32xf32>
    %7 = vector.extract_strided_slice %2 {offsets = [0, 0], sizes = [32, 32], strides = [1, 1]} : vector<32x96xbf16> to vector<32x32xbf16>
    %cst = arith.constant dense<0.000000e+00> : vector<8x32xf32>
    %8 = tpu.matmul %4, %7, %cst {dimension_numbers = #tpu.dot_dimension_numbers<[1], [0], [0], [1], [0, 0, 1, 1], [], []>} : vector<8x32xbf16>, vector<32x32xbf16>, vector<8x32xf32> -> vector<8x32xf32>
    %9 = vector.extract_strided_slice %3 {offsets = [0, 0], sizes = [1, 32], strides = [1, 1]} : vector<1x96xf32> to vector<1x32xf32>
    %10 = vector.broadcast %9 : vector<1x32xf32> to vector<8x32xf32>
    %11 = arith.addf %8, %10 : vector<8x32xf32>
    %12 = arith.truncf %6 : vector<8x32xf32> to vector<8x32xbf16>
    %13 = vector.extract_strided_slice %2 {offsets = [0, 32], sizes = [32, 64], strides = [1, 1]} : vector<32x96xbf16> to vector<32x64xbf16>
    %cst_9 = arith.constant dense<0.000000e+00> : vector<8x64xf32>
    %14 = tpu.matmul %12, %13, %cst_9 {dimension_numbers = #tpu.dot_dimension_numbers<[1], [0], [0], [1], [0, 0, 1, 1], [], []>} : vector<8x32xbf16>, vector<32x64xbf16>, vector<8x64xf32> -> vector<8x64xf32>
    %15 = vector.extract_strided_slice %3 {offsets = [0, 32], sizes = [1, 64], strides = [1, 1]} : vector<1x96xf32> to vector<1x64xf32>
    %16 = vector.broadcast %15 : vector<1x64xf32> to vector<8x64xf32>
    %17 = arith.addf %14, %16 : vector<8x64xf32>
    %18 = vector.extract_strided_slice %17 {offsets = [0, 0], sizes = [8, 32], strides = [1, 1]} : vector<8x64xf32> to vector<8x32xf32>
    %19 = vector.extract_strided_slice %17 {offsets = [0, 32], sizes = [8, 32], strides = [1, 1]} : vector<8x64xf32> to vector<8x32xf32>
    %20 = vector.extract_strided_slice %11 {offsets = [0, 0], sizes = [8, 8], strides = [1, 1]} : vector<8x32xf32> to vector<8x8xf32>
    %21 = arith.truncf %20 : vector<8x8xf32> to vector<8x8xbf16>
    %22 = vector.extract_strided_slice %18 {offsets = [0, 0], sizes = [8, 8], strides = [1, 1]} : vector<8x32xf32> to vector<8x8xf32>
    %23 = arith.truncf %22 : vector<8x8xf32> to vector<8x8xbf16>
    %24 = vector.extract_strided_slice %19 {offsets = [0, 0], sizes = [8, 8], strides = [1, 1]} : vector<8x32xf32> to vector<8x8xf32>
    %25 = arith.truncf %24 : vector<8x8xf32> to vector<8x8xbf16>
    %cst_10 = arith.constant dense<0.000000e+00> : vector<8x8xf32>
    %26 = tpu.matmul %21, %23, %cst_10 {dimension_numbers = #tpu.dot_dimension_numbers<[1], [1], [0], [0], [0, 0, 1, 0], [], []>} : vector<8x8xbf16>, vector<8x8xbf16>, vector<8x8xf32> -> vector<8x8xf32>
    %cst_11 = arith.constant dense<0xFF800000> : vector<8xf32>
    %27 = vector.multi_reduction <maximumf>, %26, %cst_11 [1] : vector<8x8xf32> to vector<8xf32>
    %28 = vector.shape_cast %27 : vector<8xf32> to vector<8x1xf32>
    %29 = vector.broadcast %28 : vector<8x1xf32> to vector<8x8xf32>
    %30 = arith.subf %26, %29 : vector<8x8xf32>
    %31 = math.exp %30 : vector<8x8xf32>
    %cst_12 = arith.constant dense<0.000000e+00> : vector<8xf32>
    %32 = vector.multi_reduction <add>, %31, %cst_12 [1] : vector<8x8xf32> to vector<8xf32>
    %33 = vector.shape_cast %32 : vector<8xf32> to vector<8x1xf32>
    %34 = tpu.reciprocal %33 {approx = true} : vector<8x1xf32> -> vector<8x1xf32>
    %35 = vector.broadcast %34 : vector<8x1xf32> to vector<8x8xf32>
    %36 = arith.mulf %31, %35 : vector<8x8xf32>
    %37 = arith.truncf %36 : vector<8x8xf32> to vector<8x8xbf16>
    %cst_13 = arith.constant dense<0.000000e+00> : vector<8x8xf32>
    %38 = tpu.matmul %37, %25, %cst_13 {dimension_numbers = #tpu.dot_dimension_numbers<[1], [0], [0], [1], [0, 0, 1, 1], [], []>} : vector<8x8xbf16>, vector<8x8xbf16>, vector<8x8xf32> -> vector<8x8xf32>
    %39 = vector.extract_strided_slice %11 {offsets = [0, 8], sizes = [8, 8], strides = [1, 1]} : vector<8x32xf32> to vector<8x8xf32>
    %40 = arith.truncf %39 : vector<8x8xf32> to vector<8x8xbf16>
    %41 = vector.extract_strided_slice %18 {offsets = [0, 8], sizes = [8, 8], strides = [1, 1]} : vector<8x32xf32> to vector<8x8xf32>
    %42 = arith.truncf %41 : vector<8x8xf32> to vector<8x8xbf16>
    %43 = vector.extract_strided_slice %19 {offsets = [0, 8], sizes = [8, 8], strides = [1, 1]} : vector<8x32xf32> to vector<8x8xf32>
    %44 = arith.truncf %43 : vector<8x8xf32> to vector<8x8xbf16>
    %cst_14 = arith.constant dense<0.000000e+00> : vector<8x8xf32>
    %45 = tpu.matmul %40, %42, %cst_14 {dimension_numbers = #tpu.dot_dimension_numbers<[1], [1], [0], [0], [0, 0, 1, 0], [], []>} : vector<8x8xbf16>, vector<8x8xbf16>, vector<8x8xf32> -> vector<8x8xf32>
    %cst_15 = arith.constant dense<0xFF800000> : vector<8xf32>
    %46 = vector.multi_reduction <maximumf>, %45, %cst_15 [1] : vector<8x8xf32> to vector<8xf32>
    %47 = vector.shape_cast %46 : vector<8xf32> to vector<8x1xf32>
    %48 = vector.broadcast %47 : vector<8x1xf32> to vector<8x8xf32>
    %49 = arith.subf %45, %48 : vector<8x8xf32>
    %50 = math.exp %49 : vector<8x8xf32>
    %cst_16 = arith.constant dense<0.000000e+00> : vector<8xf32>
    %51 = vector.multi_reduction <add>, %50, %cst_16 [1] : vector<8x8xf32> to vector<8xf32>
    %52 = vector.shape_cast %51 : vector<8xf32> to vector<8x1xf32>
    %53 = tpu.reciprocal %52 {approx = true} : vector<8x1xf32> -> vector<8x1xf32>
    %54 = vector.broadcast %53 : vector<8x1xf32> to vector<8x8xf32>
    %55 = arith.mulf %50, %54 : vector<8x8xf32>
    %56 = arith.truncf %55 : vector<8x8xf32> to vector<8x8xbf16>
    %cst_17 = arith.constant dense<0.000000e+00> : vector<8x8xf32>
    %57 = tpu.matmul %56, %44, %cst_17 {dimension_numbers = #tpu.dot_dimension_numbers<[1], [0], [0], [1], [0, 0, 1, 1], [], []>} : vector<8x8xbf16>, vector<8x8xbf16>, vector<8x8xf32> -> vector<8x8xf32>
    %58 = vector.extract_strided_slice %11 {offsets = [0, 16], sizes = [8, 8], strides = [1, 1]} : vector<8x32xf32> to vector<8x8xf32>
    %59 = arith.truncf %58 : vector<8x8xf32> to vector<8x8xbf16>
    %60 = vector.extract_strided_slice %18 {offsets = [0, 16], sizes = [8, 8], strides = [1, 1]} : vector<8x32xf32> to vector<8x8xf32>
    %61 = arith.truncf %60 : vector<8x8xf32> to vector<8x8xbf16>
    %62 = vector.extract_strided_slice %19 {offsets = [0, 16], sizes = [8, 8], strides = [1, 1]} : vector<8x32xf32> to vector<8x8xf32>
    %63 = arith.truncf %62 : vector<8x8xf32> to vector<8x8xbf16>
    %cst_18 = arith.constant dense<0.000000e+00> : vector<8x8xf32>
    %64 = tpu.matmul %59, %61, %cst_18 {dimension_numbers = #tpu.dot_dimension_numbers<[1], [1], [0], [0], [0, 0, 1, 0], [], []>} : vector<8x8xbf16>, vector<8x8xbf16>, vector<8x8xf32> -> vector<8x8xf32>
    %cst_19 = arith.constant dense<0xFF800000> : vector<8xf32>
    %65 = vector.multi_reduction <maximumf>, %64, %cst_19 [1] : vector<8x8xf32> to vector<8xf32>
    %66 = vector.shape_cast %65 : vector<8xf32> to vector<8x1xf32>
    %67 = vector.broadcast %66 : vector<8x1xf32> to vector<8x8xf32>
    %68 = arith.subf %64, %67 : vector<8x8xf32>
    %69 = math.exp %68 : vector<8x8xf32>
    %cst_20 = arith.constant dense<0.000000e+00> : vector<8xf32>
    %70 = vector.multi_reduction <add>, %69, %cst_20 [1] : vector<8x8xf32> to vector<8xf32>
    %71 = vector.shape_cast %70 : vector<8xf32> to vector<8x1xf32>
    %72 = tpu.reciprocal %71 {approx = true} : vector<8x1xf32> -> vector<8x1xf32>
    %73 = vector.broadcast %72 : vector<8x1xf32> to vector<8x8xf32>
    %74 = arith.mulf %69, %73 : vector<8x8xf32>
    %75 = arith.truncf %74 : vector<8x8xf32> to vector<8x8xbf16>
    %cst_21 = arith.constant dense<0.000000e+00> : vector<8x8xf32>
    %76 = tpu.matmul %75, %63, %cst_21 {dimension_numbers = #tpu.dot_dimension_numbers<[1], [0], [0], [1], [0, 0, 1, 1], [], []>} : vector<8x8xbf16>, vector<8x8xbf16>, vector<8x8xf32> -> vector<8x8xf32>
    %77 = vector.extract_strided_slice %11 {offsets = [0, 24], sizes = [8, 8], strides = [1, 1]} : vector<8x32xf32> to vector<8x8xf32>
    %78 = arith.truncf %77 : vector<8x8xf32> to vector<8x8xbf16>
    %79 = vector.extract_strided_slice %18 {offsets = [0, 24], sizes = [8, 8], strides = [1, 1]} : vector<8x32xf32> to vector<8x8xf32>
    %80 = arith.truncf %79 : vector<8x8xf32> to vector<8x8xbf16>
    %81 = vector.extract_strided_slice %19 {offsets = [0, 24], sizes = [8, 8], strides = [1, 1]} : vector<8x32xf32> to vector<8x8xf32>
    %82 = arith.truncf %81 : vector<8x8xf32> to vector<8x8xbf16>
    %cst_22 = arith.constant dense<0.000000e+00> : vector<8x8xf32>
    %83 = tpu.matmul %78, %80, %cst_22 {dimension_numbers = #tpu.dot_dimension_numbers<[1], [1], [0], [0], [0, 0, 1, 0], [], []>} : vector<8x8xbf16>, vector<8x8xbf16>, vector<8x8xf32> -> vector<8x8xf32>
    %cst_23 = arith.constant dense<0xFF800000> : vector<8xf32>
    %84 = vector.multi_reduction <maximumf>, %83, %cst_23 [1] : vector<8x8xf32> to vector<8xf32>
    %85 = vector.shape_cast %84 : vector<8xf32> to vector<8x1xf32>
    %86 = vector.broadcast %85 : vector<8x1xf32> to vector<8x8xf32>
    %87 = arith.subf %83, %86 : vector<8x8xf32>
    %88 = math.exp %87 : vector<8x8xf32>
    %cst_24 = arith.constant dense<0.000000e+00> : vector<8xf32>
    %89 = vector.multi_reduction <add>, %88, %cst_24 [1] : vector<8x8xf32> to vector<8xf32>
    %90 = vector.shape_cast %89 : vector<8xf32> to vector<8x1xf32>
    %91 = tpu.reciprocal %90 {approx = true} : vector<8x1xf32> -> vector<8x1xf32>
    %92 = vector.broadcast %91 : vector<8x1xf32> to vector<8x8xf32>
    %93 = arith.mulf %88, %92 : vector<8x8xf32>
    %94 = arith.truncf %93 : vector<8x8xf32> to vector<8x8xbf16>
    %cst_25 = arith.constant dense<0.000000e+00> : vector<8x8xf32>
    %95 = tpu.matmul %94, %82, %cst_25 {dimension_numbers = #tpu.dot_dimension_numbers<[1], [0], [0], [1], [0, 0, 1, 1], [], []>} : vector<8x8xbf16>, vector<8x8xbf16>, vector<8x8xf32> -> vector<8x8xf32>
    %96 = tpu.concatenate %38, %57, %76, %95 in 1 : vector<8x8xf32>, vector<8x8xf32>, vector<8x8xf32>, vector<8x8xf32> -> vector<8x32xf32>
    %97 = arith.truncf %96 : vector<8x32xf32> to vector<8x32xbf16>
    %c0_26 = arith.constant 0 : index
    %c0_27 = arith.constant 0 : index
    %98 = vector.load %arg5[%c0_26, %c0_27] : memref<32x32xbf16, #tpu.memory_space<vmem>>, vector<32x32xbf16>
    %cst_28 = arith.constant dense<0.000000e+00> : vector<8x32xf32>
    %99 = tpu.matmul %97, %98, %cst_28 {dimension_numbers = #tpu.dot_dimension_numbers<[1], [0], [0], [1], [0, 0, 1, 1], [], []>} : vector<8x32xbf16>, vector<32x32xbf16>, vector<8x32xf32> -> vector<8x32xf32>
    %c0_29 = arith.constant 0 : index
    %c0_30 = arith.constant 0 : index
    %100 = vector.load %arg6[%c0_29, %c0_30] : memref<1x32xf32, #tpu.memory_space<vmem>>, vector<1x32xf32>
    %101 = vector.broadcast %100 : vector<1x32xf32> to vector<8x32xf32>
    %102 = arith.addf %99, %101 : vector<8x32xf32>
    %103 = arith.addf %1, %102 : vector<8x32xf32>
    %cst_31 = arith.constant dense<0.000000e+00> : vector<8xf32>
    %104 = vector.multi_reduction <add>, %103, %cst_31 [1] : vector<8x32xf32> to vector<8xf32>
    %105 = vector.shape_cast %104 : vector<8xf32> to vector<8x1xf32>
    %cst_32 = arith.constant 3.200000e+01 : f32
    %106 = vector.broadcast %cst_32 : f32 to vector<8x1xf32>
    %107 = arith.divf %105, %106 : vector<8x1xf32>
    %108 = vector.broadcast %107 : vector<8x1xf32> to vector<8x32xf32>
    %109 = arith.subf %103, %108 : vector<8x32xf32>
    %110 = arith.mulf %109, %109 : vector<8x32xf32>
    %cst_33 = arith.constant dense<0.000000e+00> : vector<8xf32>
    %111 = vector.multi_reduction <add>, %110, %cst_33 [1] : vector<8x32xf32> to vector<8xf32>
    %112 = vector.shape_cast %111 : vector<8xf32> to vector<8x1xf32>
    %cst_34 = arith.constant 3.200000e+01 : f32
    %113 = vector.broadcast %cst_34 : f32 to vector<8x1xf32>
    %114 = arith.divf %112, %113 : vector<8x1xf32>
    %115 = vector.broadcast %107 : vector<8x1xf32> to vector<8x32xf32>
    %116 = arith.subf %103, %115 : vector<8x32xf32>
    %cst_35 = arith.constant 9.99999974E-6 : f32
    %117 = vector.broadcast %cst_35 : f32 to vector<8x1xf32>
    %118 = arith.addf %114, %117 : vector<8x1xf32>
    %119 = math.rsqrt %118 : vector<8x1xf32>
    %120 = vector.broadcast %119 : vector<8x1xf32> to vector<8x32xf32>
    %121 = arith.mulf %116, %120 : vector<8x32xf32>
    %c0_36 = arith.constant 0 : index
    %c0_37 = arith.constant 0 : index
    %122 = vector.load %arg7[%c0_36, %c0_37] : memref<1x32xf32, #tpu.memory_space<vmem>>, vector<1x32xf32>
    %123 = vector.broadcast %122 : vector<1x32xf32> to vector<8x32xf32>
    %124 = arith.mulf %121, %123 : vector<8x32xf32>
    %c0_38 = arith.constant 0 : index
    %c0_39 = arith.constant 0 : index
    %125 = vector.load %arg8[%c0_38, %c0_39] : memref<1x32xf32, #tpu.memory_space<vmem>>, vector<1x32xf32>
    %126 = vector.broadcast %125 : vector<1x32xf32> to vector<8x32xf32>
    %127 = arith.addf %124, %126 : vector<8x32xf32>
    %c0_40 = arith.constant 0 : index
    %c0_41 = arith.constant 0 : index
    %c0_42 = arith.constant 0 : index
    %128 = vector.load %arg9[%c0_40, %c0_41, %c0_42] : memref<1x8x32xf32, #tpu.memory_space<vmem>>, vector<1x8x32xf32>
    %129 = vector.shape_cast %128 : vector<1x8x32xf32> to vector<8x32xf32>
    %130 = vector.shape_cast %127 : vector<8x32xf32> to vector<1x8x32xf32>
    tpu.vector_store %arg9[%c0_40, %c0_41, %c0_42], %130 {strides = array<i32>} : memref<1x8x32xf32, #tpu.memory_space<vmem>>, vector<1x8x32xf32>,
    return
  }
  func.func @transform_0(%arg0: i32) -> (i32, i32, i32) {
    %c0_i32 = arith.constant 0 : i32
    %c0_i32_0 = arith.constant 0 : i32
    %c0_i32_1 = arith.constant 0 : i32
    return %arg0, %c0_i32, %c0_i32_0 : i32, i32, i32
  }
  func.func @transform_1(%arg0: i32) -> (i32, i32, i32) {
    %c0_i32 = arith.constant 0 : i32
    %c0_i32_0 = arith.constant 0 : i32
    %c0_i32_1 = arith.constant 0 : i32
    return %arg0, %c0_i32, %c0_i32_0 : i32, i32, i32
  }
  func.func @transform_2(%arg0: i32) -> (i32, i32) {
    %c0_i32 = arith.constant 0 : i32
    %c0_i32_0 = arith.constant 0 : i32
    %c0_i32_1 = arith.constant 0 : i32
    return %c0_i32, %c0_i32_0 : i32, i32
  }
  func.func @transform_3(%arg0: i32) -> (i32, i32) {
    %c0_i32 = arith.constant 0 : i32
    %c0_i32_0 = arith.constant 0 : i32
    %c0_i32_1 = arith.constant 0 : i32
    return %c0_i32, %c0_i32_0 : i32, i32
  }
  func.func @transform_4(%arg0: i32) -> (i32, i32) {
    %c0_i32 = arith.constant 0 : i32
    %c0_i32_0 = arith.constant 0 : i32
    %c0_i32_1 = arith.constant 0 : i32
    return %c0_i32, %c0_i32_0 : i32, i32
  }
  func.func @transform_5(%arg0: i32) -> (i32, i32) {
    %c0_i32 = arith.constant 0 : i32
    %c0_i32_0 = arith.constant 0 : i32
    %c0_i32_1 = arith.constant 0 : i32
    return %c0_i32, %c0_i32_0 : i32, i32
  }
  func.func @transform_6(%arg0: i32) -> (i32, i32) {
    %c0_i32 = arith.constant 0 : i32
    %c0_i32_0 = arith.constant 0 : i32
    %c0_i32_1 = arith.constant 0 : i32
    return %c0_i32, %c0_i32_0 : i32, i32
  }
  func.func @transform_7(%arg0: i32) -> (i32, i32) {
    %c0_i32 = arith.constant 0 : i32
    %c0_i32_0 = arith.constant 0 : i32
    %c0_i32_1 = arith.constant 0 : i32
    return %c0_i32, %c0_i32_0 : i32, i32
  }
  func.func @transform_8(%arg0: i32) -> (i32, i32, i32) {
    %c0_i32 = arith.constant 0 : i32
    %c0_i32_0 = arith.constant 0 : i32
    %c0_i32_1 = arith.constant 0 : i32
    return %arg0, %c0_i32, %c0_i32_0 : i32, i32, i32
  }
}

module attributes {stable_mosaic.version = 11 : i64} {
  func.func @_logits_kernel(%arg0: i32, %arg1: i32, %arg2: memref<16x32xf32, #tpu.memory_space<vmem>>, %arg3: memref<32x64xbf16, #tpu.memory_space<vmem>>, %arg4: memref<1x64xf32, #tpu.memory_space<vmem>>, %arg5: memref<16x64xf32, #tpu.memory_space<vmem>>) attributes {dimension_semantics = [#tpu.dimension_semantics<parallel>, #tpu.dimension_semantics<parallel>], iteration_bounds = array<i64: 1, 1>, scalar_prefetch = 0 : i64, scratch_operands = 0 : i64, tpu.core_type = #tpu.core_type<tc>, window_params = [{transform_indices = @transform_0, window_bounds = array<i64: 16, 32>}, {transform_indices = @transform_1, window_bounds = array<i64: 32, 64>}, {transform_indices = @transform_2, window_bounds = array<i64: 1, 64>}, {transform_indices = @transform_3, window_bounds = array<i64: 16, 64>}]} {
    %c0 = arith.constant 0 : index
    %c0_0 = arith.constant 0 : index
    %0 = vector.load %arg2[%c0, %c0_0] : memref<16x32xf32, #tpu.memory_space<vmem>>, vector<16x32xf32>
    %1 = arith.truncf %0 : vector<16x32xf32> to vector<16x32xbf16>
    %c0_1 = arith.constant 0 : index
    %c0_2 = arith.constant 0 : index
    %2 = vector.load %arg3[%c0_1, %c0_2] : memref<32x64xbf16, #tpu.memory_space<vmem>>, vector<32x64xbf16>
    %cst = arith.constant dense<0.000000e+00> : vector<16x64xf32>
    %3 = tpu.matmul %1, %2, %cst {dimension_numbers = #tpu.dot_dimension_numbers<[1], [0], [0], [1], [0, 0, 1, 1], [], []>} : vector<16x32xbf16>, vector<32x64xbf16>, vector<16x64xf32> -> vector<16x64xf32>
    %c0_3 = arith.constant 0 : index
    %c0_4 = arith.constant 0 : index
    %4 = vector.load %arg4[%c0_3, %c0_4] : memref<1x64xf32, #tpu.memory_space<vmem>>, vector<1x64xf32>
    %5 = vector.broadcast %4 : vector<1x64xf32> to vector<16x64xf32>
    %6 = arith.addf %3, %5 : vector<16x64xf32>
    %c0_5 = arith.constant 0 : index
    %c0_6 = arith.constant 0 : index
    %7 = vector.load %arg5[%c0_5, %c0_6] : memref<16x64xf32, #tpu.memory_space<vmem>>, vector<16x64xf32>
    tpu.vector_store %arg5[%c0_5, %c0_6], %6 {strides = array<i32>} : memref<16x64xf32, #tpu.memory_space<vmem>>, vector<16x64xf32>,
    return
  }
  func.func @transform_0(%arg0: i32, %arg1: i32) -> (i32, i32) {
    %c0_i32 = arith.constant 0 : i32
    %c0_i32_0 = arith.constant 0 : i32
    return %arg0, %c0_i32 : i32, i32
  }
  func.func @transform_1(%arg0: i32, %arg1: i32) -> (i32, i32) {
    %c0_i32 = arith.constant 0 : i32
    %c0_i32_0 = arith.constant 0 : i32
    return %c0_i32, %arg1 : i32, i32
  }
  func.func @transform_2(%arg0: i32, %arg1: i32) -> (i32, i32) {
    %c0_i32 = arith.constant 0 : i32
    %c0_i32_0 = arith.constant 0 : i32
    return %c0_i32, %arg1 : i32, i32
  }
  func.func @transform_3(%arg0: i32, %arg1: i32) -> (i32, i32) {
    %c0_i32 = arith.constant 0 : i32
    return %arg0, %arg1 : i32, i32
  }
}

</mosaic_0001>

<llo_original>
// kernel: decoder_forward.7
$region0: #{decoder_forward.7}
  #allocation0 [shape = 'u32[]', space=smem, size = 0x4, offset = 0x4, fixed_abs, tag = 'smem constant byte address 0x4 - core index']
  #allocation1 [shape = 'u32[144,128]{1,0:T(1,128)}', space=vmem, size = 0x12000, scoped, tag = 'internal scratch']
  %s0 = inlined_call_operand.vmem [shape: f32[2,8,32], index: 0, kind: input, shape index: {}]
  %s1 = inlined_call_operand.vmem [shape: f32[2,1,8], index: 1, kind: input, shape index: {}]
  %s2 = inlined_call_operand.vmem [shape: bf16[32,96], index: 2, kind: input, shape index: {}]
  %s3 = inlined_call_operand.vmem [shape: f32[1,96], index: 3, kind: input, shape index: {}]
  %s4 = inlined_call_operand.vmem [shape: bf16[32,32], index: 4, kind: input, shape index: {}]
  %s5 = inlined_call_operand.vmem [shape: f32[1,32], index: 5, kind: input, shape index: {}]
  %s6 = inlined_call_operand.vmem [shape: f32[1,32], index: 6, kind: input, shape index: {}]
  %s7 = inlined_call_operand.vmem [shape: f32[1,32], index: 7, kind: input, shape index: {}]
  %s8 = inlined_call_operand.vmem [shape: f32[2,8,32], index: 8, kind: output, shape index: {}]
  %s9 = sld [smem:[#allocation0]]
  $region65: #{decoder_forward.7} parent=0
    _
  %s11 = ssub.s32 1, %s9
  %s12 = scalar_select 0, %s11, %s9
  loop: start=0, step=1, limit=4
  $region2: #{decoder_forward.7} parent=0 // loop_pre_header
    _
  $region3: #{decoder_forward.7} parent=0 // loop_header
    %s14 = sphi 0, %s18
    %p15 = scmp.ge.s32.totalorder %s14, 4
    %s24 = sphi 0, %s26
    %s27 = sphi 0, %s24
    %s28 = sphi 0, %s27
    %s44 = sphi 0, %s28
    %s50 = sphi 0, %s52
    %s53 = sphi 0, %s50
    %s54 = sphi 0, %s53
    %s70 = sphi 0, %s54
    %s74 = sphi 0, %s74
    %s76 = sphi 0, %s74
    %s77 = sphi 0, %s76
    %s91 = sphi 0, %s77
    %s95 = sphi 0, %s95
    %s97 = sphi 0, %s95
    %s98 = sphi 0, %s97
    %s112 = sphi 0, %s98
    %s116 = sphi 0, %s116
    %s118 = sphi 0, %s116
    %s119 = sphi 0, %s118
    %s133 = sphi 0, %s119
    %s137 = sphi 0, %s137
    %s139 = sphi 0, %s137
    %s140 = sphi 0, %s139
    %s154 = sphi 0, %s140
    %s158 = sphi 0, %s158
    %s160 = sphi 0, %s158
    %s161 = sphi 0, %s160
    %s175 = sphi 0, %s161
    %s179 = sphi 0, %s179
    %s181 = sphi 0, %s179
    %s182 = sphi 0, %s181
    %s196 = sphi 0, %s182
    %s202 = sphi 0, %s204
    %s205 = sphi 0, %s202
    %s206 = sphi 0, %s205
    %s222 = sphi 0, %s206
  $region4: #{decoder_forward.7} parent=0 // loop_header_branch
    %17 = sbr.rel (%p15) target = $region8
  $region5: #{decoder_forward.7} parent=0 // loop_body
    %s19 = ssub.s32 %s14, 1
    %s20 = ssub.s32 %s14, 2
    %s21 = sadd.s32 %s14, 1
    %s22 = ssub.s32 %s14, %s21
    %p23 = scmp.eq.s32.totalorder %s22, 0
    %s25 = sadd.s32 %s24, 1
    %s26 = scalar_select %p23, %s24, %s25
    %p29 = pneg %p23
    %p30 = scmp.eq.s32.totalorder %s14, 1
    %p31 = por %p29, %p30
    %p32 = scmp.ne.s32.totalorder %s24, %s27
    %p33 = scmp.eq.s32.totalorder %s14, 0
    %p34 = por %p32, %p33
    %p35 = scmp.ne.s32.totalorder %s24, %s27
    %p36 = scmp.eq.s32.totalorder %s19, 1
    %p37 = por %p35, %p36
    %p38 = scmp.ne.s32.totalorder %s27, %s28
    %p39 = scmp.eq.s32.totalorder %s19, 0
    %p40 = por %p38, %p39
    %p41 = scmp.ne.s32.totalorder %s27, %s28
    %p42 = scmp.eq.s32.totalorder %s20, 1
    %p43 = por %p41, %p42
    %p45 = scmp.ne.s32.totalorder %s28, %s44
    %p46 = scmp.eq.s32.totalorder %s20, 0
    %p47 = por %p45, %p46
    %s48 = ssub.s32 %s14, %s21
    %p49 = scmp.eq.s32.totalorder %s48, 0
    %s51 = sadd.s32 %s50, 1
    %s52 = scalar_select %p49, %s50, %s51
    %p55 = pneg %p49
    %p56 = scmp.eq.s32.totalorder %s14, 1
    %p57 = por %p55, %p56
    %p58 = scmp.ne.s32.totalorder %s50, %s53
    %p59 = scmp.eq.s32.totalorder %s14, 0
    %p60 = por %p58, %p59
    %p61 = scmp.ne.s32.totalorder %s50, %s53
    %p62 = scmp.eq.s32.totalorder %s19, 1
    %p63 = por %p61, %p62
    %p64 = scmp.ne.s32.totalorder %s53, %s54
    %p65 = scmp.eq.s32.totalorder %s19, 0
    %p66 = por %p64, %p65
    %p67 = scmp.ne.s32.totalorder %s53, %s54
    %p68 = scmp.eq.s32.totalorder %s20, 1
    %p69 = por %p67, %p68
    %p71 = scmp.ne.s32.totalorder %s54, %s70
    %p72 = scmp.eq.s32.totalorder %s20, 0
    %p73 = por %p71, %p72
    %s75 = sadd.s32 %s74, 1
    %p78 = scmp.eq.s32.totalorder %s14, 1
    %p79 = scmp.ne.s32.totalorder %s74, %s76
    %p80 = scmp.eq.s32.totalorder %s14, 0
    %p81 = por %p79, %p80
    %p82 = scmp.ne.s32.totalorder %s74, %s76
    %p83 = scmp.eq.s32.totalorder %s19, 1
    %p84 = por %p82, %p83
    %p85 = scmp.ne.s32.totalorder %s76, %s77
    %p86 = scmp.eq.s32.totalorder %s19, 0
    %p87 = por %p85, %p86
    %p88 = scmp.ne.s32.totalorder %s76, %s77
    %p89 = scmp.eq.s32.totalorder %s20, 1
    %p90 = por %p88, %p89
    %p92 = scmp.ne.s32.totalorder %s77, %s91
    %p93 = scmp.eq.s32.totalorder %s20, 0
    %p94 = por %p92, %p93
    %s96 = sadd.s32 %s95, 1
    %p99 = scmp.eq.s32.totalorder %s14, 1
    %p100 = scmp.ne.s32.totalorder %s95, %s97
    %p101 = scmp.eq.s32.totalorder %s14, 0
    %p102 = por %p100, %p101
    %p103 = scmp.ne.s32.totalorder %s95, %s97
    %p104 = scmp.eq.s32.totalorder %s19, 1
    %p105 = por %p103, %p104
    %p106 = scmp.ne.s32.totalorder %s97, %s98
    %p107 = scmp.eq.s32.totalorder %s19, 0
    %p108 = por %p106, %p107
    %p109 = scmp.ne.s32.totalorder %s97, %s98
    %p110 = scmp.eq.s32.totalorder %s20, 1
    %p111 = por %p109, %p110
    %p113 = scmp.ne.s32.totalorder %s98, %s112
    %p114 = scmp.eq.s32.totalorder %s20, 0
    %p115 = por %p113, %p114
    %s117 = sadd.s32 %s116, 1
    %p120 = scmp.eq.s32.totalorder %s14, 1
    %p121 = scmp.ne.s32.totalorder %s116, %s118
    %p122 = scmp.eq.s32.totalorder %s14, 0
    %p123 = por %p121, %p122
    %p124 = scmp.ne.s32.totalorder %s116, %s118
    %p125 = scmp.eq.s32.totalorder %s19, 1
    %p126 = por %p124, %p125
    %p127 = scmp.ne.s32.totalorder %s118, %s119
    %p128 = scmp.eq.s32.totalorder %s19, 0
    %p129 = por %p127, %p128
    %p130 = scmp.ne.s32.totalorder %s118, %s119
    %p131 = scmp.eq.s32.totalorder %s20, 1
    %p132 = por %p130, %p131
    %p134 = scmp.ne.s32.totalorder %s119, %s133
    %p135 = scmp.eq.s32.totalorder %s20, 0
    %p136 = por %p134, %p135
    %s138 = sadd.s32 %s137, 1
    %p141 = scmp.eq.s32.totalorder %s14, 1
    %p142 = scmp.ne.s32.totalorder %s137, %s139
    %p143 = scmp.eq.s32.totalorder %s14, 0
    %p144 = por %p142, %p143
    %p145 = scmp.ne.s32.totalorder %s137, %s139
    %p146 = scmp.eq.s32.totalorder %s19, 1
    %p147 = por %p145, %p146
    %p148 = scmp.ne.s32.totalorder %s139, %s140
    %p149 = scmp.eq.s32.totalorder %s19, 0
    %p150 = por %p148, %p149
    %p151 = scmp.ne.s32.totalorder %s139, %s140
    %p152 = scmp.eq.s32.totalorder %s20, 1
    %p153 = por %p151, %p152
    %p155 = scmp.ne.s32.totalorder %s140, %s154
    %p156 = scmp.eq.s32.totalorder %s20, 0
    %p157 = por %p155, %p156
    %s159 = sadd.s32 %s158, 1
    %p162 = scmp.eq.s32.totalorder %s14, 1
    %p163 = scmp.ne.s32.totalorder %s158, %s160
    %p164 = scmp.eq.s32.totalorder %s14, 0
    %p165 = por %p163, %p164
    %p166 = scmp.ne.s32.totalorder %s158, %s160
    %p167 = scmp.eq.s32.totalorder %s19, 1
    %p168 = por %p166, %p167
    %p169 = scmp.ne.s32.totalorder %s160, %s161
    %p170 = scmp.eq.s32.totalorder %s19, 0
    %p171 = por %p169, %p170
    %p172 = scmp.ne.s32.totalorder %s160, %s161
    %p173 = scmp.eq.s32.totalorder %s20, 1
    %p174 = por %p172, %p173
    %p176 = scmp.ne.s32.totalorder %s161, %s175
    %p177 = scmp.eq.s32.totalorder %s20, 0
    %p178 = por %p176, %p177
    %s180 = sadd.s32 %s179, 1
    %p183 = scmp.eq.s32.totalorder %s14, 1
    %p184 = scmp.ne.s32.totalorder %s179, %s181
    %p185 = scmp.eq.s32.totalorder %s14, 0
    %p186 = por %p184, %p185
    %p187 = scmp.ne.s32.totalorder %s179, %s181
    %p188 = scmp.eq.s32.totalorder %s19, 1
    %p189 = por %p187, %p188
    %p190 = scmp.ne.s32.totalorder %s181, %s182
    %p191 = scmp.eq.s32.totalorder %s19, 0
    %p192 = por %p190, %p191
    %p193 = scmp.ne.s32.totalorder %s181, %s182
    %p194 = scmp.eq.s32.totalorder %s20, 1
    %p195 = por %p193, %p194
    %p197 = scmp.ne.s32.totalorder %s182, %s196
    %p198 = scmp.eq.s32.totalorder %s20, 0
    %p199 = por %p197, %p198
    %s200 = ssub.s32 %s14, %s21
    %p201 = scmp.eq.s32.totalorder %s200, 0
    %s203 = sadd.s32 %s202, 1
    %s204 = scalar_select %p201, %s202, %s203
    %p207 = pneg %p201
    %p208 = scmp.eq.s32.totalorder %s14, 1
    %p209 = por %p207, %p208
    %p210 = scmp.ne.s32.totalorder %s202, %s205
    %p211 = scmp.eq.s32.totalorder %s14, 0
    %p212 = por %p210, %p211
    %p213 = scmp.ne.s32.totalorder %s202, %s205
    %p214 = scmp.eq.s32.totalorder %s19, 1
    %p215 = por %p213, %p214
    %p216 = scmp.ne.s32.totalorder %s205, %s206
    %p217 = scmp.eq.s32.totalorder %s19, 0
    %p218 = por %p216, %p217
    %p219 = scmp.ne.s32.totalorder %s205, %s206
    %p220 = scmp.eq.s32.totalorder %s20, 1
    %p221 = por %p219, %p220
    %p223 = scmp.ne.s32.totalorder %s206, %s222
    %p224 = scmp.eq.s32.totalorder %s20, 0
    %p225 = por %p223, %p224
    %p226 = scmp.le.s32.totalorder 1, %s14
    %p227 = scmp.lt.s32.totalorder %s14, 3
    %p228 = pnand %p226, %p227
    %p229 = pneg %p228
    // Predicated region
    $region9: #{decoder_forward.7} parent=5 // pred_check
      _
    $region10: #{decoder_forward.7} parent=5 // pred_check_branch
      %231 = sbr.rel (%p228) target = $region12
    $region11: #{decoder_forward.7} parent=5 // pred_region
      %s232 = ssub.s32 %s14, 1
      // Predicated region
      $region13: #{decoder_forward.7} parent=11 // pred_check
        %p233 = pneg %p87
      $region14: #{decoder_forward.7} parent=11 // pred_check_branch
        %235 = sbr.rel (%p233) target = $region16
      $region15: #{decoder_forward.7} parent=11 // pred_region
        _
      $region16: #{decoder_forward.7} parent=11 // pred_fallthru
        _
      // Predicated region
      $region17: #{decoder_forward.7} parent=11 // pred_check
        %p236 = pneg %p108
      $region18: #{decoder_forward.7} parent=11 // pred_check_branch
        %238 = sbr.rel (%p236) target = $region20
      $region19: #{decoder_forward.7} parent=11 // pred_region
        _
      $region20: #{decoder_forward.7} parent=11 // pred_fallthru
        _
      // Predicated region
      $region21: #{decoder_forward.7} parent=11 // pred_check
        %p239 = pneg %p129
      $region22: #{decoder_forward.7} parent=11 // pred_check_branch
        %241 = sbr.rel (%p239) target = $region24
      $region23: #{decoder_forward.7} parent=11 // pred_region
        _
      $region24: #{decoder_forward.7} parent=11 // pred_fallthru
        _
      // Predicated region
      $region25: #{decoder_forward.7} parent=11 // pred_check
        %p242 = pneg %p150
      $region26: #{decoder_forward.7} parent=11 // pred_check_branch
        %244 = sbr.rel (%p242) target = $region28
      $region27: #{decoder_forward.7} parent=11 // pred_region
        _
      $region28: #{decoder_forward.7} parent=11 // pred_fallthru
        _
      // Predicated region
      $region29: #{decoder_forward.7} parent=11 // pred_check
        %p245 = pneg %p171
      $region30: #{decoder_forward.7} parent=11 // pred_check_branch
        %247 = sbr.rel (%p245) target = $region32
      $region31: #{decoder_forward.7} parent=11 // pred_region
        _
      $region32: #{decoder_forward.7} parent=11 // pred_fallthru
        _
      // Predicated region
      $region33: #{decoder_forward.7} parent=11 // pred_check
        %p248 = pneg %p192
      $region34: #{decoder_forward.7} parent=11 // pred_check_branch
        %250 = sbr.rel (%p248) target = $region36
      $region35: #{decoder_forward.7} parent=11 // pred_region
        _
      $region36: #{decoder_forward.7} parent=11 // pred_fallthru
        _
    $region12: #{decoder_forward.7} parent=5 // pred_fallthru
      _
    %p251 = scmp.lt.s32.totalorder %s14, 2
    // Predicated region
    $region37: #{decoder_forward.7} parent=5 // pred_check
      %p252 = pneg %p251
    $region38: #{decoder_forward.7} parent=5 // pred_check_branch
      %254 = sbr.rel (%p252) target = $region40
    $region39: #{decoder_forward.7} parent=5 // pred_region
      // Predicated region
      $region41: #{decoder_forward.7} parent=39 // pred_check
        %p255 = pneg %p34
      $region42: #{decoder_forward.7} parent=39 // pred_check_branch
        %257 = sbr.rel (%p255) target = $region44
      $region43: #{decoder_forward.7} parent=39 // pred_region
        %p258 = scmp.lt.s32.totalorder %s14, 1
        %s259 = scalar_select %p258, %s14, 1
        %s260 = smul.addr %s259, 8
        %s261 = scalar_lea.vmem %s0, %s260
      $region44: #{decoder_forward.7} parent=39 // pred_fallthru
        _
      // Predicated region
      $region45: #{decoder_forward.7} parent=39 // pred_check
        %p262 = pneg %p60
      $region46: #{decoder_forward.7} parent=39 // pred_check_branch
        %264 = sbr.rel (%p262) target = $region48
      $region47: #{decoder_forward.7} parent=39 // pred_region
        %p265 = scmp.lt.s32.totalorder %s14, 1
        %s266 = scalar_select %p265, %s14, 1
        %s267 = scalar_lea.vmem %s1, %s266
      $region48: #{decoder_forward.7} parent=39 // pred_fallthru
        _
    $region40: #{decoder_forward.7} parent=5 // pred_fallthru
      _
    %p268 = scmp.le.s32.totalorder 1, %s14
    %p269 = scmp.lt.s32.totalorder %s14, 3
    %p270 = pnand %p268, %p269
    %p271 = pneg %p270
    // Predicated region
    $region49: #{decoder_forward.7} parent=5 // pred_check
      _
    $region50: #{decoder_forward.7} parent=5 // pred_check_branch
      %273 = sbr.rel (%p270) target = $region52
    $region51: #{decoder_forward.7} parent=5 // pred_region
      %s274 = ssub.s32 %s14, 1
      %p275 = scmp.lt.s32.totalorder %s19, 1
      %s276 = scalar_select %p275, %s19, 1
      %s277 = smul.addr %s276, 8
      %s278 = scalar_lea.vmem %s0, %s277
      %p279 = pneg %p40
      %p280 = pneg %p37
      %p281 = scmp.lt.s32.totalorder %s19, 1
      %s282 = scalar_select %p281, %s19, 1
      %s283 = scalar_lea.vmem %s1, %s282
      %p284 = pneg %p66
      %p285 = pneg %p63
      %p286 = pneg %p87
      %p287 = pneg %p84
      %p288 = pneg %p108
      %p289 = pneg %p105
      %p290 = pneg %p129
      %p291 = pneg %p126
      %p292 = pneg %p150
      %p293 = pneg %p147
      %p294 = pneg %p171
      %p295 = pneg %p168
      %p296 = pneg %p192
      %p297 = pneg %p189
      %p298 = pneg %p218
      %p299 = pneg %p215
      %p300 = scmp.lt.s32.totalorder %s19, 1
      %s301 = scalar_select %p300, %s19, 1
      %s302 = smul.addr %s301, 8
      %s303 = scalar_lea.vmem %s8, %s302
      %p304 = scmp.lt.s32.totalorder %s19, 1
      %s305 = scalar_select %p304, %s19, 1
      %s306 = smul.addr %s305, 8
      %s307 = scalar_lea.vmem %s0, %s306
      %p308 = scmp.lt.s32.totalorder %s19, 1
      %s309 = scalar_select %p308, %s19, 1
      %s310 = scalar_lea.vmem %s1, %s309
      %p311 = scmp.lt.s32.totalorder %s19, 1
      %s312 = scalar_select %p311, %s19, 1
      %s313 = smul.addr %s312, 8
      %s314 = scalar_lea.vmem %s8, %s313
      %v316 = vld [vmem:[%s307] sm:$0xff]
      %v317 = vld [vmem:[%s2] sm:$0xf]
      %v318 = vld [vmem:[%s2 + $0x4] sm:$0xf]
      %v319 = vld [vmem:[%s2 + $0x8] sm:$0xf]
      %v320 = vld [vmem:[%s2 + $0xc] sm:$0xf]
      %v321 = vld [vmem:[%s3] sm:$0x1]
      %v322 = vpack.c.bf16 %v316, %v316
      %v324 = vlaneseq
      %v325 = vshrl.u32 %v324, 7
      %v326 = vsub.s32 0, %v325
      %v327 = vrot.slane %v321, %v326
      %v333 = vunpack.c.l.b16 %v317
      %v334 = vunpack.c.l.b16 %v318
      %v335 = vunpack.c.l.b16 %v319
      %v336 = vunpack.c.l.b16 %v320
      %v337 = vpack.c.b16 %v334, %v333
      %v338 = vpack.c.b16 %v336, %v335
      %vm341 = vcmask 261120
      %v343 = vsel %vm341, %v322, 0
      %345 = vmatprep.subr.bf16.mxu0 0
      %346 = vmatpush1.bf16.msra.mxu0 %v337
      %347 = vmatprep.subr.bf16.mxu0 0
      %348 = vmatpush1.bf16.msra.mxu0 %v338
      %349 = vmatprep.subr.bf16.mxu0 0
      %350 = vmatpush1.bf16.msra.mxu0 0
      %351 = vmatprep.subr.bf16.mxu0 0
      %352 = vmatpush1.bf16.msra.mxu0 0
      %353 = vmatprep.subr.bf16.mxu0 0
      %354 = vmatpush1.bf16.msra.mxu0 0
      %355 = vmatprep.subr.bf16.mxu0 0
      %356 = vmatpush1.bf16.msra.mxu0 0
      %357 = vmatprep.subr.bf16.mxu0 0
      %358 = vmatpush1.bf16.msra.mxu0 0
      %359 = vmatprep.subr.bf16.mxu0 0
      %360 = vmatpush1.bf16.msra.mxu0 0
      %361 = vmatprep.subr.bf16.mxu0 0
      %362 = vmatpush1.bf16.msra.mxu0 0
      %363 = vmatprep.subr.bf16.mxu0 0
      %364 = vmatpush1.bf16.msra.mxu0 0
      %365 = vmatprep.subr.bf16.mxu0 0
      %366 = vmatpush1.bf16.msra.mxu0 0
      %367 = vmatprep.subr.bf16.mxu0 0
      %368 = vmatpush1.bf16.msra.mxu0 0
      %369 = vmatprep.subr.bf16.mxu0 0
      %370 = vmatpush1.bf16.msra.mxu0 0
      %371 = vmatprep.subr.bf16.mxu0 0
      %372 = vmatpush1.bf16.msra.mxu0 0
      %373 = vmatprep.subr.bf16.mxu0 0
      %374 = vmatpush1.bf16.msra.mxu0 0
      %375 = vmatprep.subr.bf16.mxu0 0
      %376 = vmatpush1.bf16.msra.mxu0 0
      %377 = vmatprep.mubr.bf16.mxu0 0
      %378 = vmatmul.mubr.bf16.gmra.mrb[0].mxu0 %v343
      %v379 = vpop.f32.mrb[0].mxu0
      %v380 = vadd.f32 %v327, %v379
      %v381 = vpop.f32.mrb[0].mxu0
      %v382 = vpop.f32.mrb[0].mxu0
      %v383 = vpop.f32.mrb[0].mxu0
      %384 = vdwg.mxu0
      %v385 = vlaneseq
      %v386 = vshrl.u32 %v385, 7
      %v387 = vlaneseq
      %v388 = vand.u32 %v387, 127
      %vm389 = vcmp.ge.s32.totalorder %v386, %v388
      %v390 = vsel %vm389, 0.0, -1e+30
      %v391 = vld [vmem:[%s310] sm:$0x1]
      %v393 = vlaneseq
      %v394 = vshrl.u32 %v393, 7
      %v395 = vsub.s32 0, %v394
      %v396 = vrot.slane %v391, %v395
      %v398 = vadd.f32 %v390, %v396
      %v399 = vpack.c.bf16 %v380, %v380
      %401 = vrot.lane.b32.xlu0 %v399, 96
      %v402 = vpop.permute.xlu0 %401
      %vm403 = vcmask 64512
      %v405 = vsel %vm403, %v399, 0
      %v408 = vsel %vm403, %v402, 0
      %410 = vmatprep.subr.bf16.mxu0 0
      %411 = vmatpush1.bf16.xpose.msra.mxu0 %v408
      %412 = vmatprep.subr.bf16.mxu0 0
      %413 = vmatpush1.bf16.xpose.msra.mxu0 0
      %414 = vmatprep.subr.bf16.mxu0 0
      %415 = vmatpush1.bf16.xpose.msra.mxu0 0
      %416 = vmatprep.subr.bf16.mxu0 0
      %417 = vmatpush1.bf16.xpose.msra.mxu0 0
      %418 = vmatprep.subr.bf16.mxu0 0
      %419 = vmatpush1.bf16.xpose.msra.mxu0 0
      %420 = vmatprep.subr.bf16.mxu0 0
      %421 = vmatpush1.bf16.xpose.msra.mxu0 0
      %422 = vmatprep.subr.bf16.mxu0 0
      %423 = vmatpush1.bf16.xpose.msra.mxu0 0
      %424 = vmatprep.subr.bf16.mxu0 0
      %425 = vmatpush1.bf16.xpose.msra.mxu0 0
      %426 = vmatprep.subr.bf16.mxu0 0
      %427 = vmatpush1.bf16.xpose.msra.mxu0 0
      %428 = vmatprep.subr.bf16.mxu0 0
      %429 = vmatpush1.bf16.xpose.msra.mxu0 0
      %430 = vmatprep.subr.bf16.mxu0 0
      %431 = vmatpush1.bf16.xpose.msra.mxu0 0
      %432 = vmatprep.subr.bf16.mxu0 0
      %433 = vmatpush1.bf16.xpose.msra.mxu0 0
      %434 = vmatprep.subr.bf16.mxu0 0
      %435 = vmatpush1.bf16.xpose.msra.mxu0 0
      %436 = vmatprep.subr.bf16.mxu0 0
      %437 = vmatpush1.bf16.xpose.msra.mxu0 0
      %438 = vmatprep.subr.bf16.mxu0 0
      %439 = vmatpush1.bf16.xpose.msra.mxu0 0
      %440 = vmatprep.subr.bf16.mxu0 0
      %441 = vmatpush1.bf16.xpose.msra.mxu0 0
      %442 = vmatprep.mubr.bf16.mxu0 0
      %443 = vmatmul.mubr.bf16.gmra.mrb[0].mxu0 %v405
      %v444 = vpop.f32.mrb[0].mxu0
      %v445 = vadd.f32 %v398, %v444
      %v446 = vpop.f32.mrb[0].mxu0
      %v447 = vpop.f32.mrb[0].mxu0
      %v448 = vpop.f32.mrb[0].mxu0
      %449 = vdwg.mxu0
      %v450 = vsel %vm403, %v445, -inf
      %451 = vmax.xlane.f32.xlu0 %v450
      %v452 = vpop.xlane.xlu0 %451
      %v453 = vsub.f32 %v445, %v452
      %v454 = vmul.f32 %v453, 1.442695
      %v455 = vpow.pop %v454
      %v456 = vsel %vm403, %v455, 0.0
      %457 = vadd.xlane.f32.xlu0 %v456
      %v458 = vpop.xlane.xlu0 %457
      %v459 = vrcp.pop %v458
      %v460 = vmul.f32 %v455, %v459
      %v461 = vpack.c.bf16 %v460, %v460
      %462 = vrot.lane.b32.xlu0 %v399, 64
      %v463 = vpop.permute.xlu0 %462
      %v465 = vsel %vm403, %v461, 0
      %vm467 = vcmask 1043456
      %v469 = vsel %vm467, %v463, 0
      %471 = vmatprep.subr.bf16.mxu0 0
      %472 = vmatpush1.bf16.msra.mxu0 %v469
      %473 = vmatprep.subr.bf16.mxu0 0
      %474 = vmatpush1.bf16.msra.mxu0 0
      %475 = vmatprep.subr.bf16.mxu0 0
      %476 = vmatpush1.bf16.msra.mxu0 0
      %477 = vmatprep.subr.bf16.mxu0 0
      %478 = vmatpush1.bf16.msra.mxu0 0
      %479 = vmatprep.subr.bf16.mxu0 0
      %480 = vmatpush1.bf16.msra.mxu0 0
      %481 = vmatprep.subr.bf16.mxu0 0
      %482 = vmatpush1.bf16.msra.mxu0 0
      %483 = vmatprep.subr.bf16.mxu0 0
      %484 = vmatpush1.bf16.msra.mxu0 0
      %485 = vmatprep.subr.bf16.mxu0 0
      %486 = vmatpush1.bf16.msra.mxu0 0
      %487 = vmatprep.subr.bf16.mxu0 0
      %488 = vmatpush1.bf16.msra.mxu0 0
      %489 = vmatprep.subr.bf16.mxu0 0
      %490 = vmatpush1.bf16.msra.mxu0 0
      %491 = vmatprep.subr.bf16.mxu0 0
      %492 = vmatpush1.bf16.msra.mxu0 0
      %493 = vmatprep.subr.bf16.mxu0 0
      %494 = vmatpush1.bf16.msra.mxu0 0
      %495 = vmatprep.subr.bf16.mxu0 0
      %496 = vmatpush1.bf16.msra.mxu0 0
      %497 = vmatprep.subr.bf16.mxu0 0
      %498 = vmatpush1.bf16.msra.mxu0 0
      %499 = vmatprep.subr.bf16.mxu0 0
      %500 = vmatpush1.bf16.msra.mxu0 0
      %501 = vmatprep.subr.bf16.mxu0 0
      %502 = vmatpush1.bf16.msra.mxu0 0
      %503 = vmatprep.mubr.bf16.mxu0 0
      %504 = vmatmul.mubr.bf16.gmra.mrb[0].mxu0 %v465
      %v505 = vpop.f32.mrb[0].mxu0
      %v506 = vadd.f32 0.0, %v505
      %v507 = vpop.f32.mrb[0].mxu0
      %v508 = vpop.f32.mrb[0].mxu0
      %v509 = vpop.f32.mrb[0].mxu0
      %510 = vdwg.mxu0
      %511 = vrot.lane.b32.xlu0 %v399, 120
      %v512 = vpop.permute.xlu0 %511
      %513 = vrot.lane.b32.xlu0 %v399, 88
      %v514 = vpop.permute.xlu0 %513
      %v516 = vsel %vm403, %v512, 0
      %v519 = vsel %vm403, %v514, 0
      %521 = vmatprep.subr.bf16.mxu0 0
      %522 = vmatpush1.bf16.xpose.msra.mxu0 %v519
      %523 = vmatprep.subr.bf16.mxu0 0
      %524 = vmatpush1.bf16.xpose.msra.mxu0 0
      %525 = vmatprep.subr.bf16.mxu0 0
      %526 = vmatpush1.bf16.xpose.msra.mxu0 0
      %527 = vmatprep.subr.bf16.mxu0 0
      %528 = vmatpush1.bf16.xpose.msra.mxu0 0
      %529 = vmatprep.subr.bf16.mxu0 0
      %530 = vmatpush1.bf16.xpose.msra.mxu0 0
      %531 = vmatprep.subr.bf16.mxu0 0
      %532 = vmatpush1.bf16.xpose.msra.mxu0 0
      %533 = vmatprep.subr.bf16.mxu0 0
      %534 = vmatpush1.bf16.xpose.msra.mxu0 0
      %535 = vmatprep.subr.bf16.mxu0 0
      %536 = vmatpush1.bf16.xpose.msra.mxu0 0
      %537 = vmatprep.subr.bf16.mxu0 0
      %538 = vmatpush1.bf16.xpose.msra.mxu0 0
      %539 = vmatprep.subr.bf16.mxu0 0
      %540 = vmatpush1.bf16.xpose.msra.mxu0 0
      %541 = vmatprep.subr.bf16.mxu0 0
      %542 = vmatpush1.bf16.xpose.msra.mxu0 0
      %543 = vmatprep.subr.bf16.mxu0 0
      %544 = vmatpush1.bf16.xpose.msra.mxu0 0
      %545 = vmatprep.subr.bf16.mxu0 0
      %546 = vmatpush1.bf16.xpose.msra.mxu0 0
      %547 = vmatprep.subr.bf16.mxu0 0
      %548 = vmatpush1.bf16.xpose.msra.mxu0 0
      %549 = vmatprep.subr.bf16.mxu0 0
      %550 = vmatpush1.bf16.xpose.msra.mxu0 0
      %551 = vmatprep.subr.bf16.mxu0 0
      %552 = vmatpush1.bf16.xpose.msra.mxu0 0
      %553 = vmatprep.mubr.bf16.mxu0 0
      %554 = vmatmul.mubr.bf16.gmra.mrb[0].mxu0 %v516
      %v555 = vpop.f32.mrb[0].mxu0
      %v556 = vadd.f32 %v398, %v555
      %v557 = vpop.f32.mrb[0].mxu0
      %v558 = vpop.f32.mrb[0].mxu0
      %v559 = vpop.f32.mrb[0].mxu0
      %560 = vdwg.mxu0
      %v561 = vsel %vm403, %v556, -inf
      %562 = vmax.xlane.f32.xlu0 %v561
      %v563 = vpop.xlane.xlu0 %562
      %v564 = vsub.f32 %v556, %v563
      %v565 = vmul.f32 %v564, 1.442695
      %v566 = vpow.pop %v565
      %v567 = vsel %vm403, %v566, 0.0
      %568 = vadd.xlane.f32.xlu0 %v567
      %v569 = vpop.xlane.xlu0 %568
      %v570 = vrcp.pop %v569
      %v571 = vmul.f32 %v566, %v570
      %v572 = vpack.c.bf16 %v571, %v571
      %573 = vrot.lane.b32.xlu0 %v399, 56
      %v574 = vpop.permute.xlu0 %573
      %v576 = vsel %vm403, %v572, 0
      %v579 = vsel %vm467, %v574, 0
      %581 = vmatprep.subr.bf16.mxu0 0
      %582 = vmatpush1.bf16.msra.mxu0 %v579
      %583 = vmatprep.subr.bf16.mxu0 0
      %584 = vmatpush1.bf16.msra.mxu0 0
      %585 = vmatprep.subr.bf16.mxu0 0
      %586 = vmatpush1.bf16.msra.mxu0 0
      %587 = vmatprep.subr.bf16.mxu0 0
      %588 = vmatpush1.bf16.msra.mxu0 0
      %589 = vmatprep.subr.bf16.mxu0 0
      %590 = vmatpush1.bf16.msra.mxu0 0
      %591 = vmatprep.subr.bf16.mxu0 0
      %592 = vmatpush1.bf16.msra.mxu0 0
      %593 = vmatprep.subr.bf16.mxu0 0
      %594 = vmatpush1.bf16.msra.mxu0 0
      %595 = vmatprep.subr.bf16.mxu0 0
      %596 = vmatpush1.bf16.msra.mxu0 0
      %597 = vmatprep.subr.bf16.mxu0 0
      %598 = vmatpush1.bf16.msra.mxu0 0
      %599 = vmatprep.subr.bf16.mxu0 0
      %600 = vmatpush1.bf16.msra.mxu0 0
      %601 = vmatprep.subr.bf16.mxu0 0
      %602 = vmatpush1.bf16.msra.mxu0 0
      %603 = vmatprep.subr.bf16.mxu0 0
      %604 = vmatpush1.bf16.msra.mxu0 0
      %605 = vmatprep.subr.bf16.mxu0 0
      %606 = vmatpush1.bf16.msra.mxu0 0
      %607 = vmatprep.subr.bf16.mxu0 0
      %608 = vmatpush1.bf16.msra.mxu0 0
      %609 = vmatprep.subr.bf16.mxu0 0
      %610 = vmatpush1.bf16.msra.mxu0 0
      %611 = vmatprep.subr.bf16.mxu0 0
      %612 = vmatpush1.bf16.msra.mxu0 0
      %613 = vmatprep.mubr.bf16.mxu0 0
      %614 = vmatmul.mubr.bf16.gmra.mrb[0].mxu0 %v576
      %v615 = vpop.f32.mrb[0].mxu0
      %v616 = vadd.f32 0.0, %v615
      %v617 = vpop.f32.mrb[0].mxu0
      %v618 = vpop.f32.mrb[0].mxu0
      %v619 = vpop.f32.mrb[0].mxu0
      %620 = vdwg.mxu0
      %621 = vrot.lane.b32.xlu0 %v399, 112
      %v622 = vpop.permute.xlu0 %621
      %623 = vrot.lane.b32.xlu0 %v399, 80
      %v624 = vpop.permute.xlu0 %623
      %v626 = vsel %vm403, %v622, 0
      %v629 = vsel %vm403, %v624, 0
      %631 = vmatprep.subr.bf16.mxu0 0
      %632 = vmatpush1.bf16.xpose.msra.mxu0 %v629
      %633 = vmatprep.subr.bf16.mxu0 0
      %634 = vmatpush1.bf16.xpose.msra.mxu0 0
      %635 = vmatprep.subr.bf16.mxu0 0
      %636 = vmatpush1.bf16.xpose.msra.mxu0 0
      %637 = vmatprep.subr.bf16.mxu0 0
      %638 = vmatpush1.bf16.xpose.msra.mxu0 0
      %639 = vmatprep.subr.bf16.mxu0 0
      %640 = vmatpush1.bf16.xpose.msra.mxu0 0
      %641 = vmatprep.subr.bf16.mxu0 0
      %642 = vmatpush1.bf16.xpose.msra.mxu0 0
      %643 = vmatprep.subr.bf16.mxu0 0
      %644 = vmatpush1.bf16.xpose.msra.mxu0 0
      %645 = vmatprep.subr.bf16.mxu0 0
      %646 = vmatpush1.bf16.xpose.msra.mxu0 0
      %647 = vmatprep.subr.bf16.mxu0 0
      %648 = vmatpush1.bf16.xpose.msra.mxu0 0
      %649 = vmatprep.subr.bf16.mxu0 0
      %650 = vmatpush1.bf16.xpose.msra.mxu0 0
      %651 = vmatprep.subr.bf16.mxu0 0
      %652 = vmatpush1.bf16.xpose.msra.mxu0 0
      %653 = vmatprep.subr.bf16.mxu0 0
      %654 = vmatpush1.bf16.xpose.msra.mxu0 0
      %655 = vmatprep.subr.bf16.mxu0 0
      %656 = vmatpush1.bf16.xpose.msra.mxu0 0
      %657 = vmatprep.subr.bf16.mxu0 0
      %658 = vmatpush1.bf16.xpose.msra.mxu0 0
      %659 = vmatprep.subr.bf16.mxu0 0
      %660 = vmatpush1.bf16.xpose.msra.mxu0 0
      %661 = vmatprep.subr.bf16.mxu0 0
      %662 = vmatpush1.bf16.xpose.msra.mxu0 0
      %663 = vmatprep.mubr.bf16.mxu0 0
      %664 = vmatmul.mubr.bf16.gmra.mrb[0].mxu0 %v626
      %v665 = vpop.f32.mrb[0].mxu0
      %v666 = vadd.f32 %v398, %v665
      %v667 = vpop.f32.mrb[0].mxu0
      %v668 = vpop.f32.mrb[0].mxu0
      %v669 = vpop.f32.mrb[0].mxu0
      %670 = vdwg.mxu0
      %v671 = vsel %vm403, %v666, -inf
      %672 = vmax.xlane.f32.xlu0 %v671
      %v673 = vpop.xlane.xlu0 %672
      %v674 = vsub.f32 %v666, %v673
      %v675 = vmul.f32 %v674, 1.442695
      %v676 = vpow.pop %v675
      %v677 = vsel %vm403, %v676, 0.0
      %678 = vadd.xlane.f32.xlu0 %v677
      %v679 = vpop.xlane.xlu0 %678
      %v680 = vrcp.pop %v679
      %v681 = vmul.f32 %v676, %v680
      %v682 = vpack.c.bf16 %v681, %v681
      %683 = vrot.lane.b32.xlu0 %v399, 48
      %v684 = vpop.permute.xlu0 %683
      %v686 = vsel %vm403, %v682, 0
      %v689 = vsel %vm467, %v684, 0
      %691 = vmatprep.subr.bf16.mxu0 0
      %692 = vmatpush1.bf16.msra.mxu0 %v689
      %693 = vmatprep.subr.bf16.mxu0 0
      %694 = vmatpush1.bf16.msra.mxu0 0
      %695 = vmatprep.subr.bf16.mxu0 0
      %696 = vmatpush1.bf16.msra.mxu0 0
      %697 = vmatprep.subr.bf16.mxu0 0
      %698 = vmatpush1.bf16.msra.mxu0 0
      %699 = vmatprep.subr.bf16.mxu0 0
      %700 = vmatpush1.bf16.msra.mxu0 0
      %701 = vmatprep.subr.bf16.mxu0 0
      %702 = vmatpush1.bf16.msra.mxu0 0
      %703 = vmatprep.subr.bf16.mxu0 0
      %704 = vmatpush1.bf16.msra.mxu0 0
      %705 = vmatprep.subr.bf16.mxu0 0
      %706 = vmatpush1.bf16.msra.mxu0 0
      %707 = vmatprep.subr.bf16.mxu0 0
      %708 = vmatpush1.bf16.msra.mxu0 0
      %709 = vmatprep.subr.bf16.mxu0 0
      %710 = vmatpush1.bf16.msra.mxu0 0
      %711 = vmatprep.subr.bf16.mxu0 0
      %712 = vmatpush1.bf16.msra.mxu0 0
      %713 = vmatprep.subr.bf16.mxu0 0
      %714 = vmatpush1.bf16.msra.mxu0 0
      %715 = vmatprep.subr.bf16.mxu0 0
      %716 = vmatpush1.bf16.msra.mxu0 0
      %717 = vmatprep.subr.bf16.mxu0 0
      %718 = vmatpush1.bf16.msra.mxu0 0
      %719 = vmatprep.subr.bf16.mxu0 0
      %720 = vmatpush1.bf16.msra.mxu0 0
      %721 = vmatprep.subr.bf16.mxu0 0
      %722 = vmatpush1.bf16.msra.mxu0 0
      %723 = vmatprep.mubr.bf16.mxu0 0
      %724 = vmatmul.mubr.bf16.gmra.mrb[0].mxu0 %v686
      %v725 = vpop.f32.mrb[0].mxu0
      %v726 = vadd.f32 0.0, %v725
      %v727 = vpop.f32.mrb[0].mxu0
      %v728 = vpop.f32.mrb[0].mxu0
      %v729 = vpop.f32.mrb[0].mxu0
      %730 = vdwg.mxu0
      %731 = vrot.lane.b32.xlu0 %v399, 104
      %v732 = vpop.permute.xlu0 %731
      %733 = vrot.lane.b32.xlu0 %v399, 72
      %v734 = vpop.permute.xlu0 %733
      %v736 = vsel %vm403, %v732, 0
      %v739 = vsel %vm403, %v734, 0
      %741 = vmatprep.subr.bf16.mxu0 0
      %742 = vmatpush1.bf16.xpose.msra.mxu0 %v739
      %743 = vmatprep.subr.bf16.mxu0 0
      %744 = vmatpush1.bf16.xpose.msra.mxu0 0
      %745 = vmatprep.subr.bf16.mxu0 0
      %746 = vmatpush1.bf16.xpose.msra.mxu0 0
      %747 = vmatprep.subr.bf16.mxu0 0
      %748 = vmatpush1.bf16.xpose.msra.mxu0 0
      %749 = vmatprep.subr.bf16.mxu0 0
      %750 = vmatpush1.bf16.xpose.msra.mxu0 0
      %751 = vmatprep.subr.bf16.mxu0 0
      %752 = vmatpush1.bf16.xpose.msra.mxu0 0
      %753 = vmatprep.subr.bf16.mxu0 0
      %754 = vmatpush1.bf16.xpose.msra.mxu0 0
      %755 = vmatprep.subr.bf16.mxu0 0
      %756 = vmatpush1.bf16.xpose.msra.mxu0 0
      %757 = vmatprep.subr.bf16.mxu0 0
      %758 = vmatpush1.bf16.xpose.msra.mxu0 0
      %759 = vmatprep.subr.bf16.mxu0 0
      %760 = vmatpush1.bf16.xpose.msra.mxu0 0
      %761 = vmatprep.subr.bf16.mxu0 0
      %762 = vmatpush1.bf16.xpose.msra.mxu0 0
      %763 = vmatprep.subr.bf16.mxu0 0
      %764 = vmatpush1.bf16.xpose.msra.mxu0 0
      %765 = vmatprep.subr.bf16.mxu0 0
      %766 = vmatpush1.bf16.xpose.msra.mxu0 0
      %767 = vmatprep.subr.bf16.mxu0 0
      %768 = vmatpush1.bf16.xpose.msra.mxu0 0
      %769 = vmatprep.subr.bf16.mxu0 0
      %770 = vmatpush1.bf16.xpose.msra.mxu0 0
      %771 = vmatprep.subr.bf16.mxu0 0
      %772 = vmatpush1.bf16.xpose.msra.mxu0 0
      %773 = vmatprep.mubr.bf16.mxu0 0
      %774 = vmatmul.mubr.bf16.gmra.mrb[0].mxu0 %v736
      %v775 = vpop.f32.mrb[0].mxu0
      %v776 = vadd.f32 %v398, %v775
      %v777 = vpop.f32.mrb[0].mxu0
      %v778 = vpop.f32.mrb[0].mxu0
      %v779 = vpop.f32.mrb[0].mxu0
      %780 = vdwg.mxu0
      %v781 = vsel %vm403, %v776, -inf
      %782 = vmax.xlane.f32.xlu0 %v781
      %v783 = vpop.xlane.xlu0 %782
      %v784 = vsub.f32 %v776, %v783
      %v785 = vmul.f32 %v784, 1.442695
      %v786 = vpow.pop %v785
      %v787 = vsel %vm403, %v786, 0.0
      %788 = vadd.xlane.f32.xlu0 %v787
      %v789 = vpop.xlane.xlu0 %788
      %v790 = vrcp.pop %v789
      %v791 = vmul.f32 %v786, %v790
      %v792 = vpack.c.bf16 %v791, %v791
      %793 = vrot.lane.b32.xlu0 %v399, 40
      %v794 = vpop.permute.xlu0 %793
      %v796 = vsel %vm403, %v792, 0
      %v799 = vsel %vm467, %v794, 0
      %801 = vmatprep.subr.bf16.mxu0 0
      %802 = vmatpush1.bf16.msra.mxu0 %v799
      %803 = vmatprep.subr.bf16.mxu0 0
      %804 = vmatpush1.bf16.msra.mxu0 0
      %805 = vmatprep.subr.bf16.mxu0 0
      %806 = vmatpush1.bf16.msra.mxu0 0
      %807 = vmatprep.subr.bf16.mxu0 0
      %808 = vmatpush1.bf16.msra.mxu0 0
      %809 = vmatprep.subr.bf16.mxu0 0
      %810 = vmatpush1.bf16.msra.mxu0 0
      %811 = vmatprep.subr.bf16.mxu0 0
      %812 = vmatpush1.bf16.msra.mxu0 0
      %813 = vmatprep.subr.bf16.mxu0 0
      %814 = vmatpush1.bf16.msra.mxu0 0
      %815 = vmatprep.subr.bf16.mxu0 0
      %816 = vmatpush1.bf16.msra.mxu0 0
      %817 = vmatprep.subr.bf16.mxu0 0
      %818 = vmatpush1.bf16.msra.mxu0 0
      %819 = vmatprep.subr.bf16.mxu0 0
      %820 = vmatpush1.bf16.msra.mxu0 0
      %821 = vmatprep.subr.bf16.mxu0 0
      %822 = vmatpush1.bf16.msra.mxu0 0
      %823 = vmatprep.subr.bf16.mxu0 0
      %824 = vmatpush1.bf16.msra.mxu0 0
      %825 = vmatprep.subr.bf16.mxu0 0
      %826 = vmatpush1.bf16.msra.mxu0 0
      %827 = vmatprep.subr.bf16.mxu0 0
      %828 = vmatpush1.bf16.msra.mxu0 0
      %829 = vmatprep.subr.bf16.mxu0 0
      %830 = vmatpush1.bf16.msra.mxu0 0
      %831 = vmatprep.subr.bf16.mxu0 0
      %832 = vmatpush1.bf16.msra.mxu0 0
      %833 = vmatprep.mubr.bf16.mxu0 0
      %834 = vmatmul.mubr.bf16.gmra.mrb[0].mxu0 %v796
      %v835 = vpop.f32.mrb[0].mxu0
      %v836 = vadd.f32 0.0, %v835
      %v837 = vpop.f32.mrb[0].mxu0
      %v838 = vpop.f32.mrb[0].mxu0
      %v839 = vpop.f32.mrb[0].mxu0
      %840 = vdwg.mxu0
      %842 = vrot.lane.b32.xlu0 %v616, 8
      %v843 = vpop.permute.xlu0 %842
      %846 = vrot.lane.b32.xlu0 %v726, 16
      %v847 = vpop.permute.xlu0 %846
      %850 = vrot.lane.b32.xlu0 %v836, 24
      %v851 = vpop.permute.xlu0 %850
      %v853 = vsel %vm403, %v506, %v843
      %vm854 = vcmask 130048
      %v855 = vsel %vm854, %v853, %v847
      %vm856 = vcmask 195584
      %v857 = vsel %vm856, %v855, %v851
      %v858 = vpack.c.bf16 %v857, %v857
      %v859 = vld [vmem:[%s4] sm:$0xf]
      %v860 = vld [vmem:[%s4 + $0x4] sm:$0xf]
      %v861 = vld [vmem:[%s4 + $0x8] sm:$0xf]
      %v862 = vld [vmem:[%s4 + $0xc] sm:$0xf]
      %v863 = vld [vmem:[%s5] sm:$0x1]
      %v865 = vlaneseq
      %v866 = vshrl.u32 %v865, 7
      %v867 = vsub.s32 0, %v866
      %v868 = vrot.slane %v863, %v867
      %v874 = vunpack.c.l.b16 %v859
      %v875 = vunpack.c.l.b16 %v860
      %v876 = vunpack.c.l.b16 %v861
      %v877 = vunpack.c.l.b16 %v862
      %v878 = vpack.c.b16 %v875, %v874
      %v879 = vpack.c.b16 %v877, %v876
      %v883 = vsel %vm341, %v858, 0
      %885 = vmatprep.subr.bf16.mxu0 0
      %886 = vmatpush1.bf16.msra.mxu0 %v878
      %887 = vmatprep.subr.bf16.mxu0 0
      %888 = vmatpush1.bf16.msra.mxu0 %v879
      %889 = vmatprep.subr.bf16.mxu0 0
      %890 = vmatpush1.bf16.msra.mxu0 0
      %891 = vmatprep.subr.bf16.mxu0 0
      %892 = vmatpush1.bf16.msra.mxu0 0
      %893 = vmatprep.subr.bf16.mxu0 0
      %894 = vmatpush1.bf16.msra.mxu0 0
      %895 = vmatprep.subr.bf16.mxu0 0
      %896 = vmatpush1.bf16.msra.mxu0 0
      %897 = vmatprep.subr.bf16.mxu0 0
      %898 = vmatpush1.bf16.msra.mxu0 0
      %899 = vmatprep.subr.bf16.mxu0 0
      %900 = vmatpush1.bf16.msra.mxu0 0
      %901 = vmatprep.subr.bf16.mxu0 0
      %902 = vmatpush1.bf16.msra.mxu0 0
      %903 = vmatprep.subr.bf16.mxu0 0
      %904 = vmatpush1.bf16.msra.mxu0 0
      %905 = vmatprep.subr.bf16.mxu0 0
      %906 = vmatpush1.bf16.msra.mxu0 0
      %907 = vmatprep.subr.bf16.mxu0 0
      %908 = vmatpush1.bf16.msra.mxu0 0
      %909 = vmatprep.subr.bf16.mxu0 0
      %910 = vmatpush1.bf16.msra.mxu0 0
      %911 = vmatprep.subr.bf16.mxu0 0
      %912 = vmatpush1.bf16.msra.mxu0 0
      %913 = vmatprep.subr.bf16.mxu0 0
      %914 = vmatpush1.bf16.msra.mxu0 0
      %915 = vmatprep.subr.bf16.mxu0 0
      %916 = vmatpush1.bf16.msra.mxu0 0
      %917 = vmatprep.mubr.bf16.mxu0 0
      %918 = vmatmul.mubr.bf16.gmra.mrb[0].mxu0 %v883
      %v919 = vpop.f32.mrb[0].mxu0
      %v920 = vadd.f32 %v868, %v919
      %v921 = vpop.f32.mrb[0].mxu0
      %v922 = vpop.f32.mrb[0].mxu0
      %v923 = vpop.f32.mrb[0].mxu0
      %924 = vdwg.mxu0
      %v925 = vadd.f32 %v316, %v920
      %v926 = vsel %vm341, %v925, 0.0
      %927 = vadd.xlane.f32.xlu0 %v926
      %v928 = vpop.xlane.xlu0 %927
      %v929 = vrcp.pop 32.0
      %v930 = vmul.f32 %v928, %v929
      %v931 = vsub.f32 %v925, %v930
      %v932 = vmul.f32 %v931, %v931
      %v933 = vsel %vm341, %v932, 0.0
      %934 = vadd.xlane.f32.xlu0 %v933
      %v935 = vpop.xlane.xlu0 %934
      %v936 = vmul.f32 %v935, %v929
      %v937 = vadd.f32 %v936, 1e-05
      %v938 = vrsqrt.pop %v937
      %v939 = vmul.f32 %v931, %v938
      %v940 = vld [vmem:[%s6] sm:$0x1]
      %v942 = vlaneseq
      %v943 = vshrl.u32 %v942, 7
      %v944 = vsub.s32 0, %v943
      %v945 = vrot.slane %v940, %v944
      %v947 = vmul.f32 %v939, %v945
      %v948 = vld [vmem:[%s7] sm:$0x1]
      %v950 = vlaneseq
      %v951 = vshrl.u32 %v950, 7
      %v952 = vsub.s32 0, %v951
      %v953 = vrot.slane %v948, %v952
      %v955 = vadd.f32 %v947, %v953
      %956 = vst.msk [vmem:[%s314] sm:$0xff] %vm341, %v955
      %p957 = scmp.lt.s32.totalorder %s19, 1
      %s958 = scalar_select %p957, %s19, 1
      %s959 = smul.addr %s958, 8
      %s960 = scalar_lea.vmem %s8, %s959
      // Predicated region
      $region53: #{decoder_forward.7} parent=51 // pred_check
        %p961 = pneg %p215
      $region54: #{decoder_forward.7} parent=51 // pred_check_branch
        %963 = sbr.rel (%p961) target = $region56
      $region55: #{decoder_forward.7} parent=51 // pred_region
        _
      $region56: #{decoder_forward.7} parent=51 // pred_fallthru
        _
    $region52: #{decoder_forward.7} parent=5 // pred_fallthru
      _
    %p964 = scmp.le.s32.totalorder 2, %s14
    // Predicated region
    $region57: #{decoder_forward.7} parent=5 // pred_check
      %p965 = pneg %p964
    $region58: #{decoder_forward.7} parent=5 // pred_check_branch
      %967 = sbr.rel (%p965) target = $region60
    $region59: #{decoder_forward.7} parent=5 // pred_region
      %s968 = ssub.s32 %s14, 2
      // Predicated region
      $region61: #{decoder_forward.7} parent=59 // pred_check
        %p969 = pneg %p221
      $region62: #{decoder_forward.7} parent=59 // pred_check_branch
        %971 = sbr.rel (%p969) target = $region64
      $region63: #{decoder_forward.7} parent=59 // pred_region
        %p972 = scmp.lt.s32.totalorder %s20, 1
        %s973 = scalar_select %p972, %s20, 1
        %s974 = smul.addr %s973, 8
        %s975 = scalar_lea.vmem %s8, %s974
      $region64: #{decoder_forward.7} parent=59 // pred_fallthru
        _
    $region60: #{decoder_forward.7} parent=5 // pred_fallthru
      _
  $region6: #{decoder_forward.7} parent=0 // loop_footer
    %s18 = sadd.s32 1, %s14
  $region7: #{decoder_forward.7} parent=0 // loop_footer_branch
    %13 = sbr.rel target = $region3
  $region8: #{decoder_forward.7} parent=0 // loop_exit
    _

// kernel: decoder_forward.8
$region0: #{decoder_forward.8}
  #allocation0 [shape = 'u32[]', space=smem, size = 0x4, offset = 0x4, fixed_abs, tag = 'smem constant byte address 0x4 - core index']
  #allocation1 [shape = 'u32[144,128]{1,0:T(1,128)}', space=vmem, size = 0x12000, scoped, tag = 'internal scratch']
  %s0 = inlined_call_operand.vmem [shape: f32[2,8,32], index: 0, kind: input, shape index: {}]
  %s1 = inlined_call_operand.vmem [shape: f32[2,8,32], index: 1, kind: input, shape index: {}]
  %s2 = inlined_call_operand.vmem [shape: bf16[32,96], index: 2, kind: input, shape index: {}]
  %s3 = inlined_call_operand.vmem [shape: f32[1,96], index: 3, kind: input, shape index: {}]
  %s4 = inlined_call_operand.vmem [shape: bf16[32,32], index: 4, kind: input, shape index: {}]
  %s5 = inlined_call_operand.vmem [shape: f32[1,32], index: 5, kind: input, shape index: {}]
  %s6 = inlined_call_operand.vmem [shape: f32[1,32], index: 6, kind: input, shape index: {}]
  %s7 = inlined_call_operand.vmem [shape: f32[1,32], index: 7, kind: input, shape index: {}]
  %s8 = inlined_call_operand.vmem [shape: f32[2,8,32], index: 8, kind: output, shape index: {}]
  %s9 = sld [smem:[#allocation0]]
  $region65: #{decoder_forward.8} parent=0
    _
  %s11 = ssub.s32 1, %s9
  %s12 = scalar_select 0, %s11, %s9
  loop: start=0, step=1, limit=4
  $region2: #{decoder_forward.8} parent=0 // loop_pre_header
    _
  $region3: #{decoder_forward.8} parent=0 // loop_header
    %s14 = sphi 0, %s18
    %p15 = scmp.ge.s32.totalorder %s14, 4
    %s24 = sphi 0, %s26
    %s27 = sphi 0, %s24
    %s28 = sphi 0, %s27
    %s44 = sphi 0, %s28
    %s50 = sphi 0, %s52
    %s53 = sphi 0, %s50
    %s54 = sphi 0, %s53
    %s70 = sphi 0, %s54
    %s74 = sphi 0, %s74
    %s76 = sphi 0, %s74
    %s77 = sphi 0, %s76
    %s91 = sphi 0, %s77
    %s95 = sphi 0, %s95
    %s97 = sphi 0, %s95
    %s98 = sphi 0, %s97
    %s112 = sphi 0, %s98
    %s116 = sphi 0, %s116
    %s118 = sphi 0, %s116
    %s119 = sphi 0, %s118
    %s133 = sphi 0, %s119
    %s137 = sphi 0, %s137
    %s139 = sphi 0, %s137
    %s140 = sphi 0, %s139
    %s154 = sphi 0, %s140
    %s158 = sphi 0, %s158
    %s160 = sphi 0, %s158
    %s161 = sphi 0, %s160
    %s175 = sphi 0, %s161
    %s179 = sphi 0, %s179
    %s181 = sphi 0, %s179
    %s182 = sphi 0, %s181
    %s196 = sphi 0, %s182
    %s202 = sphi 0, %s204
    %s205 = sphi 0, %s202
    %s206 = sphi 0, %s205
    %s222 = sphi 0, %s206
  $region4: #{decoder_forward.8} parent=0 // loop_header_branch
    %17 = sbr.rel (%p15) target = $region8
  $region5: #{decoder_forward.8} parent=0 // loop_body
    %s19 = ssub.s32 %s14, 1
    %s20 = ssub.s32 %s14, 2
    %s21 = sadd.s32 %s14, 1
    %s22 = ssub.s32 %s14, %s21
    %p23 = scmp.eq.s32.totalorder %s22, 0
    %s25 = sadd.s32 %s24, 1
    %s26 = scalar_select %p23, %s24, %s25
    %p29 = pneg %p23
    %p30 = scmp.eq.s32.totalorder %s14, 1
    %p31 = por %p29, %p30
    %p32 = scmp.ne.s32.totalorder %s24, %s27
    %p33 = scmp.eq.s32.totalorder %s14, 0
    %p34 = por %p32, %p33
    %p35 = scmp.ne.s32.totalorder %s24, %s27
    %p36 = scmp.eq.s32.totalorder %s19, 1
    %p37 = por %p35, %p36
    %p38 = scmp.ne.s32.totalorder %s27, %s28
    %p39 = scmp.eq.s32.totalorder %s19, 0
    %p40 = por %p38, %p39
    %p41 = scmp.ne.s32.totalorder %s27, %s28
    %p42 = scmp.eq.s32.totalorder %s20, 1
    %p43 = por %p41, %p42
    %p45 = scmp.ne.s32.totalorder %s28, %s44
    %p46 = scmp.eq.s32.totalorder %s20, 0
    %p47 = por %p45, %p46
    %s48 = ssub.s32 %s14, %s21
    %p49 = scmp.eq.s32.totalorder %s48, 0
    %s51 = sadd.s32 %s50, 1
    %s52 = scalar_select %p49, %s50, %s51
    %p55 = pneg %p49
    %p56 = scmp.eq.s32.totalorder %s14, 1
    %p57 = por %p55, %p56
    %p58 = scmp.ne.s32.totalorder %s50, %s53
    %p59 = scmp.eq.s32.totalorder %s14, 0
    %p60 = por %p58, %p59
    %p61 = scmp.ne.s32.totalorder %s50, %s53
    %p62 = scmp.eq.s32.totalorder %s19, 1
    %p63 = por %p61, %p62
    %p64 = scmp.ne.s32.totalorder %s53, %s54
    %p65 = scmp.eq.s32.totalorder %s19, 0
    %p66 = por %p64, %p65
    %p67 = scmp.ne.s32.totalorder %s53, %s54
    %p68 = scmp.eq.s32.totalorder %s20, 1
    %p69 = por %p67, %p68
    %p71 = scmp.ne.s32.totalorder %s54, %s70
    %p72 = scmp.eq.s32.totalorder %s20, 0
    %p73 = por %p71, %p72
    %s75 = sadd.s32 %s74, 1
    %p78 = scmp.eq.s32.totalorder %s14, 1
    %p79 = scmp.ne.s32.totalorder %s74, %s76
    %p80 = scmp.eq.s32.totalorder %s14, 0
    %p81 = por %p79, %p80
    %p82 = scmp.ne.s32.totalorder %s74, %s76
    %p83 = scmp.eq.s32.totalorder %s19, 1
    %p84 = por %p82, %p83
    %p85 = scmp.ne.s32.totalorder %s76, %s77
    %p86 = scmp.eq.s32.totalorder %s19, 0
    %p87 = por %p85, %p86
    %p88 = scmp.ne.s32.totalorder %s76, %s77
    %p89 = scmp.eq.s32.totalorder %s20, 1
    %p90 = por %p88, %p89
    %p92 = scmp.ne.s32.totalorder %s77, %s91
    %p93 = scmp.eq.s32.totalorder %s20, 0
    %p94 = por %p92, %p93
    %s96 = sadd.s32 %s95, 1
    %p99 = scmp.eq.s32.totalorder %s14, 1
    %p100 = scmp.ne.s32.totalorder %s95, %s97
    %p101 = scmp.eq.s32.totalorder %s14, 0
    %p102 = por %p100, %p101
    %p103 = scmp.ne.s32.totalorder %s95, %s97
    %p104 = scmp.eq.s32.totalorder %s19, 1
    %p105 = por %p103, %p104
    %p106 = scmp.ne.s32.totalorder %s97, %s98
    %p107 = scmp.eq.s32.totalorder %s19, 0
    %p108 = por %p106, %p107
    %p109 = scmp.ne.s32.totalorder %s97, %s98
    %p110 = scmp.eq.s32.totalorder %s20, 1
    %p111 = por %p109, %p110
    %p113 = scmp.ne.s32.totalorder %s98, %s112
    %p114 = scmp.eq.s32.totalorder %s20, 0
    %p115 = por %p113, %p114
    %s117 = sadd.s32 %s116, 1
    %p120 = scmp.eq.s32.totalorder %s14, 1
    %p121 = scmp.ne.s32.totalorder %s116, %s118
    %p122 = scmp.eq.s32.totalorder %s14, 0
    %p123 = por %p121, %p122
    %p124 = scmp.ne.s32.totalorder %s116, %s118
    %p125 = scmp.eq.s32.totalorder %s19, 1
    %p126 = por %p124, %p125
    %p127 = scmp.ne.s32.totalorder %s118, %s119
    %p128 = scmp.eq.s32.totalorder %s19, 0
    %p129 = por %p127, %p128
    %p130 = scmp.ne.s32.totalorder %s118, %s119
    %p131 = scmp.eq.s32.totalorder %s20, 1
    %p132 = por %p130, %p131
    %p134 = scmp.ne.s32.totalorder %s119, %s133
    %p135 = scmp.eq.s32.totalorder %s20, 0
    %p136 = por %p134, %p135
    %s138 = sadd.s32 %s137, 1
    %p141 = scmp.eq.s32.totalorder %s14, 1
    %p142 = scmp.ne.s32.totalorder %s137, %s139
    %p143 = scmp.eq.s32.totalorder %s14, 0
    %p144 = por %p142, %p143
    %p145 = scmp.ne.s32.totalorder %s137, %s139
    %p146 = scmp.eq.s32.totalorder %s19, 1
    %p147 = por %p145, %p146
    %p148 = scmp.ne.s32.totalorder %s139, %s140
    %p149 = scmp.eq.s32.totalorder %s19, 0
    %p150 = por %p148, %p149
    %p151 = scmp.ne.s32.totalorder %s139, %s140
    %p152 = scmp.eq.s32.totalorder %s20, 1
    %p153 = por %p151, %p152
    %p155 = scmp.ne.s32.totalorder %s140, %s154
    %p156 = scmp.eq.s32.totalorder %s20, 0
    %p157 = por %p155, %p156
    %s159 = sadd.s32 %s158, 1
    %p162 = scmp.eq.s32.totalorder %s14, 1
    %p163 = scmp.ne.s32.totalorder %s158, %s160
    %p164 = scmp.eq.s32.totalorder %s14, 0
    %p165 = por %p163, %p164
    %p166 = scmp.ne.s32.totalorder %s158, %s160
    %p167 = scmp.eq.s32.totalorder %s19, 1
    %p168 = por %p166, %p167
    %p169 = scmp.ne.s32.totalorder %s160, %s161
    %p170 = scmp.eq.s32.totalorder %s19, 0
    %p171 = por %p169, %p170
    %p172 = scmp.ne.s32.totalorder %s160, %s161
    %p173 = scmp.eq.s32.totalorder %s20, 1
    %p174 = por %p172, %p173
    %p176 = scmp.ne.s32.totalorder %s161, %s175
    %p177 = scmp.eq.s32.totalorder %s20, 0
    %p178 = por %p176, %p177
    %s180 = sadd.s32 %s179, 1
    %p183 = scmp.eq.s32.totalorder %s14, 1
    %p184 = scmp.ne.s32.totalorder %s179, %s181
    %p185 = scmp.eq.s32.totalorder %s14, 0
    %p186 = por %p184, %p185
    %p187 = scmp.ne.s32.totalorder %s179, %s181
    %p188 = scmp.eq.s32.totalorder %s19, 1
    %p189 = por %p187, %p188
    %p190 = scmp.ne.s32.totalorder %s181, %s182
    %p191 = scmp.eq.s32.totalorder %s19, 0
    %p192 = por %p190, %p191
    %p193 = scmp.ne.s32.totalorder %s181, %s182
    %p194 = scmp.eq.s32.totalorder %s20, 1
    %p195 = por %p193, %p194
    %p197 = scmp.ne.s32.totalorder %s182, %s196
    %p198 = scmp.eq.s32.totalorder %s20, 0
    %p199 = por %p197, %p198
    %s200 = ssub.s32 %s14, %s21
    %p201 = scmp.eq.s32.totalorder %s200, 0
    %s203 = sadd.s32 %s202, 1
    %s204 = scalar_select %p201, %s202, %s203
    %p207 = pneg %p201
    %p208 = scmp.eq.s32.totalorder %s14, 1
    %p209 = por %p207, %p208
    %p210 = scmp.ne.s32.totalorder %s202, %s205
    %p211 = scmp.eq.s32.totalorder %s14, 0
    %p212 = por %p210, %p211
    %p213 = scmp.ne.s32.totalorder %s202, %s205
    %p214 = scmp.eq.s32.totalorder %s19, 1
    %p215 = por %p213, %p214
    %p216 = scmp.ne.s32.totalorder %s205, %s206
    %p217 = scmp.eq.s32.totalorder %s19, 0
    %p218 = por %p216, %p217
    %p219 = scmp.ne.s32.totalorder %s205, %s206
    %p220 = scmp.eq.s32.totalorder %s20, 1
    %p221 = por %p219, %p220
    %p223 = scmp.ne.s32.totalorder %s206, %s222
    %p224 = scmp.eq.s32.totalorder %s20, 0
    %p225 = por %p223, %p224
    %p226 = scmp.le.s32.totalorder 1, %s14
    %p227 = scmp.lt.s32.totalorder %s14, 3
    %p228 = pnand %p226, %p227
    %p229 = pneg %p228
    // Predicated region
    $region9: #{decoder_forward.8} parent=5 // pred_check
      _
    $region10: #{decoder_forward.8} parent=5 // pred_check_branch
      %231 = sbr.rel (%p228) target = $region12
    $region11: #{decoder_forward.8} parent=5 // pred_region
      %s232 = ssub.s32 %s14, 1
      // Predicated region
      $region13: #{decoder_forward.8} parent=11 // pred_check
        %p233 = pneg %p87
      $region14: #{decoder_forward.8} parent=11 // pred_check_branch
        %235 = sbr.rel (%p233) target = $region16
      $region15: #{decoder_forward.8} parent=11 // pred_region
        _
      $region16: #{decoder_forward.8} parent=11 // pred_fallthru
        _
      // Predicated region
      $region17: #{decoder_forward.8} parent=11 // pred_check
        %p236 = pneg %p108
      $region18: #{decoder_forward.8} parent=11 // pred_check_branch
        %238 = sbr.rel (%p236) target = $region20
      $region19: #{decoder_forward.8} parent=11 // pred_region
        _
      $region20: #{decoder_forward.8} parent=11 // pred_fallthru
        _
      // Predicated region
      $region21: #{decoder_forward.8} parent=11 // pred_check
        %p239 = pneg %p129
      $region22: #{decoder_forward.8} parent=11 // pred_check_branch
        %241 = sbr.rel (%p239) target = $region24
      $region23: #{decoder_forward.8} parent=11 // pred_region
        _
      $region24: #{decoder_forward.8} parent=11 // pred_fallthru
        _
      // Predicated region
      $region25: #{decoder_forward.8} parent=11 // pred_check
        %p242 = pneg %p150
      $region26: #{decoder_forward.8} parent=11 // pred_check_branch
        %244 = sbr.rel (%p242) target = $region28
      $region27: #{decoder_forward.8} parent=11 // pred_region
        _
      $region28: #{decoder_forward.8} parent=11 // pred_fallthru
        _
      // Predicated region
      $region29: #{decoder_forward.8} parent=11 // pred_check
        %p245 = pneg %p171
      $region30: #{decoder_forward.8} parent=11 // pred_check_branch
        %247 = sbr.rel (%p245) target = $region32
      $region31: #{decoder_forward.8} parent=11 // pred_region
        _
      $region32: #{decoder_forward.8} parent=11 // pred_fallthru
        _
      // Predicated region
      $region33: #{decoder_forward.8} parent=11 // pred_check
        %p248 = pneg %p192
      $region34: #{decoder_forward.8} parent=11 // pred_check_branch
        %250 = sbr.rel (%p248) target = $region36
      $region35: #{decoder_forward.8} parent=11 // pred_region
        _
      $region36: #{decoder_forward.8} parent=11 // pred_fallthru
        _
    $region12: #{decoder_forward.8} parent=5 // pred_fallthru
      _
    %p251 = scmp.lt.s32.totalorder %s14, 2
    // Predicated region
    $region37: #{decoder_forward.8} parent=5 // pred_check
      %p252 = pneg %p251
    $region38: #{decoder_forward.8} parent=5 // pred_check_branch
      %254 = sbr.rel (%p252) target = $region40
    $region39: #{decoder_forward.8} parent=5 // pred_region
      // Predicated region
      $region41: #{decoder_forward.8} parent=39 // pred_check
        %p255 = pneg %p34
      $region42: #{decoder_forward.8} parent=39 // pred_check_branch
        %257 = sbr.rel (%p255) target = $region44
      $region43: #{decoder_forward.8} parent=39 // pred_region
        %p258 = scmp.lt.s32.totalorder %s14, 1
        %s259 = scalar_select %p258, %s14, 1
        %s260 = smul.addr %s259, 8
        %s261 = scalar_lea.vmem %s0, %s260
      $region44: #{decoder_forward.8} parent=39 // pred_fallthru
        _
      // Predicated region
      $region45: #{decoder_forward.8} parent=39 // pred_check
        %p262 = pneg %p60
      $region46: #{decoder_forward.8} parent=39 // pred_check_branch
        %264 = sbr.rel (%p262) target = $region48
      $region47: #{decoder_forward.8} parent=39 // pred_region
        %p265 = scmp.lt.s32.totalorder %s14, 1
        %s266 = scalar_select %p265, %s14, 1
        %s267 = smul.addr %s266, 8
        %s268 = scalar_lea.vmem %s1, %s267
      $region48: #{decoder_forward.8} parent=39 // pred_fallthru
        _
    $region40: #{decoder_forward.8} parent=5 // pred_fallthru
      _
    %p269 = scmp.le.s32.totalorder 1, %s14
    %p270 = scmp.lt.s32.totalorder %s14, 3
    %p271 = pnand %p269, %p270
    %p272 = pneg %p271
    // Predicated region
    $region49: #{decoder_forward.8} parent=5 // pred_check
      _
    $region50: #{decoder_forward.8} parent=5 // pred_check_branch
      %274 = sbr.rel (%p271) target = $region52
    $region51: #{decoder_forward.8} parent=5 // pred_region
      %s275 = ssub.s32 %s14, 1
      %p276 = scmp.lt.s32.totalorder %s19, 1
      %s277 = scalar_select %p276, %s19, 1
      %s278 = smul.addr %s277, 8
      %s279 = scalar_lea.vmem %s0, %s278
      %p280 = pneg %p40
      %p281 = pneg %p37
      %p282 = scmp.lt.s32.totalorder %s19, 1
      %s283 = scalar_select %p282, %s19, 1
      %s284 = smul.addr %s283, 8
      %s285 = scalar_lea.vmem %s1, %s284
      %p286 = pneg %p66
      %p287 = pneg %p63
      %p288 = pneg %p87
      %p289 = pneg %p84
      %p290 = pneg %p108
      %p291 = pneg %p105
      %p292 = pneg %p129
      %p293 = pneg %p126
      %p294 = pneg %p150
      %p295 = pneg %p147
      %p296 = pneg %p171
      %p297 = pneg %p168
      %p298 = pneg %p192
      %p299 = pneg %p189
      %p300 = pneg %p218
      %p301 = pneg %p215
      %p302 = scmp.lt.s32.totalorder %s19, 1
      %s303 = scalar_select %p302, %s19, 1
      %s304 = smul.addr %s303, 8
      %s305 = scalar_lea.vmem %s8, %s304
      %p306 = scmp.lt.s32.totalorder %s19, 1
      %s307 = scalar_select %p306, %s19, 1
      %s308 = smul.addr %s307, 8
      %s309 = scalar_lea.vmem %s0, %s308
      %p310 = scmp.lt.s32.totalorder %s19, 1
      %s311 = scalar_select %p310, %s19, 1
      %s312 = smul.addr %s311, 8
      %s313 = scalar_lea.vmem %s1, %s312
      %p314 = scmp.lt.s32.totalorder %s19, 1
      %s315 = scalar_select %p314, %s19, 1
      %s316 = smul.addr %s315, 8
      %s317 = scalar_lea.vmem %s8, %s316
      %v319 = vld [vmem:[%s309] sm:$0xff]
      %v320 = vld [vmem:[%s2] sm:$0xf]
      %v321 = vld [vmem:[%s2 + $0x4] sm:$0xf]
      %v322 = vld [vmem:[%s2 + $0x8] sm:$0xf]
      %v323 = vld [vmem:[%s2 + $0xc] sm:$0xf]
      %v324 = vld [vmem:[%s3] sm:$0x1]
      %v325 = vpack.c.bf16 %v319, %v319
      %v326 = vld [vmem:[%s313] sm:$0xff]
      %v328 = vlaneseq
      %v329 = vshrl.u32 %v328, 7
      %v330 = vsub.s32 0, %v329
      %v331 = vrot.slane %v324, %v330
      %v337 = vunpack.c.l.b16 %v320
      %v338 = vunpack.c.l.b16 %v321
      %v339 = vunpack.c.l.b16 %v322
      %v340 = vunpack.c.l.b16 %v323
      %v341 = vpack.c.b16 %v338, %v337
      %v342 = vpack.c.b16 %v340, %v339
      %vm345 = vcmask 261120
      %v347 = vsel %vm345, %v325, 0
      %349 = vmatprep.subr.bf16.mxu0 0
      %350 = vmatpush1.bf16.msra.mxu0 %v341
      %351 = vmatprep.subr.bf16.mxu0 0
      %352 = vmatpush1.bf16.msra.mxu0 %v342
      %353 = vmatprep.subr.bf16.mxu0 0
      %354 = vmatpush1.bf16.msra.mxu0 0
      %355 = vmatprep.subr.bf16.mxu0 0
      %356 = vmatpush1.bf16.msra.mxu0 0
      %357 = vmatprep.subr.bf16.mxu0 0
      %358 = vmatpush1.bf16.msra.mxu0 0
      %359 = vmatprep.subr.bf16.mxu0 0
      %360 = vmatpush1.bf16.msra.mxu0 0
      %361 = vmatprep.subr.bf16.mxu0 0
      %362 = vmatpush1.bf16.msra.mxu0 0
      %363 = vmatprep.subr.bf16.mxu0 0
      %364 = vmatpush1.bf16.msra.mxu0 0
      %365 = vmatprep.subr.bf16.mxu0 0
      %366 = vmatpush1.bf16.msra.mxu0 0
      %367 = vmatprep.subr.bf16.mxu0 0
      %368 = vmatpush1.bf16.msra.mxu0 0
      %369 = vmatprep.subr.bf16.mxu0 0
      %370 = vmatpush1.bf16.msra.mxu0 0
      %371 = vmatprep.subr.bf16.mxu0 0
      %372 = vmatpush1.bf16.msra.mxu0 0
      %373 = vmatprep.subr.bf16.mxu0 0
      %374 = vmatpush1.bf16.msra.mxu0 0
      %375 = vmatprep.subr.bf16.mxu0 0
      %376 = vmatpush1.bf16.msra.mxu0 0
      %377 = vmatprep.subr.bf16.mxu0 0
      %378 = vmatpush1.bf16.msra.mxu0 0
      %379 = vmatprep.subr.bf16.mxu0 0
      %380 = vmatpush1.bf16.msra.mxu0 0
      %381 = vmatprep.mubr.bf16.mxu0 0
      %382 = vmatmul.mubr.bf16.gmra.mrb[0].mxu0 %v347
      %v383 = vpop.f32.mrb[0].mxu0
      %v384 = vadd.f32 %v331, %v383
      %v385 = vpop.f32.mrb[0].mxu0
      %v386 = vpop.f32.mrb[0].mxu0
      %v387 = vpop.f32.mrb[0].mxu0
      %388 = vdwg.mxu0
      %v389 = vpack.c.bf16 %v326, %v326
      %390 = vrot.lane.b32.xlu0 %v341, 96
      %v391 = vpop.permute.xlu0 %390
      %392 = vrot.lane.b32.xlu0 %v342, 96
      %v393 = vpop.permute.xlu0 %392
      %396 = vrot.lane.b32.xlu0 %v331, 96
      %v397 = vpop.permute.xlu0 %396
      %v400 = vsel %vm345, %v389, 0
      %402 = vmatprep.subr.bf16.mxu0 0
      %403 = vmatpush1.bf16.msra.mxu0 %v391
      %404 = vmatprep.subr.bf16.mxu0 0
      %405 = vmatpush1.bf16.msra.mxu0 %v393
      %406 = vmatprep.subr.bf16.mxu0 0
      %407 = vmatpush1.bf16.msra.mxu0 0
      %408 = vmatprep.subr.bf16.mxu0 0
      %409 = vmatpush1.bf16.msra.mxu0 0
      %410 = vmatprep.subr.bf16.mxu0 0
      %411 = vmatpush1.bf16.msra.mxu0 0
      %412 = vmatprep.subr.bf16.mxu0 0
      %413 = vmatpush1.bf16.msra.mxu0 0
      %414 = vmatprep.subr.bf16.mxu0 0
      %415 = vmatpush1.bf16.msra.mxu0 0
      %416 = vmatprep.subr.bf16.mxu0 0
      %417 = vmatpush1.bf16.msra.mxu0 0
      %418 = vmatprep.subr.bf16.mxu0 0
      %419 = vmatpush1.bf16.msra.mxu0 0
      %420 = vmatprep.subr.bf16.mxu0 0
      %421 = vmatpush1.bf16.msra.mxu0 0
      %422 = vmatprep.subr.bf16.mxu0 0
      %423 = vmatpush1.bf16.msra.mxu0 0
      %424 = vmatprep.subr.bf16.mxu0 0
      %425 = vmatpush1.bf16.msra.mxu0 0
      %426 = vmatprep.subr.bf16.mxu0 0
      %427 = vmatpush1.bf16.msra.mxu0 0
      %428 = vmatprep.subr.bf16.mxu0 0
      %429 = vmatpush1.bf16.msra.mxu0 0
      %430 = vmatprep.subr.bf16.mxu0 0
      %431 = vmatpush1.bf16.msra.mxu0 0
      %432 = vmatprep.subr.bf16.mxu0 0
      %433 = vmatpush1.bf16.msra.mxu0 0
      %434 = vmatprep.mubr.bf16.mxu0 0
      %435 = vmatmul.mubr.bf16.gmra.mrb[0].mxu0 %v400
      %v436 = vpop.f32.mrb[0].mxu0
      %v437 = vadd.f32 %v397, %v436
      %v438 = vpop.f32.mrb[0].mxu0
      %v439 = vpop.f32.mrb[0].mxu0
      %v440 = vpop.f32.mrb[0].mxu0
      %441 = vdwg.mxu0
      %v442 = vpack.c.bf16 %v384, %v384
      %v443 = vpack.c.bf16 %v437, %v437
      %vm444 = vcmask 64512
      %v446 = vsel %vm444, %v442, 0
      %v449 = vsel %vm444, %v443, 0
      %451 = vmatprep.subr.bf16.mxu0 0
      %452 = vmatpush1.bf16.xpose.msra.mxu0 %v449
      %453 = vmatprep.subr.bf16.mxu0 0
      %454 = vmatpush1.bf16.xpose.msra.mxu0 0
      %455 = vmatprep.subr.bf16.mxu0 0
      %456 = vmatpush1.bf16.xpose.msra.mxu0 0
      %457 = vmatprep.subr.bf16.mxu0 0
      %458 = vmatpush1.bf16.xpose.msra.mxu0 0
      %459 = vmatprep.subr.bf16.mxu0 0
      %460 = vmatpush1.bf16.xpose.msra.mxu0 0
      %461 = vmatprep.subr.bf16.mxu0 0
      %462 = vmatpush1.bf16.xpose.msra.mxu0 0
      %463 = vmatprep.subr.bf16.mxu0 0
      %464 = vmatpush1.bf16.xpose.msra.mxu0 0
      %465 = vmatprep.subr.bf16.mxu0 0
      %466 = vmatpush1.bf16.xpose.msra.mxu0 0
      %467 = vmatprep.subr.bf16.mxu0 0
      %468 = vmatpush1.bf16.xpose.msra.mxu0 0
      %469 = vmatprep.subr.bf16.mxu0 0
      %470 = vmatpush1.bf16.xpose.msra.mxu0 0
      %471 = vmatprep.subr.bf16.mxu0 0
      %472 = vmatpush1.bf16.xpose.msra.mxu0 0
      %473 = vmatprep.subr.bf16.mxu0 0
      %474 = vmatpush1.bf16.xpose.msra.mxu0 0
      %475 = vmatprep.subr.bf16.mxu0 0
      %476 = vmatpush1.bf16.xpose.msra.mxu0 0
      %477 = vmatprep.subr.bf16.mxu0 0
      %478 = vmatpush1.bf16.xpose.msra.mxu0 0
      %479 = vmatprep.subr.bf16.mxu0 0
      %480 = vmatpush1.bf16.xpose.msra.mxu0 0
      %481 = vmatprep.subr.bf16.mxu0 0
      %482 = vmatpush1.bf16.xpose.msra.mxu0 0
      %483 = vmatprep.mubr.bf16.mxu0 0
      %484 = vmatmul.mubr.bf16.gmra.mrb[0].mxu0 %v446
      %v485 = vpop.f32.mrb[0].mxu0
      %v486 = vadd.f32 0.0, %v485
      %v487 = vpop.f32.mrb[0].mxu0
      %v488 = vpop.f32.mrb[0].mxu0
      %v489 = vpop.f32.mrb[0].mxu0
      %490 = vdwg.mxu0
      %v491 = vsel %vm444, %v486, -inf
      %492 = vmax.xlane.f32.xlu0 %v491
      %v493 = vpop.xlane.xlu0 %492
      %v494 = vsub.f32 %v486, %v493
      %v495 = vmul.f32 %v494, 1.442695
      %v496 = vpow.pop %v495
      %v497 = vsel %vm444, %v496, 0.0
      %498 = vadd.xlane.f32.xlu0 %v497
      %v499 = vpop.xlane.xlu0 %498
      %v500 = vrcp.pop %v499
      %v501 = vmul.f32 %v496, %v500
      %v502 = vpack.c.bf16 %v501, %v501
      %504 = vrot.lane.b32.xlu0 %v443, 96
      %v505 = vpop.permute.xlu0 %504
      %v507 = vsel %vm444, %v502, 0
      %vm509 = vcmask 1043456
      %v511 = vsel %vm509, %v505, 0
      %513 = vmatprep.subr.bf16.mxu0 0
      %514 = vmatpush1.bf16.msra.mxu0 %v511
      %515 = vmatprep.subr.bf16.mxu0 0
      %516 = vmatpush1.bf16.msra.mxu0 0
      %517 = vmatprep.subr.bf16.mxu0 0
      %518 = vmatpush1.bf16.msra.mxu0 0
      %519 = vmatprep.subr.bf16.mxu0 0
      %520 = vmatpush1.bf16.msra.mxu0 0
      %521 = vmatprep.subr.bf16.mxu0 0
      %522 = vmatpush1.bf16.msra.mxu0 0
      %523 = vmatprep.subr.bf16.mxu0 0
      %524 = vmatpush1.bf16.msra.mxu0 0
      %525 = vmatprep.subr.bf16.mxu0 0
      %526 = vmatpush1.bf16.msra.mxu0 0
      %527 = vmatprep.subr.bf16.mxu0 0
      %528 = vmatpush1.bf16.msra.mxu0 0
      %529 = vmatprep.subr.bf16.mxu0 0
      %530 = vmatpush1.bf16.msra.mxu0 0
      %531 = vmatprep.subr.bf16.mxu0 0
      %532 = vmatpush1.bf16.msra.mxu0 0
      %533 = vmatprep.subr.bf16.mxu0 0
      %534 = vmatpush1.bf16.msra.mxu0 0
      %535 = vmatprep.subr.bf16.mxu0 0
      %536 = vmatpush1.bf16.msra.mxu0 0
      %537 = vmatprep.subr.bf16.mxu0 0
      %538 = vmatpush1.bf16.msra.mxu0 0
      %539 = vmatprep.subr.bf16.mxu0 0
      %540 = vmatpush1.bf16.msra.mxu0 0
      %541 = vmatprep.subr.bf16.mxu0 0
      %542 = vmatpush1.bf16.msra.mxu0 0
      %543 = vmatprep.subr.bf16.mxu0 0
      %544 = vmatpush1.bf16.msra.mxu0 0
      %545 = vmatprep.mubr.bf16.mxu0 0
      %546 = vmatmul.mubr.bf16.gmra.mrb[0].mxu0 %v507
      %v547 = vpop.f32.mrb[0].mxu0
      %v548 = vadd.f32 0.0, %v547
      %v549 = vpop.f32.mrb[0].mxu0
      %v550 = vpop.f32.mrb[0].mxu0
      %v551 = vpop.f32.mrb[0].mxu0
      %552 = vdwg.mxu0
      %554 = vrot.lane.b32.xlu0 %v442, 120
      %v555 = vpop.permute.xlu0 %554
      %556 = vrot.lane.b32.xlu0 %v443, 120
      %v557 = vpop.permute.xlu0 %556
      %v559 = vsel %vm444, %v555, 0
      %v562 = vsel %vm444, %v557, 0
      %564 = vmatprep.subr.bf16.mxu0 0
      %565 = vmatpush1.bf16.xpose.msra.mxu0 %v562
      %566 = vmatprep.subr.bf16.mxu0 0
      %567 = vmatpush1.bf16.xpose.msra.mxu0 0
      %568 = vmatprep.subr.bf16.mxu0 0
      %569 = vmatpush1.bf16.xpose.msra.mxu0 0
      %570 = vmatprep.subr.bf16.mxu0 0
      %571 = vmatpush1.bf16.xpose.msra.mxu0 0
      %572 = vmatprep.subr.bf16.mxu0 0
      %573 = vmatpush1.bf16.xpose.msra.mxu0 0
      %574 = vmatprep.subr.bf16.mxu0 0
      %575 = vmatpush1.bf16.xpose.msra.mxu0 0
      %576 = vmatprep.subr.bf16.mxu0 0
      %577 = vmatpush1.bf16.xpose.msra.mxu0 0
      %578 = vmatprep.subr.bf16.mxu0 0
      %579 = vmatpush1.bf16.xpose.msra.mxu0 0
      %580 = vmatprep.subr.bf16.mxu0 0
      %581 = vmatpush1.bf16.xpose.msra.mxu0 0
      %582 = vmatprep.subr.bf16.mxu0 0
      %583 = vmatpush1.bf16.xpose.msra.mxu0 0
      %584 = vmatprep.subr.bf16.mxu0 0
      %585 = vmatpush1.bf16.xpose.msra.mxu0 0
      %586 = vmatprep.subr.bf16.mxu0 0
      %587 = vmatpush1.bf16.xpose.msra.mxu0 0
      %588 = vmatprep.subr.bf16.mxu0 0
      %589 = vmatpush1.bf16.xpose.msra.mxu0 0
      %590 = vmatprep.subr.bf16.mxu0 0
      %591 = vmatpush1.bf16.xpose.msra.mxu0 0
      %592 = vmatprep.subr.bf16.mxu0 0
      %593 = vmatpush1.bf16.xpose.msra.mxu0 0
      %594 = vmatprep.subr.bf16.mxu0 0
      %595 = vmatpush1.bf16.xpose.msra.mxu0 0
      %596 = vmatprep.mubr.bf16.mxu0 0
      %597 = vmatmul.mubr.bf16.gmra.mrb[0].mxu0 %v559
      %v598 = vpop.f32.mrb[0].mxu0
      %v599 = vadd.f32 0.0, %v598
      %v600 = vpop.f32.mrb[0].mxu0
      %v601 = vpop.f32.mrb[0].mxu0
      %v602 = vpop.f32.mrb[0].mxu0
      %603 = vdwg.mxu0
      %v604 = vsel %vm444, %v599, -inf
      %605 = vmax.xlane.f32.xlu0 %v604
      %v606 = vpop.xlane.xlu0 %605
      %v607 = vsub.f32 %v599, %v606
      %v608 = vmul.f32 %v607, 1.442695
      %v609 = vpow.pop %v608
      %v610 = vsel %vm444, %v609, 0.0
      %611 = vadd.xlane.f32.xlu0 %v610
      %v612 = vpop.xlane.xlu0 %611
      %v613 = vrcp.pop %v612
      %v614 = vmul.f32 %v609, %v613
      %v615 = vpack.c.bf16 %v614, %v614
      %616 = vrot.lane.b32.xlu0 %v443, 88
      %v617 = vpop.permute.xlu0 %616
      %v619 = vsel %vm444, %v615, 0
      %v622 = vsel %vm509, %v617, 0
      %624 = vmatprep.subr.bf16.mxu0 0
      %625 = vmatpush1.bf16.msra.mxu0 %v622
      %626 = vmatprep.subr.bf16.mxu0 0
      %627 = vmatpush1.bf16.msra.mxu0 0
      %628 = vmatprep.subr.bf16.mxu0 0
      %629 = vmatpush1.bf16.msra.mxu0 0
      %630 = vmatprep.subr.bf16.mxu0 0
      %631 = vmatpush1.bf16.msra.mxu0 0
      %632 = vmatprep.subr.bf16.mxu0 0
      %633 = vmatpush1.bf16.msra.mxu0 0
      %634 = vmatprep.subr.bf16.mxu0 0
      %635 = vmatpush1.bf16.msra.mxu0 0
      %636 = vmatprep.subr.bf16.mxu0 0
      %637 = vmatpush1.bf16.msra.mxu0 0
      %638 = vmatprep.subr.bf16.mxu0 0
      %639 = vmatpush1.bf16.msra.mxu0 0
      %640 = vmatprep.subr.bf16.mxu0 0
      %641 = vmatpush1.bf16.msra.mxu0 0
      %642 = vmatprep.subr.bf16.mxu0 0
      %643 = vmatpush1.bf16.msra.mxu0 0
      %644 = vmatprep.subr.bf16.mxu0 0
      %645 = vmatpush1.bf16.msra.mxu0 0
      %646 = vmatprep.subr.bf16.mxu0 0
      %647 = vmatpush1.bf16.msra.mxu0 0
      %648 = vmatprep.subr.bf16.mxu0 0
      %649 = vmatpush1.bf16.msra.mxu0 0
      %650 = vmatprep.subr.bf16.mxu0 0
      %651 = vmatpush1.bf16.msra.mxu0 0
      %652 = vmatprep.subr.bf16.mxu0 0
      %653 = vmatpush1.bf16.msra.mxu0 0
      %654 = vmatprep.subr.bf16.mxu0 0
      %655 = vmatpush1.bf16.msra.mxu0 0
      %656 = vmatprep.mubr.bf16.mxu0 0
      %657 = vmatmul.mubr.bf16.gmra.mrb[0].mxu0 %v619
      %v658 = vpop.f32.mrb[0].mxu0
      %v659 = vadd.f32 0.0, %v658
      %v660 = vpop.f32.mrb[0].mxu0
      %v661 = vpop.f32.mrb[0].mxu0
      %v662 = vpop.f32.mrb[0].mxu0
      %663 = vdwg.mxu0
      %664 = vrot.lane.b32.xlu0 %v442, 112
      %v665 = vpop.permute.xlu0 %664
      %666 = vrot.lane.b32.xlu0 %v443, 112
      %v667 = vpop.permute.xlu0 %666
      %v669 = vsel %vm444, %v665, 0
      %v672 = vsel %vm444, %v667, 0
      %674 = vmatprep.subr.bf16.mxu0 0
      %675 = vmatpush1.bf16.xpose.msra.mxu0 %v672
      %676 = vmatprep.subr.bf16.mxu0 0
      %677 = vmatpush1.bf16.xpose.msra.mxu0 0
      %678 = vmatprep.subr.bf16.mxu0 0
      %679 = vmatpush1.bf16.xpose.msra.mxu0 0
      %680 = vmatprep.subr.bf16.mxu0 0
      %681 = vmatpush1.bf16.xpose.msra.mxu0 0
      %682 = vmatprep.subr.bf16.mxu0 0
      %683 = vmatpush1.bf16.xpose.msra.mxu0 0
      %684 = vmatprep.subr.bf16.mxu0 0
      %685 = vmatpush1.bf16.xpose.msra.mxu0 0
      %686 = vmatprep.subr.bf16.mxu0 0
      %687 = vmatpush1.bf16.xpose.msra.mxu0 0
      %688 = vmatprep.subr.bf16.mxu0 0
      %689 = vmatpush1.bf16.xpose.msra.mxu0 0
      %690 = vmatprep.subr.bf16.mxu0 0
      %691 = vmatpush1.bf16.xpose.msra.mxu0 0
      %692 = vmatprep.subr.bf16.mxu0 0
      %693 = vmatpush1.bf16.xpose.msra.mxu0 0
      %694 = vmatprep.subr.bf16.mxu0 0
      %695 = vmatpush1.bf16.xpose.msra.mxu0 0
      %696 = vmatprep.subr.bf16.mxu0 0
      %697 = vmatpush1.bf16.xpose.msra.mxu0 0
      %698 = vmatprep.subr.bf16.mxu0 0
      %699 = vmatpush1.bf16.xpose.msra.mxu0 0
      %700 = vmatprep.subr.bf16.mxu0 0
      %701 = vmatpush1.bf16.xpose.msra.mxu0 0
      %702 = vmatprep.subr.bf16.mxu0 0
      %703 = vmatpush1.bf16.xpose.msra.mxu0 0
      %704 = vmatprep.subr.bf16.mxu0 0
      %705 = vmatpush1.bf16.xpose.msra.mxu0 0
      %706 = vmatprep.mubr.bf16.mxu0 0
      %707 = vmatmul.mubr.bf16.gmra.mrb[0].mxu0 %v669
      %v708 = vpop.f32.mrb[0].mxu0
      %v709 = vadd.f32 0.0, %v708
      %v710 = vpop.f32.mrb[0].mxu0
      %v711 = vpop.f32.mrb[0].mxu0
      %v712 = vpop.f32.mrb[0].mxu0
      %713 = vdwg.mxu0
      %v714 = vsel %vm444, %v709, -inf
      %715 = vmax.xlane.f32.xlu0 %v714
      %v716 = vpop.xlane.xlu0 %715
      %v717 = vsub.f32 %v709, %v716
      %v718 = vmul.f32 %v717, 1.442695
      %v719 = vpow.pop %v718
      %v720 = vsel %vm444, %v719, 0.0
      %721 = vadd.xlane.f32.xlu0 %v720
      %v722 = vpop.xlane.xlu0 %721
      %v723 = vrcp.pop %v722
      %v724 = vmul.f32 %v719, %v723
      %v725 = vpack.c.bf16 %v724, %v724
      %726 = vrot.lane.b32.xlu0 %v443, 80
      %v727 = vpop.permute.xlu0 %726
      %v729 = vsel %vm444, %v725, 0
      %v732 = vsel %vm509, %v727, 0
      %734 = vmatprep.subr.bf16.mxu0 0
      %735 = vmatpush1.bf16.msra.mxu0 %v732
      %736 = vmatprep.subr.bf16.mxu0 0
      %737 = vmatpush1.bf16.msra.mxu0 0
      %738 = vmatprep.subr.bf16.mxu0 0
      %739 = vmatpush1.bf16.msra.mxu0 0
      %740 = vmatprep.subr.bf16.mxu0 0
      %741 = vmatpush1.bf16.msra.mxu0 0
      %742 = vmatprep.subr.bf16.mxu0 0
      %743 = vmatpush1.bf16.msra.mxu0 0
      %744 = vmatprep.subr.bf16.mxu0 0
      %745 = vmatpush1.bf16.msra.mxu0 0
      %746 = vmatprep.subr.bf16.mxu0 0
      %747 = vmatpush1.bf16.msra.mxu0 0
      %748 = vmatprep.subr.bf16.mxu0 0
      %749 = vmatpush1.bf16.msra.mxu0 0
      %750 = vmatprep.subr.bf16.mxu0 0
      %751 = vmatpush1.bf16.msra.mxu0 0
      %752 = vmatprep.subr.bf16.mxu0 0
      %753 = vmatpush1.bf16.msra.mxu0 0
      %754 = vmatprep.subr.bf16.mxu0 0
      %755 = vmatpush1.bf16.msra.mxu0 0
      %756 = vmatprep.subr.bf16.mxu0 0
      %757 = vmatpush1.bf16.msra.mxu0 0
      %758 = vmatprep.subr.bf16.mxu0 0
      %759 = vmatpush1.bf16.msra.mxu0 0
      %760 = vmatprep.subr.bf16.mxu0 0
      %761 = vmatpush1.bf16.msra.mxu0 0
      %762 = vmatprep.subr.bf16.mxu0 0
      %763 = vmatpush1.bf16.msra.mxu0 0
      %764 = vmatprep.subr.bf16.mxu0 0
      %765 = vmatpush1.bf16.msra.mxu0 0
      %766 = vmatprep.mubr.bf16.mxu0 0
      %767 = vmatmul.mubr.bf16.gmra.mrb[0].mxu0 %v729
      %v768 = vpop.f32.mrb[0].mxu0
      %v769 = vadd.f32 0.0, %v768
      %v770 = vpop.f32.mrb[0].mxu0
      %v771 = vpop.f32.mrb[0].mxu0
      %v772 = vpop.f32.mrb[0].mxu0
      %773 = vdwg.mxu0
      %774 = vrot.lane.b32.xlu0 %v442, 104
      %v775 = vpop.permute.xlu0 %774
      %776 = vrot.lane.b32.xlu0 %v443, 104
      %v777 = vpop.permute.xlu0 %776
      %v779 = vsel %vm444, %v775, 0
      %v782 = vsel %vm444, %v777, 0
      %784 = vmatprep.subr.bf16.mxu0 0
      %785 = vmatpush1.bf16.xpose.msra.mxu0 %v782
      %786 = vmatprep.subr.bf16.mxu0 0
      %787 = vmatpush1.bf16.xpose.msra.mxu0 0
      %788 = vmatprep.subr.bf16.mxu0 0
      %789 = vmatpush1.bf16.xpose.msra.mxu0 0
      %790 = vmatprep.subr.bf16.mxu0 0
      %791 = vmatpush1.bf16.xpose.msra.mxu0 0
      %792 = vmatprep.subr.bf16.mxu0 0
      %793 = vmatpush1.bf16.xpose.msra.mxu0 0
      %794 = vmatprep.subr.bf16.mxu0 0
      %795 = vmatpush1.bf16.xpose.msra.mxu0 0
      %796 = vmatprep.subr.bf16.mxu0 0
      %797 = vmatpush1.bf16.xpose.msra.mxu0 0
      %798 = vmatprep.subr.bf16.mxu0 0
      %799 = vmatpush1.bf16.xpose.msra.mxu0 0
      %800 = vmatprep.subr.bf16.mxu0 0
      %801 = vmatpush1.bf16.xpose.msra.mxu0 0
      %802 = vmatprep.subr.bf16.mxu0 0
      %803 = vmatpush1.bf16.xpose.msra.mxu0 0
      %804 = vmatprep.subr.bf16.mxu0 0
      %805 = vmatpush1.bf16.xpose.msra.mxu0 0
      %806 = vmatprep.subr.bf16.mxu0 0
      %807 = vmatpush1.bf16.xpose.msra.mxu0 0
      %808 = vmatprep.subr.bf16.mxu0 0
      %809 = vmatpush1.bf16.xpose.msra.mxu0 0
      %810 = vmatprep.subr.bf16.mxu0 0
      %811 = vmatpush1.bf16.xpose.msra.mxu0 0
      %812 = vmatprep.subr.bf16.mxu0 0
      %813 = vmatpush1.bf16.xpose.msra.mxu0 0
      %814 = vmatprep.subr.bf16.mxu0 0
      %815 = vmatpush1.bf16.xpose.msra.mxu0 0
      %816 = vmatprep.mubr.bf16.mxu0 0
      %817 = vmatmul.mubr.bf16.gmra.mrb[0].mxu0 %v779
      %v818 = vpop.f32.mrb[0].mxu0
      %v819 = vadd.f32 0.0, %v818
      %v820 = vpop.f32.mrb[0].mxu0
      %v821 = vpop.f32.mrb[0].mxu0
      %v822 = vpop.f32.mrb[0].mxu0
      %823 = vdwg.mxu0
      %v824 = vsel %vm444, %v819, -inf
      %825 = vmax.xlane.f32.xlu0 %v824
      %v826 = vpop.xlane.xlu0 %825
      %v827 = vsub.f32 %v819, %v826
      %v828 = vmul.f32 %v827, 1.442695
      %v829 = vpow.pop %v828
      %v830 = vsel %vm444, %v829, 0.0
      %831 = vadd.xlane.f32.xlu0 %v830
      %v832 = vpop.xlane.xlu0 %831
      %v833 = vrcp.pop %v832
      %v834 = vmul.f32 %v829, %v833
      %v835 = vpack.c.bf16 %v834, %v834
      %836 = vrot.lane.b32.xlu0 %v443, 72
      %v837 = vpop.permute.xlu0 %836
      %v839 = vsel %vm444, %v835, 0
      %v842 = vsel %vm509, %v837, 0
      %844 = vmatprep.subr.bf16.mxu0 0
      %845 = vmatpush1.bf16.msra.mxu0 %v842
      %846 = vmatprep.subr.bf16.mxu0 0
      %847 = vmatpush1.bf16.msra.mxu0 0
      %848 = vmatprep.subr.bf16.mxu0 0
      %849 = vmatpush1.bf16.msra.mxu0 0
      %850 = vmatprep.subr.bf16.mxu0 0
      %851 = vmatpush1.bf16.msra.mxu0 0
      %852 = vmatprep.subr.bf16.mxu0 0
      %853 = vmatpush1.bf16.msra.mxu0 0
      %854 = vmatprep.subr.bf16.mxu0 0
      %855 = vmatpush1.bf16.msra.mxu0 0
      %856 = vmatprep.subr.bf16.mxu0 0
      %857 = vmatpush1.bf16.msra.mxu0 0
      %858 = vmatprep.subr.bf16.mxu0 0
      %859 = vmatpush1.bf16.msra.mxu0 0
      %860 = vmatprep.subr.bf16.mxu0 0
      %861 = vmatpush1.bf16.msra.mxu0 0
      %862 = vmatprep.subr.bf16.mxu0 0
      %863 = vmatpush1.bf16.msra.mxu0 0
      %864 = vmatprep.subr.bf16.mxu0 0
      %865 = vmatpush1.bf16.msra.mxu0 0
      %866 = vmatprep.subr.bf16.mxu0 0
      %867 = vmatpush1.bf16.msra.mxu0 0
      %868 = vmatprep.subr.bf16.mxu0 0
      %869 = vmatpush1.bf16.msra.mxu0 0
      %870 = vmatprep.subr.bf16.mxu0 0
      %871 = vmatpush1.bf16.msra.mxu0 0
      %872 = vmatprep.subr.bf16.mxu0 0
      %873 = vmatpush1.bf16.msra.mxu0 0
      %874 = vmatprep.subr.bf16.mxu0 0
      %875 = vmatpush1.bf16.msra.mxu0 0
      %876 = vmatprep.mubr.bf16.mxu0 0
      %877 = vmatmul.mubr.bf16.gmra.mrb[0].mxu0 %v839
      %v878 = vpop.f32.mrb[0].mxu0
      %v879 = vadd.f32 0.0, %v878
      %v880 = vpop.f32.mrb[0].mxu0
      %v881 = vpop.f32.mrb[0].mxu0
      %v882 = vpop.f32.mrb[0].mxu0
      %883 = vdwg.mxu0
      %885 = vrot.lane.b32.xlu0 %v659, 8
      %v886 = vpop.permute.xlu0 %885
      %889 = vrot.lane.b32.xlu0 %v769, 16
      %v890 = vpop.permute.xlu0 %889
      %893 = vrot.lane.b32.xlu0 %v879, 24
      %v894 = vpop.permute.xlu0 %893
      %v896 = vsel %vm444, %v548, %v886
      %vm897 = vcmask 130048
      %v898 = vsel %vm897, %v896, %v890
      %vm899 = vcmask 195584
      %v900 = vsel %vm899, %v898, %v894
      %v901 = vpack.c.bf16 %v900, %v900
      %v902 = vld [vmem:[%s4] sm:$0xf]
      %v903 = vld [vmem:[%s4 + $0x4] sm:$0xf]
      %v904 = vld [vmem:[%s4 + $0x8] sm:$0xf]
      %v905 = vld [vmem:[%s4 + $0xc] sm:$0xf]
      %v906 = vld [vmem:[%s5] sm:$0x1]
      %v908 = vlaneseq
      %v909 = vshrl.u32 %v908, 7
      %v910 = vsub.s32 0, %v909
      %v911 = vrot.slane %v906, %v910
      %v917 = vunpack.c.l.b16 %v902
      %v918 = vunpack.c.l.b16 %v903
      %v919 = vunpack.c.l.b16 %v904
      %v920 = vunpack.c.l.b16 %v905
      %v921 = vpack.c.b16 %v918, %v917
      %v922 = vpack.c.b16 %v920, %v919
      %v926 = vsel %vm345, %v901, 0
      %928 = vmatprep.subr.bf16.mxu0 0
      %929 = vmatpush1.bf16.msra.mxu0 %v921
      %930 = vmatprep.subr.bf16.mxu0 0
      %931 = vmatpush1.bf16.msra.mxu0 %v922
      %932 = vmatprep.subr.bf16.mxu0 0
      %933 = vmatpush1.bf16.msra.mxu0 0
      %934 = vmatprep.subr.bf16.mxu0 0
      %935 = vmatpush1.bf16.msra.mxu0 0
      %936 = vmatprep.subr.bf16.mxu0 0
      %937 = vmatpush1.bf16.msra.mxu0 0
      %938 = vmatprep.subr.bf16.mxu0 0
      %939 = vmatpush1.bf16.msra.mxu0 0
      %940 = vmatprep.subr.bf16.mxu0 0
      %941 = vmatpush1.bf16.msra.mxu0 0
      %942 = vmatprep.subr.bf16.mxu0 0
      %943 = vmatpush1.bf16.msra.mxu0 0
      %944 = vmatprep.subr.bf16.mxu0 0
      %945 = vmatpush1.bf16.msra.mxu0 0
      %946 = vmatprep.subr.bf16.mxu0 0
      %947 = vmatpush1.bf16.msra.mxu0 0
      %948 = vmatprep.subr.bf16.mxu0 0
      %949 = vmatpush1.bf16.msra.mxu0 0
      %950 = vmatprep.subr.bf16.mxu0 0
      %951 = vmatpush1.bf16.msra.mxu0 0
      %952 = vmatprep.subr.bf16.mxu0 0
      %953 = vmatpush1.bf16.msra.mxu0 0
      %954 = vmatprep.subr.bf16.mxu0 0
      %955 = vmatpush1.bf16.msra.mxu0 0
      %956 = vmatprep.subr.bf16.mxu0 0
      %957 = vmatpush1.bf16.msra.mxu0 0
      %958 = vmatprep.subr.bf16.mxu0 0
      %959 = vmatpush1.bf16.msra.mxu0 0
      %960 = vmatprep.mubr.bf16.mxu0 0
      %961 = vmatmul.mubr.bf16.gmra.mrb[0].mxu0 %v926
      %v962 = vpop.f32.mrb[0].mxu0
      %v963 = vadd.f32 %v911, %v962
      %v964 = vpop.f32.mrb[0].mxu0
      %v965 = vpop.f32.mrb[0].mxu0
      %v966 = vpop.f32.mrb[0].mxu0
      %967 = vdwg.mxu0
      %v968 = vadd.f32 %v319, %v963
      %v969 = vsel %vm345, %v968, 0.0
      %970 = vadd.xlane.f32.xlu0 %v969
      %v971 = vpop.xlane.xlu0 %970
      %v972 = vrcp.pop 32.0
      %v973 = vmul.f32 %v971, %v972
      %v974 = vsub.f32 %v968, %v973
      %v975 = vmul.f32 %v974, %v974
      %v976 = vsel %vm345, %v975, 0.0
      %977 = vadd.xlane.f32.xlu0 %v976
      %v978 = vpop.xlane.xlu0 %977
      %v979 = vmul.f32 %v978, %v972
      %v980 = vadd.f32 %v979, 1e-05
      %v981 = vrsqrt.pop %v980
      %v982 = vmul.f32 %v974, %v981
      %v983 = vld [vmem:[%s6] sm:$0x1]
      %v985 = vlaneseq
      %v986 = vshrl.u32 %v985, 7
      %v987 = vsub.s32 0, %v986
      %v988 = vrot.slane %v983, %v987
      %v990 = vmul.f32 %v982, %v988
      %v991 = vld [vmem:[%s7] sm:$0x1]
      %v993 = vlaneseq
      %v994 = vshrl.u32 %v993, 7
      %v995 = vsub.s32 0, %v994
      %v996 = vrot.slane %v991, %v995
      %v998 = vadd.f32 %v990, %v996
      %999 = vst.msk [vmem:[%s317] sm:$0xff] %vm345, %v998
      %p1000 = scmp.lt.s32.totalorder %s19, 1
      %s1001 = scalar_select %p1000, %s19, 1
      %s1002 = smul.addr %s1001, 8
      %s1003 = scalar_lea.vmem %s8, %s1002
      // Predicated region
      $region53: #{decoder_forward.8} parent=51 // pred_check
        %p1004 = pneg %p215
      $region54: #{decoder_forward.8} parent=51 // pred_check_branch
        %1006 = sbr.rel (%p1004) target = $region56
      $region55: #{decoder_forward.8} parent=51 // pred_region
        _
      $region56: #{decoder_forward.8} parent=51 // pred_fallthru
        _
    $region52: #{decoder_forward.8} parent=5 // pred_fallthru
      _
    %p1007 = scmp.le.s32.totalorder 2, %s14
    // Predicated region
    $region57: #{decoder_forward.8} parent=5 // pred_check
      %p1008 = pneg %p1007
    $region58: #{decoder_forward.8} parent=5 // pred_check_branch
      %1010 = sbr.rel (%p1008) target = $region60
    $region59: #{decoder_forward.8} parent=5 // pred_region
      %s1011 = ssub.s32 %s14, 2
      // Predicated region
      $region61: #{decoder_forward.8} parent=59 // pred_check
        %p1012 = pneg %p221
      $region62: #{decoder_forward.8} parent=59 // pred_check_branch
        %1014 = sbr.rel (%p1012) target = $region64
      $region63: #{decoder_forward.8} parent=59 // pred_region
        %p1015 = scmp.lt.s32.totalorder %s20, 1
        %s1016 = scalar_select %p1015, %s20, 1
        %s1017 = smul.addr %s1016, 8
        %s1018 = scalar_lea.vmem %s8, %s1017
      $region64: #{decoder_forward.8} parent=59 // pred_fallthru
        _
    $region60: #{decoder_forward.8} parent=5 // pred_fallthru
      _
  $region6: #{decoder_forward.8} parent=0 // loop_footer
    %s18 = sadd.s32 1, %s14
  $region7: #{decoder_forward.8} parent=0 // loop_footer_branch
    %13 = sbr.rel target = $region3
  $region8: #{decoder_forward.8} parent=0 // loop_exit
    _

// kernel: decoder_forward.13
$region0: #{decoder_forward.13}
  #allocation0 [shape = 'u32[]', space=smem, size = 0x4, offset = 0x4, fixed_abs, tag = 'smem constant byte address 0x4 - core index']
  #allocation1 [shape = 'u32[144,128]{1,0:T(1,128)}', space=vmem, size = 0x12000, scoped, tag = 'internal scratch']
  %s0 = inlined_call_operand.vmem [shape: f32[16,32], index: 0, kind: input, shape index: {}]
  %s1 = inlined_call_operand.vmem [shape: bf16[32,64], index: 1, kind: input, shape index: {}]
  %s2 = inlined_call_operand.vmem [shape: f32[1,64], index: 2, kind: input, shape index: {}]
  %s3 = inlined_call_operand.vmem [shape: f32[16,64], index: 3, kind: output, shape index: {}]
  %s4 = sld [smem:[#allocation0]]
  $region22: #{decoder_forward.13} parent=0
    _
  %s6 = ssub.s32 1, %s4
  %s7 = scalar_select 0, %s6, %s4
  // Predicated region
  $region2: #{decoder_forward.13} parent=0 // pred_check
    _
  $region3: #{decoder_forward.13} parent=0 // pred_check_branch
    %9 = sbr.rel (0) target = $region5
  $region4: #{decoder_forward.13} parent=0 // pred_region
    _
  $region5: #{decoder_forward.13} parent=0 // pred_fallthru
    _
  // Predicated region
  $region6: #{decoder_forward.13} parent=0 // pred_check
    _
  $region7: #{decoder_forward.13} parent=0 // pred_check_branch
    %11 = sbr.rel (0) target = $region9
  $region8: #{decoder_forward.13} parent=0 // pred_region
    _
  $region9: #{decoder_forward.13} parent=0 // pred_fallthru
    _
  // Predicated region
  $region10: #{decoder_forward.13} parent=0 // pred_check
    _
  $region11: #{decoder_forward.13} parent=0 // pred_check_branch
    %13 = sbr.rel (0) target = $region13
  $region12: #{decoder_forward.13} parent=0 // pred_region
    _
  $region13: #{decoder_forward.13} parent=0 // pred_fallthru
    _
  %v15 = vld [vmem:[%s0] sm:$0xff]
  %v16 = vld [vmem:[%s0 + $0x8] sm:$0xff]
  %v17 = vpack.c.bf16 %v16, %v15
  %v18 = vld [vmem:[%s1] sm:$0xf]
  %v19 = vld [vmem:[%s1 + $0x4] sm:$0xf]
  %v20 = vld [vmem:[%s1 + $0x8] sm:$0xf]
  %v21 = vld [vmem:[%s1 + $0xc] sm:$0xf]
  %v22 = vld [vmem:[%s2] sm:$0x1]
  %v24 = vlaneseq
  %v25 = vshrl.u32 %v24, 7
  %v26 = vsub.s32 0, %v25
  %v27 = vrot.slane %v22, %v26
  %v33 = vunpack.c.l.b16 %v18
  %v34 = vunpack.c.l.b16 %v19
  %v35 = vunpack.c.l.b16 %v20
  %v36 = vunpack.c.l.b16 %v21
  %v37 = vpack.c.b16 %v34, %v33
  %v38 = vpack.c.b16 %v36, %v35
  %vm41 = vcmask 261120
  %v43 = vsel %vm41, %v17, 0
  %45 = vmatprep.subr.bf16.mxu0 0
  %46 = vmatpush1.bf16.msra.mxu0 %v37
  %47 = vmatprep.subr.bf16.mxu0 0
  %48 = vmatpush1.bf16.msra.mxu0 %v38
  %49 = vmatprep.subr.bf16.mxu0 0
  %50 = vmatpush1.bf16.msra.mxu0 0
  %51 = vmatprep.subr.bf16.mxu0 0
  %52 = vmatpush1.bf16.msra.mxu0 0
  %53 = vmatprep.subr.bf16.mxu0 0
  %54 = vmatpush1.bf16.msra.mxu0 0
  %55 = vmatprep.subr.bf16.mxu0 0
  %56 = vmatpush1.bf16.msra.mxu0 0
  %57 = vmatprep.subr.bf16.mxu0 0
  %58 = vmatpush1.bf16.msra.mxu0 0
  %59 = vmatprep.subr.bf16.mxu0 0
  %60 = vmatpush1.bf16.msra.mxu0 0
  %61 = vmatprep.subr.bf16.mxu0 0
  %62 = vmatpush1.bf16.msra.mxu0 0
  %63 = vmatprep.subr.bf16.mxu0 0
  %64 = vmatpush1.bf16.msra.mxu0 0
  %65 = vmatprep.subr.bf16.mxu0 0
  %66 = vmatpush1.bf16.msra.mxu0 0
  %67 = vmatprep.subr.bf16.mxu0 0
  %68 = vmatpush1.bf16.msra.mxu0 0
  %69 = vmatprep.subr.bf16.mxu0 0
  %70 = vmatpush1.bf16.msra.mxu0 0
  %71 = vmatprep.subr.bf16.mxu0 0
  %72 = vmatpush1.bf16.msra.mxu0 0
  %73 = vmatprep.subr.bf16.mxu0 0
  %74 = vmatpush1.bf16.msra.mxu0 0
  %75 = vmatprep.subr.bf16.mxu0 0
  %76 = vmatpush1.bf16.msra.mxu0 0
  %77 = vmatprep.mubr.bf16.mxu0 0
  %78 = vmatmul.mubr.bf16.gmra.mrb[0].mxu0 %v43
  %v79 = vpop.f32.mrb[0].mxu0
  %v80 = vadd.f32 %v27, %v79
  %v81 = vpop.f32.mrb[0].mxu0
  %v82 = vpop.f32.mrb[0].mxu0
  %v83 = vadd.f32 %v27, %v82
  %v84 = vpop.f32.mrb[0].mxu0
  %85 = vdwg.mxu0
  %vm86 = vcmask 523264
  %87 = vst.msk [vmem:[%s3] sm:$0xff] %vm86, %v80
  %88 = vst.msk [vmem:[%s3 + $0x8] sm:$0xff] %vm86, %v83
  // Predicated region
  $region14: #{decoder_forward.13} parent=0 // pred_check
    _
  $region15: #{decoder_forward.13} parent=0 // pred_check_branch
    %90 = sbr.rel (0) target = $region17
  $region16: #{decoder_forward.13} parent=0 // pred_region
    _
  $region17: #{decoder_forward.13} parent=0 // pred_fallthru
    _
  // Predicated region
  $region18: #{decoder_forward.13} parent=0 // pred_check
    _
  $region19: #{decoder_forward.13} parent=0 // pred_check_branch
    %92 = sbr.rel (0) target = $region21
  $region20: #{decoder_forward.13} parent=0 // pred_region
    _
  $region21: #{decoder_forward.13} parent=0 // pred_fallthru
    _

// kernel: decoder_forward.9
$region0: #{decoder_forward.9}
  #allocation0 [shape = 'u32[]', space=smem, size = 0x4, offset = 0x4, fixed_abs, tag = 'smem constant byte address 0x4 - core index']
  #allocation1 [shape = 'u32[144,128]{1,0:T(1,128)}', space=vmem, size = 0x12000, scoped, tag = 'internal scratch']
  %s0 = inlined_call_operand.vmem [shape: f32[16,32], index: 0, kind: input, shape index: {}]
  %s1 = inlined_call_operand.vmem [shape: bf16[32,2048], index: 1, kind: input, shape index: {}]
  %s2 = inlined_call_operand.vmem [shape: f32[1,2048], index: 2, kind: input, shape index: {}]
  %s3 = inlined_call_operand.vmem [shape: bf16[2048,32], index: 3, kind: input, shape index: {}]
  %s4 = inlined_call_operand.vmem [shape: f32[1,32], index: 4, kind: input, shape index: {}]
  %s5 = inlined_call_operand.vmem [shape: f32[1,32], index: 5, kind: input, shape index: {}]
  %s6 = inlined_call_operand.vmem [shape: f32[1,32], index: 6, kind: input, shape index: {}]
  %s7 = inlined_call_operand.vmem [shape: f32[16,32], index: 7, kind: output, shape index: {}]
  %s8 = sld [smem:[#allocation0]]
  $region38: #{decoder_forward.9} parent=0
    _
  %s10 = ssub.s32 1, %s8
  %s11 = scalar_select 0, %s10, %s8
  // Predicated region
  $region2: #{decoder_forward.9} parent=0 // pred_check
    _
  $region3: #{decoder_forward.9} parent=0 // pred_check_branch
    %13 = sbr.rel (0) target = $region5
  $region4: #{decoder_forward.9} parent=0 // pred_region
    _
  $region5: #{decoder_forward.9} parent=0 // pred_fallthru
    _
  // Predicated region
  $region6: #{decoder_forward.9} parent=0 // pred_check
    _
  $region7: #{decoder_forward.9} parent=0 // pred_check_branch
    %15 = sbr.rel (0) target = $region9
  $region8: #{decoder_forward.9} parent=0 // pred_region
    _
  $region9: #{decoder_forward.9} parent=0 // pred_fallthru
    _
  // Predicated region
  $region10: #{decoder_forward.9} parent=0 // pred_check
    _
  $region11: #{decoder_forward.9} parent=0 // pred_check_branch
    %17 = sbr.rel (0) target = $region13
  $region12: #{decoder_forward.9} parent=0 // pred_region
    _
  $region13: #{decoder_forward.9} parent=0 // pred_fallthru
    _
  // Predicated region
  $region14: #{decoder_forward.9} parent=0 // pred_check
    _
  $region15: #{decoder_forward.9} parent=0 // pred_check_branch
    %19 = sbr.rel (0) target = $region17
  $region16: #{decoder_forward.9} parent=0 // pred_region
    _
  $region17: #{decoder_forward.9} parent=0 // pred_fallthru
    _
  // Predicated region
  $region18: #{decoder_forward.9} parent=0 // pred_check
    _
  $region19: #{decoder_forward.9} parent=0 // pred_check_branch
    %21 = sbr.rel (0) target = $region21
  $region20: #{decoder_forward.9} parent=0 // pred_region
    _
  $region21: #{decoder_forward.9} parent=0 // pred_fallthru
    _
  // Predicated region
  $region22: #{decoder_forward.9} parent=0 // pred_check
    _
  $region23: #{decoder_forward.9} parent=0 // pred_check_branch
    %23 = sbr.rel (0) target = $region25
  $region24: #{decoder_forward.9} parent=0 // pred_region
    _
  $region25: #{decoder_forward.9} parent=0 // pred_fallthru
    _
  // Predicated region
  $region26: #{decoder_forward.9} parent=0 // pred_check
    _
  $region27: #{decoder_forward.9} parent=0 // pred_check_branch
    %25 = sbr.rel (0) target = $region29
  $region28: #{decoder_forward.9} parent=0 // pred_region
    _
  $region29: #{decoder_forward.9} parent=0 // pred_fallthru
    _
  %v27 = vld [vmem:[%s0] sm:$0xff]
  %v28 = vld [vmem:[%s0 + $0x8] sm:$0xff]
  %v29 = vpack.c.bf16 %v28, %v27
  %v30 = vld [vmem:[%s1] sm:$0xff]
  %v31 = vld [vmem:[%s1 + $0x8] sm:$0xff]
  %v32 = vld [vmem:[%s1 + $0x10] sm:$0xff]
  %v33 = vld [vmem:[%s1 + $0x18] sm:$0xff]
  %v34 = vld [vmem:[%s1 + $0x20] sm:$0xff]
  %v35 = vld [vmem:[%s1 + $0x28] sm:$0xff]
  %v36 = vld [vmem:[%s1 + $0x30] sm:$0xff]
  %v37 = vld [vmem:[%s1 + $0x38] sm:$0xff]
  %v38 = vld [vmem:[%s1 + $0x40] sm:$0xff]
  %v39 = vld [vmem:[%s1 + $0x48] sm:$0xff]
  %v40 = vld [vmem:[%s1 + $0x50] sm:$0xff]
  %v41 = vld [vmem:[%s1 + $0x58] sm:$0xff]
  %v42 = vld [vmem:[%s1 + $0x60] sm:$0xff]
  %v43 = vld [vmem:[%s1 + $0x68] sm:$0xff]
  %v44 = vld [vmem:[%s1 + $0x70] sm:$0xff]
  %v45 = vld [vmem:[%s1 + $0x78] sm:$0xff]
  %v46 = vld [vmem:[%s1 + $0x80] sm:$0xff]
  %v47 = vld [vmem:[%s1 + $0x88] sm:$0xff]
  %v48 = vld [vmem:[%s1 + $0x90] sm:$0xff]
  %v49 = vld [vmem:[%s1 + $0x98] sm:$0xff]
  %v50 = vld [vmem:[%s1 + $0xa0] sm:$0xff]
  %v51 = vld [vmem:[%s1 + $0xa8] sm:$0xff]
  %v52 = vld [vmem:[%s1 + $0xb0] sm:$0xff]
  %v53 = vld [vmem:[%s1 + $0xb8] sm:$0xff]
  %v54 = vld [vmem:[%s1 + $0xc0] sm:$0xff]
  %v55 = vld [vmem:[%s1 + $0xc8] sm:$0xff]
  %v56 = vld [vmem:[%s1 + $0xd0] sm:$0xff]
  %v57 = vld [vmem:[%s1 + $0xd8] sm:$0xff]
  %v58 = vld [vmem:[%s1 + $0xe0] sm:$0xff]
  %v59 = vld [vmem:[%s1 + $0xe8] sm:$0xff]
  %v60 = vld [vmem:[%s1 + $0xf0] sm:$0xff]
  %v61 = vld [vmem:[%s1 + $0xf8] sm:$0xff]
  %v62 = vld [vmem:[%s2] sm:$0xff]
  %v63 = vld [vmem:[%s2 + $0x8] sm:$0xff]
  %v66 = vlaneseq
  %v67 = vshrl.u32 %v66, 7
  %v68 = vsub.s32 0, %v67
  %v69 = vrot.slane %v62, %v68
  %v70 = vlaneseq
  %v71 = vshrl.u32 %v70, 7
  %v72 = vsub.s32 1, %v71
  %v73 = vrot.slane %v62, %v72
  %v74 = vlaneseq
  %v75 = vshrl.u32 %v74, 7
  %v76 = vsub.s32 2, %v75
  %v77 = vrot.slane %v62, %v76
  %v78 = vlaneseq
  %v79 = vshrl.u32 %v78, 7
  %v80 = vsub.s32 3, %v79
  %v81 = vrot.slane %v62, %v80
  %v82 = vlaneseq
  %v83 = vshrl.u32 %v82, 7
  %v84 = vsub.s32 4, %v83
  %v85 = vrot.slane %v62, %v84
  %v86 = vlaneseq
  %v87 = vshrl.u32 %v86, 7
  %v88 = vsub.s32 5, %v87
  %v89 = vrot.slane %v62, %v88
  %v90 = vlaneseq
  %v91 = vshrl.u32 %v90, 7
  %v92 = vsub.s32 6, %v91
  %v93 = vrot.slane %v62, %v92
  %v94 = vlaneseq
  %v95 = vshrl.u32 %v94, 7
  %v96 = vsub.s32 7, %v95
  %v97 = vrot.slane %v62, %v96
  %v98 = vlaneseq
  %v99 = vshrl.u32 %v98, 7
  %v100 = vsub.s32 0, %v99
  %v101 = vrot.slane %v63, %v100
  %v102 = vlaneseq
  %v103 = vshrl.u32 %v102, 7
  %v104 = vsub.s32 1, %v103
  %v105 = vrot.slane %v63, %v104
  %v106 = vlaneseq
  %v107 = vshrl.u32 %v106, 7
  %v108 = vsub.s32 2, %v107
  %v109 = vrot.slane %v63, %v108
  %v110 = vlaneseq
  %v111 = vshrl.u32 %v110, 7
  %v112 = vsub.s32 3, %v111
  %v113 = vrot.slane %v63, %v112
  %v114 = vlaneseq
  %v115 = vshrl.u32 %v114, 7
  %v116 = vsub.s32 4, %v115
  %v117 = vrot.slane %v63, %v116
  %v118 = vlaneseq
  %v119 = vshrl.u32 %v118, 7
  %v120 = vsub.s32 5, %v119
  %v121 = vrot.slane %v63, %v120
  %v122 = vlaneseq
  %v123 = vshrl.u32 %v122, 7
  %v124 = vsub.s32 6, %v123
  %v125 = vrot.slane %v63, %v124
  %v126 = vlaneseq
  %v127 = vshrl.u32 %v126, 7
  %v128 = vsub.s32 7, %v127
  %v129 = vrot.slane %v63, %v128
  %v178 = vunpack.c.l.b16 %v30
  %v179 = vunpack.c.h.b16 %v30
  %v180 = vunpack.c.l.b16 %v31
  %v181 = vunpack.c.h.b16 %v31
  %v182 = vunpack.c.l.b16 %v32
  %v183 = vunpack.c.h.b16 %v32
  %v184 = vunpack.c.l.b16 %v33
  %v185 = vunpack.c.h.b16 %v33
  %v186 = vunpack.c.l.b16 %v34
  %v187 = vunpack.c.h.b16 %v34
  %v188 = vunpack.c.l.b16 %v35
  %v189 = vunpack.c.h.b16 %v35
  %v190 = vunpack.c.l.b16 %v36
  %v191 = vunpack.c.h.b16 %v36
  %v192 = vunpack.c.l.b16 %v37
  %v193 = vunpack.c.h.b16 %v37
  %v194 = vunpack.c.l.b16 %v38
  %v195 = vunpack.c.h.b16 %v38
  %v196 = vunpack.c.l.b16 %v39
  %v197 = vunpack.c.h.b16 %v39
  %v198 = vunpack.c.l.b16 %v40
  %v199 = vunpack.c.h.b16 %v40
  %v200 = vunpack.c.l.b16 %v41
  %v201 = vunpack.c.h.b16 %v41
  %v202 = vunpack.c.l.b16 %v42
  %v203 = vunpack.c.h.b16 %v42
  %v204 = vunpack.c.l.b16 %v43
  %v205 = vunpack.c.h.b16 %v43
  %v206 = vunpack.c.l.b16 %v44
  %v207 = vunpack.c.h.b16 %v44
  %v208 = vunpack.c.l.b16 %v45
  %v209 = vunpack.c.h.b16 %v45
  %v210 = vunpack.c.l.b16 %v46
  %v211 = vunpack.c.h.b16 %v46
  %v212 = vunpack.c.l.b16 %v47
  %v213 = vunpack.c.h.b16 %v47
  %v214 = vunpack.c.l.b16 %v48
  %v215 = vunpack.c.h.b16 %v48
  %v216 = vunpack.c.l.b16 %v49
  %v217 = vunpack.c.h.b16 %v49
  %v218 = vunpack.c.l.b16 %v50
  %v219 = vunpack.c.h.b16 %v50
  %v220 = vunpack.c.l.b16 %v51
  %v221 = vunpack.c.h.b16 %v51
  %v222 = vunpack.c.l.b16 %v52
  %v223 = vunpack.c.h.b16 %v52
  %v224 = vunpack.c.l.b16 %v53
  %v225 = vunpack.c.h.b16 %v53
  %v226 = vunpack.c.l.b16 %v54
  %v227 = vunpack.c.h.b16 %v54
  %v228 = vunpack.c.l.b16 %v55
  %v229 = vunpack.c.h.b16 %v55
  %v230 = vunpack.c.l.b16 %v56
  %v231 = vunpack.c.h.b16 %v56
  %v232 = vunpack.c.l.b16 %v57
  %v233 = vunpack.c.h.b16 %v57
  %v234 = vunpack.c.l.b16 %v58
  %v235 = vunpack.c.h.b16 %v58
  %v236 = vunpack.c.l.b16 %v59
  %v237 = vunpack.c.h.b16 %v59
  %v238 = vunpack.c.l.b16 %v60
  %v239 = vunpack.c.h.b16 %v60
  %v240 = vunpack.c.l.b16 %v61
  %v241 = vunpack.c.h.b16 %v61
  %v242 = vpack.c.b16 %v194, %v178
  %v243 = vpack.c.b16 %v195, %v179
  %v244 = vpack.c.b16 %v196, %v180
  %v245 = vpack.c.b16 %v197, %v181
  %v246 = vpack.c.b16 %v198, %v182
  %v247 = vpack.c.b16 %v199, %v183
  %v248 = vpack.c.b16 %v200, %v184
  %v249 = vpack.c.b16 %v201, %v185
  %v250 = vpack.c.b16 %v202, %v186
  %v251 = vpack.c.b16 %v203, %v187
  %v252 = vpack.c.b16 %v204, %v188
  %v253 = vpack.c.b16 %v205, %v189
  %v254 = vpack.c.b16 %v206, %v190
  %v255 = vpack.c.b16 %v207, %v191
  %v256 = vpack.c.b16 %v208, %v192
  %v257 = vpack.c.b16 %v209, %v193
  %v258 = vpack.c.b16 %v226, %v210
  %v259 = vpack.c.b16 %v227, %v211
  %v260 = vpack.c.b16 %v228, %v212
  %v261 = vpack.c.b16 %v229, %v213
  %v262 = vpack.c.b16 %v230, %v214
  %v263 = vpack.c.b16 %v231, %v215
  %v264 = vpack.c.b16 %v232, %v216
  %v265 = vpack.c.b16 %v233, %v217
  %v266 = vpack.c.b16 %v234, %v218
  %v267 = vpack.c.b16 %v235, %v219
  %v268 = vpack.c.b16 %v236, %v220
  %v269 = vpack.c.b16 %v237, %v221
  %v270 = vpack.c.b16 %v238, %v222
  %v271 = vpack.c.b16 %v239, %v223
  %v272 = vpack.c.b16 %v240, %v224
  %v273 = vpack.c.b16 %v241, %v225
  %vm306 = vcmask 261120
  %v308 = vsel %vm306, %v29, 0
  %310 = vmatprep.subr.bf16.mxu0 %v243
  %311 = vmatpush1.bf16.msra.mxu0 %v242
  %312 = vmatprep.subr.bf16.mxu0 %v259
  %313 = vmatpush1.bf16.msra.mxu0 %v258
  %314 = vmatprep.subr.bf16.mxu0 0
  %315 = vmatpush1.bf16.msra.mxu0 0
  %316 = vmatprep.subr.bf16.mxu0 0
  %317 = vmatpush1.bf16.msra.mxu0 0
  %318 = vmatprep.subr.bf16.mxu0 0
  %319 = vmatpush1.bf16.msra.mxu0 0
  %320 = vmatprep.subr.bf16.mxu0 0
  %321 = vmatpush1.bf16.msra.mxu0 0
  %322 = vmatprep.subr.bf16.mxu0 0
  %323 = vmatpush1.bf16.msra.mxu0 0
  %324 = vmatprep.subr.bf16.mxu0 0
  %325 = vmatpush1.bf16.msra.mxu0 0
  %326 = vmatprep.subr.bf16.mxu0 0
  %327 = vmatpush1.bf16.msra.mxu0 0
  %328 = vmatprep.subr.bf16.mxu0 0
  %329 = vmatpush1.bf16.msra.mxu0 0
  %330 = vmatprep.subr.bf16.mxu0 0
  %331 = vmatpush1.bf16.msra.mxu0 0
  %332 = vmatprep.subr.bf16.mxu0 0
  %333 = vmatpush1.bf16.msra.mxu0 0
  %334 = vmatprep.subr.bf16.mxu0 0
  %335 = vmatpush1.bf16.msra.mxu0 0
  %336 = vmatprep.subr.bf16.mxu0 0
  %337 = vmatpush1.bf16.msra.mxu0 0
  %338 = vmatprep.subr.bf16.mxu0 0
  %339 = vmatpush1.bf16.msra.mxu0 0
  %340 = vmatprep.subr.bf16.mxu0 0
  %341 = vmatpush1.bf16.msra.mxu0 0
  %342 = vmatprep.mubr.bf16.mxu0 0
  %343 = vmatmul.mubr.bf16.gmra.mrb[0].mxu0 %v308
  %v344 = vpop.f32.mrb[0].mxu0
  %v345 = vadd.f32 %v69, %v344
  %v346 = vpop.f32.mrb[0].mxu0
  %v347 = vadd.f32 %v73, %v346
  %v348 = vpop.f32.mrb[0].mxu0
  %v349 = vadd.f32 %v69, %v348
  %v350 = vpop.f32.mrb[0].mxu0
  %v351 = vadd.f32 %v73, %v350
  %352 = vdwg.mxu0
  %353 = vmatprep.subr.bf16.mxu0 %v245
  %354 = vmatpush1.bf16.msra.mxu0 %v244
  %355 = vmatprep.subr.bf16.mxu0 %v261
  %356 = vmatpush1.bf16.msra.mxu0 %v260
  %357 = vmatprep.subr.bf16.mxu0 0
  %358 = vmatpush1.bf16.msra.mxu0 0
  %359 = vmatprep.subr.bf16.mxu0 0
  %360 = vmatpush1.bf16.msra.mxu0 0
  %361 = vmatprep.subr.bf16.mxu0 0
  %362 = vmatpush1.bf16.msra.mxu0 0
  %363 = vmatprep.subr.bf16.mxu0 0
  %364 = vmatpush1.bf16.msra.mxu0 0
  %365 = vmatprep.subr.bf16.mxu0 0
  %366 = vmatpush1.bf16.msra.mxu0 0
  %367 = vmatprep.subr.bf16.mxu0 0
  %368 = vmatpush1.bf16.msra.mxu0 0
  %369 = vmatprep.subr.bf16.mxu0 0
  %370 = vmatpush1.bf16.msra.mxu0 0
  %371 = vmatprep.subr.bf16.mxu0 0
  %372 = vmatpush1.bf16.msra.mxu0 0
  %373 = vmatprep.subr.bf16.mxu0 0
  %374 = vmatpush1.bf16.msra.mxu0 0
  %375 = vmatprep.subr.bf16.mxu0 0
  %376 = vmatpush1.bf16.msra.mxu0 0
  %377 = vmatprep.subr.bf16.mxu0 0
  %378 = vmatpush1.bf16.msra.mxu0 0
  %379 = vmatprep.subr.bf16.mxu0 0
  %380 = vmatpush1.bf16.msra.mxu0 0
  %381 = vmatprep.subr.bf16.mxu0 0
  %382 = vmatpush1.bf16.msra.mxu0 0
  %383 = vmatprep.subr.bf16.mxu0 0
  %384 = vmatpush1.bf16.msra.mxu0 0
  %385 = vmatprep.mubr.bf16.mxu0 0
  %386 = vmatmul.mubr.bf16.gmra.mrb[0].mxu0 %v308
  %v387 = vpop.f32.mrb[0].mxu0
  %v388 = vadd.f32 %v77, %v387
  %v389 = vpop.f32.mrb[0].mxu0
  %v390 = vadd.f32 %v81, %v389
  %v391 = vpop.f32.mrb[0].mxu0
  %v392 = vadd.f32 %v77, %v391
  %v393 = vpop.f32.mrb[0].mxu0
  %v394 = vadd.f32 %v81, %v393
  %395 = vdwg.mxu0
  %396 = vmatprep.subr.bf16.mxu0 %v247
  %397 = vmatpush1.bf16.msra.mxu0 %v246
  %398 = vmatprep.subr.bf16.mxu0 %v263
  %399 = vmatpush1.bf16.msra.mxu0 %v262
  %400 = vmatprep.subr.bf16.mxu0 0
  %401 = vmatpush1.bf16.msra.mxu0 0
  %402 = vmatprep.subr.bf16.mxu0 0
  %403 = vmatpush1.bf16.msra.mxu0 0
  %404 = vmatprep.subr.bf16.mxu0 0
  %405 = vmatpush1.bf16.msra.mxu0 0
  %406 = vmatprep.subr.bf16.mxu0 0
  %407 = vmatpush1.bf16.msra.mxu0 0
  %408 = vmatprep.subr.bf16.mxu0 0
  %409 = vmatpush1.bf16.msra.mxu0 0
  %410 = vmatprep.subr.bf16.mxu0 0
  %411 = vmatpush1.bf16.msra.mxu0 0
  %412 = vmatprep.subr.bf16.mxu0 0
  %413 = vmatpush1.bf16.msra.mxu0 0
  %414 = vmatprep.subr.bf16.mxu0 0
  %415 = vmatpush1.bf16.msra.mxu0 0
  %416 = vmatprep.subr.bf16.mxu0 0
  %417 = vmatpush1.bf16.msra.mxu0 0
  %418 = vmatprep.subr.bf16.mxu0 0
  %419 = vmatpush1.bf16.msra.mxu0 0
  %420 = vmatprep.subr.bf16.mxu0 0
  %421 = vmatpush1.bf16.msra.mxu0 0
  %422 = vmatprep.subr.bf16.mxu0 0
  %423 = vmatpush1.bf16.msra.mxu0 0
  %424 = vmatprep.subr.bf16.mxu0 0
  %425 = vmatpush1.bf16.msra.mxu0 0
  %426 = vmatprep.subr.bf16.mxu0 0
  %427 = vmatpush1.bf16.msra.mxu0 0
  %428 = vmatprep.mubr.bf16.mxu0 0
  %429 = vmatmul.mubr.bf16.gmra.mrb[0].mxu0 %v308
  %v430 = vpop.f32.mrb[0].mxu0
  %v431 = vadd.f32 %v85, %v430
  %v432 = vpop.f32.mrb[0].mxu0
  %v433 = vadd.f32 %v89, %v432
  %v434 = vpop.f32.mrb[0].mxu0
  %v435 = vadd.f32 %v85, %v434
  %v436 = vpop.f32.mrb[0].mxu0
  %v437 = vadd.f32 %v89, %v436
  %438 = vdwg.mxu0
  %439 = vmatprep.subr.bf16.mxu0 %v249
  %440 = vmatpush1.bf16.msra.mxu0 %v248
  %441 = vmatprep.subr.bf16.mxu0 %v265
  %442 = vmatpush1.bf16.msra.mxu0 %v264
  %443 = vmatprep.subr.bf16.mxu0 0
  %444 = vmatpush1.bf16.msra.mxu0 0
  %445 = vmatprep.subr.bf16.mxu0 0
  %446 = vmatpush1.bf16.msra.mxu0 0
  %447 = vmatprep.subr.bf16.mxu0 0
  %448 = vmatpush1.bf16.msra.mxu0 0
  %449 = vmatprep.subr.bf16.mxu0 0
  %450 = vmatpush1.bf16.msra.mxu0 0
  %451 = vmatprep.subr.bf16.mxu0 0
  %452 = vmatpush1.bf16.msra.mxu0 0
  %453 = vmatprep.subr.bf16.mxu0 0
  %454 = vmatpush1.bf16.msra.mxu0 0
  %455 = vmatprep.subr.bf16.mxu0 0
  %456 = vmatpush1.bf16.msra.mxu0 0
  %457 = vmatprep.subr.bf16.mxu0 0
  %458 = vmatpush1.bf16.msra.mxu0 0
  %459 = vmatprep.subr.bf16.mxu0 0
  %460 = vmatpush1.bf16.msra.mxu0 0
  %461 = vmatprep.subr.bf16.mxu0 0
  %462 = vmatpush1.bf16.msra.mxu0 0
  %463 = vmatprep.subr.bf16.mxu0 0
  %464 = vmatpush1.bf16.msra.mxu0 0
  %465 = vmatprep.subr.bf16.mxu0 0
  %466 = vmatpush1.bf16.msra.mxu0 0
  %467 = vmatprep.subr.bf16.mxu0 0
  %468 = vmatpush1.bf16.msra.mxu0 0
  %469 = vmatprep.subr.bf16.mxu0 0
  %470 = vmatpush1.bf16.msra.mxu0 0
  %471 = vmatprep.mubr.bf16.mxu0 0
  %472 = vmatmul.mubr.bf16.gmra.mrb[0].mxu0 %v308
  %v473 = vpop.f32.mrb[0].mxu0
  %v474 = vadd.f32 %v93, %v473
  %v475 = vpop.f32.mrb[0].mxu0
  %v476 = vadd.f32 %v97, %v475
  %v477 = vpop.f32.mrb[0].mxu0
  %v478 = vadd.f32 %v93, %v477
  %v479 = vpop.f32.mrb[0].mxu0
  %v480 = vadd.f32 %v97, %v479
  %481 = vdwg.mxu0
  %482 = vmatprep.subr.bf16.mxu0 %v251
  %483 = vmatpush1.bf16.msra.mxu0 %v250
  %484 = vmatprep.subr.bf16.mxu0 %v267
  %485 = vmatpush1.bf16.msra.mxu0 %v266
  %486 = vmatprep.subr.bf16.mxu0 0
  %487 = vmatpush1.bf16.msra.mxu0 0
  %488 = vmatprep.subr.bf16.mxu0 0
  %489 = vmatpush1.bf16.msra.mxu0 0
  %490 = vmatprep.subr.bf16.mxu0 0
  %491 = vmatpush1.bf16.msra.mxu0 0
  %492 = vmatprep.subr.bf16.mxu0 0
  %493 = vmatpush1.bf16.msra.mxu0 0
  %494 = vmatprep.subr.bf16.mxu0 0
  %495 = vmatpush1.bf16.msra.mxu0 0
  %496 = vmatprep.subr.bf16.mxu0 0
  %497 = vmatpush1.bf16.msra.mxu0 0
  %498 = vmatprep.subr.bf16.mxu0 0
  %499 = vmatpush1.bf16.msra.mxu0 0
  %500 = vmatprep.subr.bf16.mxu0 0
  %501 = vmatpush1.bf16.msra.mxu0 0
  %502 = vmatprep.subr.bf16.mxu0 0
  %503 = vmatpush1.bf16.msra.mxu0 0
  %504 = vmatprep.subr.bf16.mxu0 0
  %505 = vmatpush1.bf16.msra.mxu0 0
  %506 = vmatprep.subr.bf16.mxu0 0
  %507 = vmatpush1.bf16.msra.mxu0 0
  %508 = vmatprep.subr.bf16.mxu0 0
  %509 = vmatpush1.bf16.msra.mxu0 0
  %510 = vmatprep.subr.bf16.mxu0 0
  %511 = vmatpush1.bf16.msra.mxu0 0
  %512 = vmatprep.subr.bf16.mxu0 0
  %513 = vmatpush1.bf16.msra.mxu0 0
  %514 = vmatprep.mubr.bf16.mxu0 0
  %515 = vmatmul.mubr.bf16.gmra.mrb[0].mxu0 %v308
  %v516 = vpop.f32.mrb[0].mxu0
  %v517 = vadd.f32 %v101, %v516
  %v518 = vpop.f32.mrb[0].mxu0
  %v519 = vadd.f32 %v105, %v518
  %v520 = vpop.f32.mrb[0].mxu0
  %v521 = vadd.f32 %v101, %v520
  %v522 = vpop.f32.mrb[0].mxu0
  %v523 = vadd.f32 %v105, %v522
  %524 = vdwg.mxu0
  %525 = vmatprep.subr.bf16.mxu0 %v253
  %526 = vmatpush1.bf16.msra.mxu0 %v252
  %527 = vmatprep.subr.bf16.mxu0 %v269
  %528 = vmatpush1.bf16.msra.mxu0 %v268
  %529 = vmatprep.subr.bf16.mxu0 0
  %530 = vmatpush1.bf16.msra.mxu0 0
  %531 = vmatprep.subr.bf16.mxu0 0
  %532 = vmatpush1.bf16.msra.mxu0 0
  %533 = vmatprep.subr.bf16.mxu0 0
  %534 = vmatpush1.bf16.msra.mxu0 0
  %535 = vmatprep.subr.bf16.mxu0 0
  %536 = vmatpush1.bf16.msra.mxu0 0
  %537 = vmatprep.subr.bf16.mxu0 0
  %538 = vmatpush1.bf16.msra.mxu0 0
  %539 = vmatprep.subr.bf16.mxu0 0
  %540 = vmatpush1.bf16.msra.mxu0 0
  %541 = vmatprep.subr.bf16.mxu0 0
  %542 = vmatpush1.bf16.msra.mxu0 0
  %543 = vmatprep.subr.bf16.mxu0 0
  %544 = vmatpush1.bf16.msra.mxu0 0
  %545 = vmatprep.subr.bf16.mxu0 0
  %546 = vmatpush1.bf16.msra.mxu0 0
  %547 = vmatprep.subr.bf16.mxu0 0
  %548 = vmatpush1.bf16.msra.mxu0 0
  %549 = vmatprep.subr.bf16.mxu0 0
  %550 = vmatpush1.bf16.msra.mxu0 0
  %551 = vmatprep.subr.bf16.mxu0 0
  %552 = vmatpush1.bf16.msra.mxu0 0
  %553 = vmatprep.subr.bf16.mxu0 0
  %554 = vmatpush1.bf16.msra.mxu0 0
  %555 = vmatprep.subr.bf16.mxu0 0
  %556 = vmatpush1.bf16.msra.mxu0 0
  %557 = vmatprep.mubr.bf16.mxu0 0
  %558 = vmatmul.mubr.bf16.gmra.mrb[0].mxu0 %v308
  %v559 = vpop.f32.mrb[0].mxu0
  %v560 = vadd.f32 %v109, %v559
  %v561 = vpop.f32.mrb[0].mxu0
  %v562 = vadd.f32 %v113, %v561
  %v563 = vpop.f32.mrb[0].mxu0
  %v564 = vadd.f32 %v109, %v563
  %v565 = vpop.f32.mrb[0].mxu0
  %v566 = vadd.f32 %v113, %v565
  %567 = vdwg.mxu0
  %568 = vmatprep.subr.bf16.mxu0 %v255
  %569 = vmatpush1.bf16.msra.mxu0 %v254
  %570 = vmatprep.subr.bf16.mxu0 %v271
  %571 = vmatpush1.bf16.msra.mxu0 %v270
  %572 = vmatprep.subr.bf16.mxu0 0
  %573 = vmatpush1.bf16.msra.mxu0 0
  %574 = vmatprep.subr.bf16.mxu0 0
  %575 = vmatpush1.bf16.msra.mxu0 0
  %576 = vmatprep.subr.bf16.mxu0 0
  %577 = vmatpush1.bf16.msra.mxu0 0
  %578 = vmatprep.subr.bf16.mxu0 0
  %579 = vmatpush1.bf16.msra.mxu0 0
  %580 = vmatprep.subr.bf16.mxu0 0
  %581 = vmatpush1.bf16.msra.mxu0 0
  %582 = vmatprep.subr.bf16.mxu0 0
  %583 = vmatpush1.bf16.msra.mxu0 0
  %584 = vmatprep.subr.bf16.mxu0 0
  %585 = vmatpush1.bf16.msra.mxu0 0
  %586 = vmatprep.subr.bf16.mxu0 0
  %587 = vmatpush1.bf16.msra.mxu0 0
  %588 = vmatprep.subr.bf16.mxu0 0
  %589 = vmatpush1.bf16.msra.mxu0 0
  %590 = vmatprep.subr.bf16.mxu0 0
  %591 = vmatpush1.bf16.msra.mxu0 0
  %592 = vmatprep.subr.bf16.mxu0 0
  %593 = vmatpush1.bf16.msra.mxu0 0
  %594 = vmatprep.subr.bf16.mxu0 0
  %595 = vmatpush1.bf16.msra.mxu0 0
  %596 = vmatprep.subr.bf16.mxu0 0
  %597 = vmatpush1.bf16.msra.mxu0 0
  %598 = vmatprep.subr.bf16.mxu0 0
  %599 = vmatpush1.bf16.msra.mxu0 0
  %600 = vmatprep.mubr.bf16.mxu0 0
  %601 = vmatmul.mubr.bf16.gmra.mrb[0].mxu0 %v308
  %v602 = vpop.f32.mrb[0].mxu0
  %v603 = vadd.f32 %v117, %v602
  %v604 = vpop.f32.mrb[0].mxu0
  %v605 = vadd.f32 %v121, %v604
  %v606 = vpop.f32.mrb[0].mxu0
  %v607 = vadd.f32 %v117, %v606
  %v608 = vpop.f32.mrb[0].mxu0
  %v609 = vadd.f32 %v121, %v608
  %610 = vdwg.mxu0
  %611 = vmatprep.subr.bf16.mxu0 %v257
  %612 = vmatpush1.bf16.msra.mxu0 %v256
  %613 = vmatprep.subr.bf16.mxu0 %v273
  %614 = vmatpush1.bf16.msra.mxu0 %v272
  %615 = vmatprep.subr.bf16.mxu0 0
  %616 = vmatpush1.bf16.msra.mxu0 0
  %617 = vmatprep.subr.bf16.mxu0 0
  %618 = vmatpush1.bf16.msra.mxu0 0
  %619 = vmatprep.subr.bf16.mxu0 0
  %620 = vmatpush1.bf16.msra.mxu0 0
  %621 = vmatprep.subr.bf16.mxu0 0
  %622 = vmatpush1.bf16.msra.mxu0 0
  %623 = vmatprep.subr.bf16.mxu0 0
  %624 = vmatpush1.bf16.msra.mxu0 0
  %625 = vmatprep.subr.bf16.mxu0 0
  %626 = vmatpush1.bf16.msra.mxu0 0
  %627 = vmatprep.subr.bf16.mxu0 0
  %628 = vmatpush1.bf16.msra.mxu0 0
  %629 = vmatprep.subr.bf16.mxu0 0
  %630 = vmatpush1.bf16.msra.mxu0 0
  %631 = vmatprep.subr.bf16.mxu0 0
  %632 = vmatpush1.bf16.msra.mxu0 0
  %633 = vmatprep.subr.bf16.mxu0 0
  %634 = vmatpush1.bf16.msra.mxu0 0
  %635 = vmatprep.subr.bf16.mxu0 0
  %636 = vmatpush1.bf16.msra.mxu0 0
  %637 = vmatprep.subr.bf16.mxu0 0
  %638 = vmatpush1.bf16.msra.mxu0 0
  %639 = vmatprep.subr.bf16.mxu0 0
  %640 = vmatpush1.bf16.msra.mxu0 0
  %641 = vmatprep.subr.bf16.mxu0 0
  %642 = vmatpush1.bf16.msra.mxu0 0
  %643 = vmatprep.mubr.bf16.mxu0 0
  %644 = vmatmul.mubr.bf16.gmra.mrb[0].mxu0 %v308
  %v645 = vpop.f32.mrb[0].mxu0
  %v646 = vadd.f32 %v125, %v645
  %v647 = vpop.f32.mrb[0].mxu0
  %v648 = vadd.f32 %v129, %v647
  %v649 = vpop.f32.mrb[0].mxu0
  %v650 = vadd.f32 %v125, %v649
  %v651 = vpop.f32.mrb[0].mxu0
  %v652 = vadd.f32 %v129, %v651
  %653 = vdwg.mxu0
  %v654 = vmax.f32 %v345, 0.0
  %v655 = vmax.f32 %v347, 0.0
  %v656 = vmax.f32 %v388, 0.0
  %v657 = vmax.f32 %v390, 0.0
  %v658 = vmax.f32 %v431, 0.0
  %v659 = vmax.f32 %v433, 0.0
  %v660 = vmax.f32 %v474, 0.0
  %v661 = vmax.f32 %v476, 0.0
  %v662 = vmax.f32 %v517, 0.0
  %v663 = vmax.f32 %v519, 0.0
  %v664 = vmax.f32 %v560, 0.0
  %v665 = vmax.f32 %v562, 0.0
  %v666 = vmax.f32 %v603, 0.0
  %v667 = vmax.f32 %v605, 0.0
  %v668 = vmax.f32 %v646, 0.0
  %v669 = vmax.f32 %v648, 0.0
  %v670 = vmax.f32 %v349, 0.0
  %v671 = vmax.f32 %v351, 0.0
  %v672 = vmax.f32 %v392, 0.0
  %v673 = vmax.f32 %v394, 0.0
  %v674 = vmax.f32 %v435, 0.0
  %v675 = vmax.f32 %v437, 0.0
  %v676 = vmax.f32 %v478, 0.0
  %v677 = vmax.f32 %v480, 0.0
  %v678 = vmax.f32 %v521, 0.0
  %v679 = vmax.f32 %v523, 0.0
  %v680 = vmax.f32 %v564, 0.0
  %v681 = vmax.f32 %v566, 0.0
  %v682 = vmax.f32 %v607, 0.0
  %v683 = vmax.f32 %v609, 0.0
  %v684 = vmax.f32 %v650, 0.0
  %v685 = vmax.f32 %v652, 0.0
  %v686 = vpack.c.bf16 %v670, %v654
  %v687 = vpack.c.bf16 %v671, %v655
  %v688 = vpack.c.bf16 %v672, %v656
  %v689 = vpack.c.bf16 %v673, %v657
  %v690 = vpack.c.bf16 %v674, %v658
  %v691 = vpack.c.bf16 %v675, %v659
  %v692 = vpack.c.bf16 %v676, %v660
  %v693 = vpack.c.bf16 %v677, %v661
  %v694 = vpack.c.bf16 %v678, %v662
  %v695 = vpack.c.bf16 %v679, %v663
  %v696 = vpack.c.bf16 %v680, %v664
  %v697 = vpack.c.bf16 %v681, %v665
  %v698 = vpack.c.bf16 %v682, %v666
  %v699 = vpack.c.bf16 %v683, %v667
  %v700 = vpack.c.bf16 %v684, %v668
  %v701 = vpack.c.bf16 %v685, %v669
  %v702 = vld [vmem:[%s3] sm:$0xf]
  %v703 = vld [vmem:[%s3 + $0x4] sm:$0xf]
  %v704 = vld [vmem:[%s3 + $0x8] sm:$0xf]
  %v705 = vld [vmem:[%s3 + $0xc] sm:$0xf]
  %v706 = vld [vmem:[%s3 + $0x10] sm:$0xf]
  %v707 = vld [vmem:[%s3 + $0x14] sm:$0xf]
  %v708 = vld [vmem:[%s3 + $0x18] sm:$0xf]
  %v709 = vld [vmem:[%s3 + $0x1c] sm:$0xf]
  %v710 = vld [vmem:[%s3 + $0x20] sm:$0xf]
  %v711 = vld [vmem:[%s3 + $0x24] sm:$0xf]
  %v712 = vld [vmem:[%s3 + $0x28] sm:$0xf]
  %v713 = vld [vmem:[%s3 + $0x2c] sm:$0xf]
  %v714 = vld [vmem:[%s3 + $0x30] sm:$0xf]
  %v715 = vld [vmem:[%s3 + $0x34] sm:$0xf]
  %v716 = vld [vmem:[%s3 + $0x38] sm:$0xf]
  %v717 = vld [vmem:[%s3 + $0x3c] sm:$0xf]
  %v718 = vld [vmem:[%s3 + $0x40] sm:$0xf]
  %v719 = vld [vmem:[%s3 + $0x44] sm:$0xf]
  %v720 = vld [vmem:[%s3 + $0x48] sm:$0xf]
  %v721 = vld [vmem:[%s3 + $0x4c] sm:$0xf]
  %v722 = vld [vmem:[%s3 + $0x50] sm:$0xf]
  %v723 = vld [vmem:[%s3 + $0x54] sm:$0xf]
  %v724 = vld [vmem:[%s3 + $0x58] sm:$0xf]
  %v725 = vld [vmem:[%s3 + $0x5c] sm:$0xf]
  %v726 = vld [vmem:[%s3 + $0x60] sm:$0xf]
  %v727 = vld [vmem:[%s3 + $0x64] sm:$0xf]
  %v728 = vld [vmem:[%s3 + $0x68] sm:$0xf]
  %v729 = vld [vmem:[%s3 + $0x6c] sm:$0xf]
  %v730 = vld [vmem:[%s3 + $0x70] sm:$0xf]
  %v731 = vld [vmem:[%s3 + $0x74] sm:$0xf]
  %v732 = vld [vmem:[%s3 + $0x78] sm:$0xf]
  %v733 = vld [vmem:[%s3 + $0x7c] sm:$0xf]
  %v734 = vld [vmem:[%s3 + $0x80] sm:$0xf]
  %v735 = vld [vmem:[%s3 + $0x84] sm:$0xf]
  %v736 = vld [vmem:[%s3 + $0x88] sm:$0xf]
  %v737 = vld [vmem:[%s3 + $0x8c] sm:$0xf]
  %v738 = vld [vmem:[%s3 + $0x90] sm:$0xf]
  %v739 = vld [vmem:[%s3 + $0x94] sm:$0xf]
  %v740 = vld [vmem:[%s3 + $0x98] sm:$0xf]
  %v741 = vld [vmem:[%s3 + $0x9c] sm:$0xf]
  %v742 = vld [vmem:[%s3 + $0xa0] sm:$0xf]
  %v743 = vld [vmem:[%s3 + $0xa4] sm:$0xf]
  %v744 = vld [vmem:[%s3 + $0xa8] sm:$0xf]
  %v745 = vld [vmem:[%s3 + $0xac] sm:$0xf]
  %v746 = vld [vmem:[%s3 + $0xb0] sm:$0xf]
  %v747 = vld [vmem:[%s3 + $0xb4] sm:$0xf]
  %v748 = vld [vmem:[%s3 + $0xb8] sm:$0xf]
  %v749 = vld [vmem:[%s3 + $0xbc] sm:$0xf]
  %v750 = vld [vmem:[%s3 + $0xc0] sm:$0xf]
  %v751 = vld [vmem:[%s3 + $0xc4] sm:$0xf]
  %v752 = vld [vmem:[%s3 + $0xc8] sm:$0xf]
  %v753 = vld [vmem:[%s3 + $0xcc] sm:$0xf]
  %v754 = vld [vmem:[%s3 + $0xd0] sm:$0xf]
  %v755 = vld [vmem:[%s3 + $0xd4] sm:$0xf]
  %v756 = vld [vmem:[%s3 + $0xd8] sm:$0xf]
  %v757 = vld [vmem:[%s3 + $0xdc] sm:$0xf]
  %v758 = vld [vmem:[%s3 + $0xe0] sm:$0xf]
  %v759 = vld [vmem:[%s3 + $0xe4] sm:$0xf]
  %v760 = vld [vmem:[%s3 + $0xe8] sm:$0xf]
  %v761 = vld [vmem:[%s3 + $0xec] sm:$0xf]
  %v762 = vld [vmem:[%s3 + $0xf0] sm:$0xf]
  %v763 = vld [vmem:[%s3 + $0xf4] sm:$0xf]
  %v764 = vld [vmem:[%s3 + $0xf8] sm:$0xf]
  %v765 = vld [vmem:[%s3 + $0xfc] sm:$0xf]
  %v766 = vld [vmem:[%s3 + $0x100] sm:$0xf]
  %v767 = vld [vmem:[%s3 + $0x104] sm:$0xf]
  %v768 = vld [vmem:[%s3 + $0x108] sm:$0xf]
  %v769 = vld [vmem:[%s3 + $0x10c] sm:$0xf]
  %v770 = vld [vmem:[%s3 + $0x110] sm:$0xf]
  %v771 = vld [vmem:[%s3 + $0x114] sm:$0xf]
  %v772 = vld [vmem:[%s3 + $0x118] sm:$0xf]
  %v773 = vld [vmem:[%s3 + $0x11c] sm:$0xf]
  %v774 = vld [vmem:[%s3 + $0x120] sm:$0xf]
  %v775 = vld [vmem:[%s3 + $0x124] sm:$0xf]
  %v776 = vld [vmem:[%s3 + $0x128] sm:$0xf]
  %v777 = vld [vmem:[%s3 + $0x12c] sm:$0xf]
  %v778 = vld [vmem:[%s3 + $0x130] sm:$0xf]
  %v779 = vld [vmem:[%s3 + $0x134] sm:$0xf]
  %v780 = vld [vmem:[%s3 + $0x138] sm:$0xf]
  %v781 = vld [vmem:[%s3 + $0x13c] sm:$0xf]
  %v782 = vld [vmem:[%s3 + $0x140] sm:$0xf]
  %v783 = vld [vmem:[%s3 + $0x144] sm:$0xf]
  %v784 = vld [vmem:[%s3 + $0x148] sm:$0xf]
  %v785 = vld [vmem:[%s3 + $0x14c] sm:$0xf]
  %v786 = vld [vmem:[%s3 + $0x150] sm:$0xf]
  %v787 = vld [vmem:[%s3 + $0x154] sm:$0xf]
  %v788 = vld [vmem:[%s3 + $0x158] sm:$0xf]
  %v789 = vld [vmem:[%s3 + $0x15c] sm:$0xf]
  %v790 = vld [vmem:[%s3 + $0x160] sm:$0xf]
  %v791 = vld [vmem:[%s3 + $0x164] sm:$0xf]
  %v792 = vld [vmem:[%s3 + $0x168] sm:$0xf]
  %v793 = vld [vmem:[%s3 + $0x16c] sm:$0xf]
  %v794 = vld [vmem:[%s3 + $0x170] sm:$0xf]
  %v795 = vld [vmem:[%s3 + $0x174] sm:$0xf]
  %v796 = vld [vmem:[%s3 + $0x178] sm:$0xf]
  %v797 = vld [vmem:[%s3 + $0x17c] sm:$0xf]
  %v798 = vld [vmem:[%s3 + $0x180] sm:$0xf]
  %v799 = vld [vmem:[%s3 + $0x184] sm:$0xf]
  %v800 = vld [vmem:[%s3 + $0x188] sm:$0xf]
  %v801 = vld [vmem:[%s3 + $0x18c] sm:$0xf]
  %v802 = vld [vmem:[%s3 + $0x190] sm:$0xf]
  %v803 = vld [vmem:[%s3 + $0x194] sm:$0xf]
  %v804 = vld [vmem:[%s3 + $0x198] sm:$0xf]
  %v805 = vld [vmem:[%s3 + $0x19c] sm:$0xf]
  %v806 = vld [vmem:[%s3 + $0x1a0] sm:$0xf]
  %v807 = vld [vmem:[%s3 + $0x1a4] sm:$0xf]
  %v808 = vld [vmem:[%s3 + $0x1a8] sm:$0xf]
  %v809 = vld [vmem:[%s3 + $0x1ac] sm:$0xf]
  %v810 = vld [vmem:[%s3 + $0x1b0] sm:$0xf]
  %v811 = vld [vmem:[%s3 + $0x1b4] sm:$0xf]
  %v812 = vld [vmem:[%s3 + $0x1b8] sm:$0xf]
  %v813 = vld [vmem:[%s3 + $0x1bc] sm:$0xf]
  %v814 = vld [vmem:[%s3 + $0x1c0] sm:$0xf]
  %v815 = vld [vmem:[%s3 + $0x1c4] sm:$0xf]
  %v816 = vld [vmem:[%s3 + $0x1c8] sm:$0xf]
  %v817 = vld [vmem:[%s3 + $0x1cc] sm:$0xf]
  %v818 = vld [vmem:[%s3 + $0x1d0] sm:$0xf]
  %v819 = vld [vmem:[%s3 + $0x1d4] sm:$0xf]
  %v820 = vld [vmem:[%s3 + $0x1d8] sm:$0xf]
  %v821 = vld [vmem:[%s3 + $0x1dc] sm:$0xf]
  %v822 = vld [vmem:[%s3 + $0x1e0] sm:$0xf]
  %v823 = vld [vmem:[%s3 + $0x1e4] sm:$0xf]
  %v824 = vld [vmem:[%s3 + $0x1e8] sm:$0xf]
  %v825 = vld [vmem:[%s3 + $0x1ec] sm:$0xf]
  %v826 = vld [vmem:[%s3 + $0x1f0] sm:$0xf]
  %v827 = vld [vmem:[%s3 + $0x1f4] sm:$0xf]
  %v828 = vld [vmem:[%s3 + $0x1f8] sm:$0xf]
  %v829 = vld [vmem:[%s3 + $0x1fc] sm:$0xf]
  %v830 = vld [vmem:[%s3 + $0x200] sm:$0xf]
  %v831 = vld [vmem:[%s3 + $0x204] sm:$0xf]
  %v832 = vld [vmem:[%s3 + $0x208] sm:$0xf]
  %v833 = vld [vmem:[%s3 + $0x20c] sm:$0xf]
  %v834 = vld [vmem:[%s3 + $0x210] sm:$0xf]
  %v835 = vld [vmem:[%s3 + $0x214] sm:$0xf]
  %v836 = vld [vmem:[%s3 + $0x218] sm:$0xf]
  %v837 = vld [vmem:[%s3 + $0x21c] sm:$0xf]
  %v838 = vld [vmem:[%s3 + $0x220] sm:$0xf]
  %v839 = vld [vmem:[%s3 + $0x224] sm:$0xf]
  %v840 = vld [vmem:[%s3 + $0x228] sm:$0xf]
  %v841 = vld [vmem:[%s3 + $0x22c] sm:$0xf]
  %v842 = vld [vmem:[%s3 + $0x230] sm:$0xf]
  %v843 = vld [vmem:[%s3 + $0x234] sm:$0xf]
  %v844 = vld [vmem:[%s3 + $0x238] sm:$0xf]
  %v845 = vld [vmem:[%s3 + $0x23c] sm:$0xf]
  %v846 = vld [vmem:[%s3 + $0x240] sm:$0xf]
  %v847 = vld [vmem:[%s3 + $0x244] sm:$0xf]
  %v848 = vld [vmem:[%s3 + $0x248] sm:$0xf]
  %v849 = vld [vmem:[%s3 + $0x24c] sm:$0xf]
  %v850 = vld [vmem:[%s3 + $0x250] sm:$0xf]
  %v851 = vld [vmem:[%s3 + $0x254] sm:$0xf]
  %v852 = vld [vmem:[%s3 + $0x258] sm:$0xf]
  %v853 = vld [vmem:[%s3 + $0x25c] sm:$0xf]
  %v854 = vld [vmem:[%s3 + $0x260] sm:$0xf]
  %v855 = vld [vmem:[%s3 + $0x264] sm:$0xf]
  %v856 = vld [vmem:[%s3 + $0x268] sm:$0xf]
  %v857 = vld [vmem:[%s3 + $0x26c] sm:$0xf]
  %v858 = vld [vmem:[%s3 + $0x270] sm:$0xf]
  %v859 = vld [vmem:[%s3 + $0x274] sm:$0xf]
  %v860 = vld [vmem:[%s3 + $0x278] sm:$0xf]
  %v861 = vld [vmem:[%s3 + $0x27c] sm:$0xf]
  %v862 = vld [vmem:[%s3 + $0x280] sm:$0xf]
  %v863 = vld [vmem:[%s3 + $0x284] sm:$0xf]
  %v864 = vld [vmem:[%s3 + $0x288] sm:$0xf]
  %v865 = vld [vmem:[%s3 + $0x28c] sm:$0xf]
  %v866 = vld [vmem:[%s3 + $0x290] sm:$0xf]
  %v867 = vld [vmem:[%s3 + $0x294] sm:$0xf]
  %v868 = vld [vmem:[%s3 + $0x298] sm:$0xf]
  %v869 = vld [vmem:[%s3 + $0x29c] sm:$0xf]
  %v870 = vld [vmem:[%s3 + $0x2a0] sm:$0xf]
  %v871 = vld [vmem:[%s3 + $0x2a4] sm:$0xf]
  %v872 = vld [vmem:[%s3 + $0x2a8] sm:$0xf]
  %v873 = vld [vmem:[%s3 + $0x2ac] sm:$0xf]
  %v874 = vld [vmem:[%s3 + $0x2b0] sm:$0xf]
  %v875 = vld [vmem:[%s3 + $0x2b4] sm:$0xf]
  %v876 = vld [vmem:[%s3 + $0x2b8] sm:$0xf]
  %v877 = vld [vmem:[%s3 + $0x2bc] sm:$0xf]
  %v878 = vld [vmem:[%s3 + $0x2c0] sm:$0xf]
  %v879 = vld [vmem:[%s3 + $0x2c4] sm:$0xf]
  %v880 = vld [vmem:[%s3 + $0x2c8] sm:$0xf]
  %v881 = vld [vmem:[%s3 + $0x2cc] sm:$0xf]
  %v882 = vld [vmem:[%s3 + $0x2d0] sm:$0xf]
  %v883 = vld [vmem:[%s3 + $0x2d4] sm:$0xf]
  %v884 = vld [vmem:[%s3 + $0x2d8] sm:$0xf]
  %v885 = vld [vmem:[%s3 + $0x2dc] sm:$0xf]
  %v886 = vld [vmem:[%s3 + $0x2e0] sm:$0xf]
  %v887 = vld [vmem:[%s3 + $0x2e4] sm:$0xf]
  %v888 = vld [vmem:[%s3 + $0x2e8] sm:$0xf]
  %v889 = vld [vmem:[%s3 + $0x2ec] sm:$0xf]
  %v890 = vld [vmem:[%s3 + $0x2f0] sm:$0xf]
  %v891 = vld [vmem:[%s3 + $0x2f4] sm:$0xf]
  %v892 = vld [vmem:[%s3 + $0x2f8] sm:$0xf]
  %v893 = vld [vmem:[%s3 + $0x2fc] sm:$0xf]
  %v894 = vld [vmem:[%s3 + $0x300] sm:$0xf]
  %v895 = vld [vmem:[%s3 + $0x304] sm:$0xf]
  %v896 = vld [vmem:[%s3 + $0x308] sm:$0xf]
  %v897 = vld [vmem:[%s3 + $0x30c] sm:$0xf]
  %v898 = vld [vmem:[%s3 + $0x310] sm:$0xf]
  %v899 = vld [vmem:[%s3 + $0x314] sm:$0xf]
  %v900 = vld [vmem:[%s3 + $0x318] sm:$0xf]
  %v901 = vld [vmem:[%s3 + $0x31c] sm:$0xf]
  %v902 = vld [vmem:[%s3 + $0x320] sm:$0xf]
  %v903 = vld [vmem:[%s3 + $0x324] sm:$0xf]
  %v904 = vld [vmem:[%s3 + $0x328] sm:$0xf]
  %v905 = vld [vmem:[%s3 + $0x32c] sm:$0xf]
  %v906 = vld [vmem:[%s3 + $0x330] sm:$0xf]
  %v907 = vld [vmem:[%s3 + $0x334] sm:$0xf]
  %v908 = vld [vmem:[%s3 + $0x338] sm:$0xf]
  %v909 = vld [vmem:[%s3 + $0x33c] sm:$0xf]
  %v910 = vld [vmem:[%s3 + $0x340] sm:$0xf]
  %v911 = vld [vmem:[%s3 + $0x344] sm:$0xf]
  %v912 = vld [vmem:[%s3 + $0x348] sm:$0xf]
  %v913 = vld [vmem:[%s3 + $0x34c] sm:$0xf]
  %v914 = vld [vmem:[%s3 + $0x350] sm:$0xf]
  %v915 = vld [vmem:[%s3 + $0x354] sm:$0xf]
  %v916 = vld [vmem:[%s3 + $0x358] sm:$0xf]
  %v917 = vld [vmem:[%s3 + $0x35c] sm:$0xf]
  %v918 = vld [vmem:[%s3 + $0x360] sm:$0xf]
  %v919 = vld [vmem:[%s3 + $0x364] sm:$0xf]
  %v920 = vld [vmem:[%s3 + $0x368] sm:$0xf]
  %v921 = vld [vmem:[%s3 + $0x36c] sm:$0xf]
  %v922 = vld [vmem:[%s3 + $0x370] sm:$0xf]
  %v923 = vld [vmem:[%s3 + $0x374] sm:$0xf]
  %v924 = vld [vmem:[%s3 + $0x378] sm:$0xf]
  %v925 = vld [vmem:[%s3 + $0x37c] sm:$0xf]
  %v926 = vld [vmem:[%s3 + $0x380] sm:$0xf]
  %v927 = vld [vmem:[%s3 + $0x384] sm:$0xf]
  %v928 = vld [vmem:[%s3 + $0x388] sm:$0xf]
  %v929 = vld [vmem:[%s3 + $0x38c] sm:$0xf]
  %v930 = vld [vmem:[%s3 + $0x390] sm:$0xf]
  %v931 = vld [vmem:[%s3 + $0x394] sm:$0xf]
  %v932 = vld [vmem:[%s3 + $0x398] sm:$0xf]
  %v933 = vld [vmem:[%s3 + $0x39c] sm:$0xf]
  %v934 = vld [vmem:[%s3 + $0x3a0] sm:$0xf]
  %v935 = vld [vmem:[%s3 + $0x3a4] sm:$0xf]
  %v936 = vld [vmem:[%s3 + $0x3a8] sm:$0xf]
  %v937 = vld [vmem:[%s3 + $0x3ac] sm:$0xf]
  %v938 = vld [vmem:[%s3 + $0x3b0] sm:$0xf]
  %v939 = vld [vmem:[%s3 + $0x3b4] sm:$0xf]
  %v940 = vld [vmem:[%s3 + $0x3b8] sm:$0xf]
  %v941 = vld [vmem:[%s3 + $0x3bc] sm:$0xf]
  %v942 = vld [vmem:[%s3 + $0x3c0] sm:$0xf]
  %v943 = vld [vmem:[%s3 + $0x3c4] sm:$0xf]
  %v944 = vld [vmem:[%s3 + $0x3c8] sm:$0xf]
  %v945 = vld [vmem:[%s3 + $0x3cc] sm:$0xf]
  %v946 = vld [vmem:[%s3 + $0x3d0] sm:$0xf]
  %v947 = vld [vmem:[%s3 + $0x3d4] sm:$0xf]
  %v948 = vld [vmem:[%s3 + $0x3d8] sm:$0xf]
  %v949 = vld [vmem:[%s3 + $0x3dc] sm:$0xf]
  %v950 = vld [vmem:[%s3 + $0x3e0] sm:$0xf]
  %v951 = vld [vmem:[%s3 + $0x3e4] sm:$0xf]
  %v952 = vld [vmem:[%s3 + $0x3e8] sm:$0xf]
  %v953 = vld [vmem:[%s3 + $0x3ec] sm:$0xf]
  %v954 = vld [vmem:[%s3 + $0x3f0] sm:$0xf]
  %v955 = vld [vmem:[%s3 + $0x3f4] sm:$0xf]
  %v956 = vld [vmem:[%s3 + $0x3f8] sm:$0xf]
  %v957 = vld [vmem:[%s3 + $0x3fc] sm:$0xf]
  %v958 = vld [vmem:[%s4] sm:$0x1]
  %v960 = vlaneseq
  %v961 = vshrl.u32 %v960, 7
  %v962 = vsub.s32 0, %v961
  %v963 = vrot.slane %v958, %v962
  %v1221 = vunpack.c.l.b16 %v702
  %v1222 = vunpack.c.l.b16 %v703
  %v1223 = vunpack.c.l.b16 %v704
  %v1224 = vunpack.c.l.b16 %v705
  %v1225 = vunpack.c.l.b16 %v706
  %v1226 = vunpack.c.l.b16 %v707
  %v1227 = vunpack.c.l.b16 %v708
  %v1228 = vunpack.c.l.b16 %v709
  %v1229 = vunpack.c.l.b16 %v710
  %v1230 = vunpack.c.l.b16 %v711
  %v1231 = vunpack.c.l.b16 %v712
  %v1232 = vunpack.c.l.b16 %v713
  %v1233 = vunpack.c.l.b16 %v714
  %v1234 = vunpack.c.l.b16 %v715
  %v1235 = vunpack.c.l.b16 %v716
  %v1236 = vunpack.c.l.b16 %v717
  %v1237 = vunpack.c.l.b16 %v718
  %v1238 = vunpack.c.l.b16 %v719
  %v1239 = vunpack.c.l.b16 %v720
  %v1240 = vunpack.c.l.b16 %v721
  %v1241 = vunpack.c.l.b16 %v722
  %v1242 = vunpack.c.l.b16 %v723
  %v1243 = vunpack.c.l.b16 %v724
  %v1244 = vunpack.c.l.b16 %v725
  %v1245 = vunpack.c.l.b16 %v726
  %v1246 = vunpack.c.l.b16 %v727
  %v1247 = vunpack.c.l.b16 %v728
  %v1248 = vunpack.c.l.b16 %v729
  %v1249 = vunpack.c.l.b16 %v730
  %v1250 = vunpack.c.l.b16 %v731
  %v1251 = vunpack.c.l.b16 %v732
  %v1252 = vunpack.c.l.b16 %v733
  %v1253 = vunpack.c.l.b16 %v734
  %v1254 = vunpack.c.l.b16 %v735
  %v1255 = vunpack.c.l.b16 %v736
  %v1256 = vunpack.c.l.b16 %v737
  %v1257 = vunpack.c.l.b16 %v738
  %v1258 = vunpack.c.l.b16 %v739
  %v1259 = vunpack.c.l.b16 %v740
  %v1260 = vunpack.c.l.b16 %v741
  %v1261 = vunpack.c.l.b16 %v742
  %v1262 = vunpack.c.l.b16 %v743
  %v1263 = vunpack.c.l.b16 %v744
  %v1264 = vunpack.c.l.b16 %v745
  %v1265 = vunpack.c.l.b16 %v746
  %v1266 = vunpack.c.l.b16 %v747
  %v1267 = vunpack.c.l.b16 %v748
  %v1268 = vunpack.c.l.b16 %v749
  %v1269 = vunpack.c.l.b16 %v750
  %v1270 = vunpack.c.l.b16 %v751
  %v1271 = vunpack.c.l.b16 %v752
  %v1272 = vunpack.c.l.b16 %v753
  %v1273 = vunpack.c.l.b16 %v754
  %v1274 = vunpack.c.l.b16 %v755
  %v1275 = vunpack.c.l.b16 %v756
  %v1276 = vunpack.c.l.b16 %v757
  %v1277 = vunpack.c.l.b16 %v758
  %v1278 = vunpack.c.l.b16 %v759
  %v1279 = vunpack.c.l.b16 %v760
  %v1280 = vunpack.c.l.b16 %v761
  %v1281 = vunpack.c.l.b16 %v762
  %v1282 = vunpack.c.l.b16 %v763
  %v1283 = vunpack.c.l.b16 %v764
  %v1284 = vunpack.c.l.b16 %v765
  %v1285 = vunpack.c.l.b16 %v766
  %v1286 = vunpack.c.l.b16 %v767
  %v1287 = vunpack.c.l.b16 %v768
  %v1288 = vunpack.c.l.b16 %v769
  %v1289 = vunpack.c.l.b16 %v770
  %v1290 = vunpack.c.l.b16 %v771
  %v1291 = vunpack.c.l.b16 %v772
  %v1292 = vunpack.c.l.b16 %v773
  %v1293 = vunpack.c.l.b16 %v774
  %v1294 = vunpack.c.l.b16 %v775
  %v1295 = vunpack.c.l.b16 %v776
  %v1296 = vunpack.c.l.b16 %v777
  %v1297 = vunpack.c.l.b16 %v778
  %v1298 = vunpack.c.l.b16 %v779
  %v1299 = vunpack.c.l.b16 %v780
  %v1300 = vunpack.c.l.b16 %v781
  %v1301 = vunpack.c.l.b16 %v782
  %v1302 = vunpack.c.l.b16 %v783
  %v1303 = vunpack.c.l.b16 %v784
  %v1304 = vunpack.c.l.b16 %v785
  %v1305 = vunpack.c.l.b16 %v786
  %v1306 = vunpack.c.l.b16 %v787
  %v1307 = vunpack.c.l.b16 %v788
  %v1308 = vunpack.c.l.b16 %v789
  %v1309 = vunpack.c.l.b16 %v790
  %v1310 = vunpack.c.l.b16 %v791
  %v1311 = vunpack.c.l.b16 %v792
  %v1312 = vunpack.c.l.b16 %v793
  %v1313 = vunpack.c.l.b16 %v794
  %v1314 = vunpack.c.l.b16 %v795
  %v1315 = vunpack.c.l.b16 %v796
  %v1316 = vunpack.c.l.b16 %v797
  %v1317 = vunpack.c.l.b16 %v798
  %v1318 = vunpack.c.l.b16 %v799
  %v1319 = vunpack.c.l.b16 %v800
  %v1320 = vunpack.c.l.b16 %v801
  %v1321 = vunpack.c.l.b16 %v802
  %v1322 = vunpack.c.l.b16 %v803
  %v1323 = vunpack.c.l.b16 %v804
  %v1324 = vunpack.c.l.b16 %v805
  %v1325 = vunpack.c.l.b16 %v806
  %v1326 = vunpack.c.l.b16 %v807
  %v1327 = vunpack.c.l.b16 %v808
  %v1328 = vunpack.c.l.b16 %v809
  %v1329 = vunpack.c.l.b16 %v810
  %v1330 = vunpack.c.l.b16 %v811
  %v1331 = vunpack.c.l.b16 %v812
  %v1332 = vunpack.c.l.b16 %v813
  %v1333 = vunpack.c.l.b16 %v814
  %v1334 = vunpack.c.l.b16 %v815
  %v1335 = vunpack.c.l.b16 %v816
  %v1336 = vunpack.c.l.b16 %v817
  %v1337 = vunpack.c.l.b16 %v818
  %v1338 = vunpack.c.l.b16 %v819
  %v1339 = vunpack.c.l.b16 %v820
  %v1340 = vunpack.c.l.b16 %v821
  %v1341 = vunpack.c.l.b16 %v822
  %v1342 = vunpack.c.l.b16 %v823
  %v1343 = vunpack.c.l.b16 %v824
  %v1344 = vunpack.c.l.b16 %v825
  %v1345 = vunpack.c.l.b16 %v826
  %v1346 = vunpack.c.l.b16 %v827
  %v1347 = vunpack.c.l.b16 %v828
  %v1348 = vunpack.c.l.b16 %v829
  %v1349 = vunpack.c.l.b16 %v830
  %v1350 = vunpack.c.l.b16 %v831
  %v1351 = vunpack.c.l.b16 %v832
  %v1352 = vunpack.c.l.b16 %v833
  %v1353 = vunpack.c.l.b16 %v834
  %v1354 = vunpack.c.l.b16 %v835
  %v1355 = vunpack.c.l.b16 %v836
  %v1356 = vunpack.c.l.b16 %v837
  %v1357 = vunpack.c.l.b16 %v838
  %v1358 = vunpack.c.l.b16 %v839
  %v1359 = vunpack.c.l.b16 %v840
  %v1360 = vunpack.c.l.b16 %v841
  %v1361 = vunpack.c.l.b16 %v842
  %v1362 = vunpack.c.l.b16 %v843
  %v1363 = vunpack.c.l.b16 %v844
  %v1364 = vunpack.c.l.b16 %v845
  %v1365 = vunpack.c.l.b16 %v846
  %v1366 = vunpack.c.l.b16 %v847
  %v1367 = vunpack.c.l.b16 %v848
  %v1368 = vunpack.c.l.b16 %v849
  %v1369 = vunpack.c.l.b16 %v850
  %v1370 = vunpack.c.l.b16 %v851
  %v1371 = vunpack.c.l.b16 %v852
  %v1372 = vunpack.c.l.b16 %v853
  %v1373 = vunpack.c.l.b16 %v854
  %v1374 = vunpack.c.l.b16 %v855
  %v1375 = vunpack.c.l.b16 %v856
  %v1376 = vunpack.c.l.b16 %v857
  %v1377 = vunpack.c.l.b16 %v858
  %v1378 = vunpack.c.l.b16 %v859
  %v1379 = vunpack.c.l.b16 %v860
  %v1380 = vunpack.c.l.b16 %v861
  %v1381 = vunpack.c.l.b16 %v862
  %v1382 = vunpack.c.l.b16 %v863
  %v1383 = vunpack.c.l.b16 %v864
  %v1384 = vunpack.c.l.b16 %v865
  %v1385 = vunpack.c.l.b16 %v866
  %v1386 = vunpack.c.l.b16 %v867
  %v1387 = vunpack.c.l.b16 %v868
  %v1388 = vunpack.c.l.b16 %v869
  %v1389 = vunpack.c.l.b16 %v870
  %v1390 = vunpack.c.l.b16 %v871
  %v1391 = vunpack.c.l.b16 %v872
  %v1392 = vunpack.c.l.b16 %v873
  %v1393 = vunpack.c.l.b16 %v874
  %v1394 = vunpack.c.l.b16 %v875
  %v1395 = vunpack.c.l.b16 %v876
  %v1396 = vunpack.c.l.b16 %v877
  %v1397 = vunpack.c.l.b16 %v878
  %v1398 = vunpack.c.l.b16 %v879
  %v1399 = vunpack.c.l.b16 %v880
  %v1400 = vunpack.c.l.b16 %v881
  %v1401 = vunpack.c.l.b16 %v882
  %v1402 = vunpack.c.l.b16 %v883
  %v1403 = vunpack.c.l.b16 %v884
  %v1404 = vunpack.c.l.b16 %v885
  %v1405 = vunpack.c.l.b16 %v886
  %v1406 = vunpack.c.l.b16 %v887
  %v1407 = vunpack.c.l.b16 %v888
  %v1408 = vunpack.c.l.b16 %v889
  %v1409 = vunpack.c.l.b16 %v890
  %v1410 = vunpack.c.l.b16 %v891
  %v1411 = vunpack.c.l.b16 %v892
  %v1412 = vunpack.c.l.b16 %v893
  %v1413 = vunpack.c.l.b16 %v894
  %v1414 = vunpack.c.l.b16 %v895
  %v1415 = vunpack.c.l.b16 %v896
  %v1416 = vunpack.c.l.b16 %v897
  %v1417 = vunpack.c.l.b16 %v898
  %v1418 = vunpack.c.l.b16 %v899
  %v1419 = vunpack.c.l.b16 %v900
  %v1420 = vunpack.c.l.b16 %v901
  %v1421 = vunpack.c.l.b16 %v902
  %v1422 = vunpack.c.l.b16 %v903
  %v1423 = vunpack.c.l.b16 %v904
  %v1424 = vunpack.c.l.b16 %v905
  %v1425 = vunpack.c.l.b16 %v906
  %v1426 = vunpack.c.l.b16 %v907
  %v1427 = vunpack.c.l.b16 %v908
  %v1428 = vunpack.c.l.b16 %v909
  %v1429 = vunpack.c.l.b16 %v910
  %v1430 = vunpack.c.l.b16 %v911
  %v1431 = vunpack.c.l.b16 %v912
  %v1432 = vunpack.c.l.b16 %v913
  %v1433 = vunpack.c.l.b16 %v914
  %v1434 = vunpack.c.l.b16 %v915
  %v1435 = vunpack.c.l.b16 %v916
  %v1436 = vunpack.c.l.b16 %v917
  %v1437 = vunpack.c.l.b16 %v918
  %v1438 = vunpack.c.l.b16 %v919
  %v1439 = vunpack.c.l.b16 %v920
  %v1440 = vunpack.c.l.b16 %v921
  %v1441 = vunpack.c.l.b16 %v922
  %v1442 = vunpack.c.l.b16 %v923
  %v1443 = vunpack.c.l.b16 %v924
  %v1444 = vunpack.c.l.b16 %v925
  %v1445 = vunpack.c.l.b16 %v926
  %v1446 = vunpack.c.l.b16 %v927
  %v1447 = vunpack.c.l.b16 %v928
  %v1448 = vunpack.c.l.b16 %v929
  %v1449 = vunpack.c.l.b16 %v930
  %v1450 = vunpack.c.l.b16 %v931
  %v1451 = vunpack.c.l.b16 %v932
  %v1452 = vunpack.c.l.b16 %v933
  %v1453 = vunpack.c.l.b16 %v934
  %v1454 = vunpack.c.l.b16 %v935
  %v1455 = vunpack.c.l.b16 %v936
  %v1456 = vunpack.c.l.b16 %v937
  %v1457 = vunpack.c.l.b16 %v938
  %v1458 = vunpack.c.l.b16 %v939
  %v1459 = vunpack.c.l.b16 %v940
  %v1460 = vunpack.c.l.b16 %v941
  %v1461 = vunpack.c.l.b16 %v942
  %v1462 = vunpack.c.l.b16 %v943
  %v1463 = vunpack.c.l.b16 %v944
  %v1464 = vunpack.c.l.b16 %v945
  %v1465 = vunpack.c.l.b16 %v946
  %v1466 = vunpack.c.l.b16 %v947
  %v1467 = vunpack.c.l.b16 %v948
  %v1468 = vunpack.c.l.b16 %v949
  %v1469 = vunpack.c.l.b16 %v950
  %v1470 = vunpack.c.l.b16 %v951
  %v1471 = vunpack.c.l.b16 %v952
  %v1472 = vunpack.c.l.b16 %v953
  %v1473 = vunpack.c.l.b16 %v954
  %v1474 = vunpack.c.l.b16 %v955
  %v1475 = vunpack.c.l.b16 %v956
  %v1476 = vunpack.c.l.b16 %v957
  %v1477 = vpack.c.b16 %v1222, %v1221
  %v1478 = vpack.c.b16 %v1224, %v1223
  %v1479 = vpack.c.b16 %v1226, %v1225
  %v1480 = vpack.c.b16 %v1228, %v1227
  %v1481 = vpack.c.b16 %v1230, %v1229
  %v1482 = vpack.c.b16 %v1232, %v1231
  %v1483 = vpack.c.b16 %v1234, %v1233
  %v1484 = vpack.c.b16 %v1236, %v1235
  %v1485 = vpack.c.b16 %v1238, %v1237
  %v1486 = vpack.c.b16 %v1240, %v1239
  %v1487 = vpack.c.b16 %v1242, %v1241
  %v1488 = vpack.c.b16 %v1244, %v1243
  %v1489 = vpack.c.b16 %v1246, %v1245
  %v1490 = vpack.c.b16 %v1248, %v1247
  %v1491 = vpack.c.b16 %v1250, %v1249
  %v1492 = vpack.c.b16 %v1252, %v1251
  %v1493 = vpack.c.b16 %v1254, %v1253
  %v1494 = vpack.c.b16 %v1256, %v1255
  %v1495 = vpack.c.b16 %v1258, %v1257
  %v1496 = vpack.c.b16 %v1260, %v1259
  %v1497 = vpack.c.b16 %v1262, %v1261
  %v1498 = vpack.c.b16 %v1264, %v1263
  %v1499 = vpack.c.b16 %v1266, %v1265
  %v1500 = vpack.c.b16 %v1268, %v1267
  %v1501 = vpack.c.b16 %v1270, %v1269
  %v1502 = vpack.c.b16 %v1272, %v1271
  %v1503 = vpack.c.b16 %v1274, %v1273
  %v1504 = vpack.c.b16 %v1276, %v1275
  %v1505 = vpack.c.b16 %v1278, %v1277
  %v1506 = vpack.c.b16 %v1280, %v1279
  %v1507 = vpack.c.b16 %v1282, %v1281
  %v1508 = vpack.c.b16 %v1284, %v1283
  %v1509 = vpack.c.b16 %v1286, %v1285
  %v1510 = vpack.c.b16 %v1288, %v1287
  %v1511 = vpack.c.b16 %v1290, %v1289
  %v1512 = vpack.c.b16 %v1292, %v1291
  %v1513 = vpack.c.b16 %v1294, %v1293
  %v1514 = vpack.c.b16 %v1296, %v1295
  %v1515 = vpack.c.b16 %v1298, %v1297
  %v1516 = vpack.c.b16 %v1300, %v1299
  %v1517 = vpack.c.b16 %v1302, %v1301
  %v1518 = vpack.c.b16 %v1304, %v1303
  %v1519 = vpack.c.b16 %v1306, %v1305
  %v1520 = vpack.c.b16 %v1308, %v1307
  %v1521 = vpack.c.b16 %v1310, %v1309
  %v1522 = vpack.c.b16 %v1312, %v1311
  %v1523 = vpack.c.b16 %v1314, %v1313
  %v1524 = vpack.c.b16 %v1316, %v1315
  %v1525 = vpack.c.b16 %v1318, %v1317
  %v1526 = vpack.c.b16 %v1320, %v1319
  %v1527 = vpack.c.b16 %v1322, %v1321
  %v1528 = vpack.c.b16 %v1324, %v1323
  %v1529 = vpack.c.b16 %v1326, %v1325
  %v1530 = vpack.c.b16 %v1328, %v1327
  %v1531 = vpack.c.b16 %v1330, %v1329
  %v1532 = vpack.c.b16 %v1332, %v1331
  %v1533 = vpack.c.b16 %v1334, %v1333
  %v1534 = vpack.c.b16 %v1336, %v1335
  %v1535 = vpack.c.b16 %v1338, %v1337
  %v1536 = vpack.c.b16 %v1340, %v1339
  %v1537 = vpack.c.b16 %v1342, %v1341
  %v1538 = vpack.c.b16 %v1344, %v1343
  %v1539 = vpack.c.b16 %v1346, %v1345
  %v1540 = vpack.c.b16 %v1348, %v1347
  %v1541 = vpack.c.b16 %v1350, %v1349
  %v1542 = vpack.c.b16 %v1352, %v1351
  %v1543 = vpack.c.b16 %v1354, %v1353
  %v1544 = vpack.c.b16 %v1356, %v1355
  %v1545 = vpack.c.b16 %v1358, %v1357
  %v1546 = vpack.c.b16 %v1360, %v1359
  %v1547 = vpack.c.b16 %v1362, %v1361
  %v1548 = vpack.c.b16 %v1364, %v1363
  %v1549 = vpack.c.b16 %v1366, %v1365
  %v1550 = vpack.c.b16 %v1368, %v1367
  %v1551 = vpack.c.b16 %v1370, %v1369
  %v1552 = vpack.c.b16 %v1372, %v1371
  %v1553 = vpack.c.b16 %v1374, %v1373
  %v1554 = vpack.c.b16 %v1376, %v1375
  %v1555 = vpack.c.b16 %v1378, %v1377
  %v1556 = vpack.c.b16 %v1380, %v1379
  %v1557 = vpack.c.b16 %v1382, %v1381
  %v1558 = vpack.c.b16 %v1384, %v1383
  %v1559 = vpack.c.b16 %v1386, %v1385
  %v1560 = vpack.c.b16 %v1388, %v1387
  %v1561 = vpack.c.b16 %v1390, %v1389
  %v1562 = vpack.c.b16 %v1392, %v1391
  %v1563 = vpack.c.b16 %v1394, %v1393
  %v1564 = vpack.c.b16 %v1396, %v1395
  %v1565 = vpack.c.b16 %v1398, %v1397
  %v1566 = vpack.c.b16 %v1400, %v1399
  %v1567 = vpack.c.b16 %v1402, %v1401
  %v1568 = vpack.c.b16 %v1404, %v1403
  %v1569 = vpack.c.b16 %v1406, %v1405
  %v1570 = vpack.c.b16 %v1408, %v1407
  %v1571 = vpack.c.b16 %v1410, %v1409
  %v1572 = vpack.c.b16 %v1412, %v1411
  %v1573 = vpack.c.b16 %v1414, %v1413
  %v1574 = vpack.c.b16 %v1416, %v1415
  %v1575 = vpack.c.b16 %v1418, %v1417
  %v1576 = vpack.c.b16 %v1420, %v1419
  %v1577 = vpack.c.b16 %v1422, %v1421
  %v1578 = vpack.c.b16 %v1424, %v1423
  %v1579 = vpack.c.b16 %v1426, %v1425
  %v1580 = vpack.c.b16 %v1428, %v1427
  %v1581 = vpack.c.b16 %v1430, %v1429
  %v1582 = vpack.c.b16 %v1432, %v1431
  %v1583 = vpack.c.b16 %v1434, %v1433
  %v1584 = vpack.c.b16 %v1436, %v1435
  %v1585 = vpack.c.b16 %v1438, %v1437
  %v1586 = vpack.c.b16 %v1440, %v1439
  %v1587 = vpack.c.b16 %v1442, %v1441
  %v1588 = vpack.c.b16 %v1444, %v1443
  %v1589 = vpack.c.b16 %v1446, %v1445
  %v1590 = vpack.c.b16 %v1448, %v1447
  %v1591 = vpack.c.b16 %v1450, %v1449
  %v1592 = vpack.c.b16 %v1452, %v1451
  %v1593 = vpack.c.b16 %v1454, %v1453
  %v1594 = vpack.c.b16 %v1456, %v1455
  %v1595 = vpack.c.b16 %v1458, %v1457
  %v1596 = vpack.c.b16 %v1460, %v1459
  %v1597 = vpack.c.b16 %v1462, %v1461
  %v1598 = vpack.c.b16 %v1464, %v1463
  %v1599 = vpack.c.b16 %v1466, %v1465
  %v1600 = vpack.c.b16 %v1468, %v1467
  %v1601 = vpack.c.b16 %v1470, %v1469
  %v1602 = vpack.c.b16 %v1472, %v1471
  %v1603 = vpack.c.b16 %v1474, %v1473
  %v1604 = vpack.c.b16 %v1476, %v1475
  %1733 = vmatprep.subr.bf16.mxu0 0
  %1734 = vmatpush1.bf16.msra.mxu0 %v1477
  %1735 = vmatprep.subr.bf16.mxu0 0
  %1736 = vmatpush1.bf16.msra.mxu0 %v1478
  %1737 = vmatprep.subr.bf16.mxu0 0
  %1738 = vmatpush1.bf16.msra.mxu0 %v1479
  %1739 = vmatprep.subr.bf16.mxu0 0
  %1740 = vmatpush1.bf16.msra.mxu0 %v1480
  %1741 = vmatprep.subr.bf16.mxu0 0
  %1742 = vmatpush1.bf16.msra.mxu0 %v1481
  %1743 = vmatprep.subr.bf16.mxu0 0
  %1744 = vmatpush1.bf16.msra.mxu0 %v1482
  %1745 = vmatprep.subr.bf16.mxu0 0
  %1746 = vmatpush1.bf16.msra.mxu0 %v1483
  %1747 = vmatprep.subr.bf16.mxu0 0
  %1748 = vmatpush1.bf16.msra.mxu0 %v1484
  %1749 = vmatprep.subr.bf16.mxu0 0
  %1750 = vmatpush1.bf16.msra.mxu0 %v1485
  %1751 = vmatprep.subr.bf16.mxu0 0
  %1752 = vmatpush1.bf16.msra.mxu0 %v1486
  %1753 = vmatprep.subr.bf16.mxu0 0
  %1754 = vmatpush1.bf16.msra.mxu0 %v1487
  %1755 = vmatprep.subr.bf16.mxu0 0
  %1756 = vmatpush1.bf16.msra.mxu0 %v1488
  %1757 = vmatprep.subr.bf16.mxu0 0
  %1758 = vmatpush1.bf16.msra.mxu0 %v1489
  %1759 = vmatprep.subr.bf16.mxu0 0
  %1760 = vmatpush1.bf16.msra.mxu0 %v1490
  %1761 = vmatprep.subr.bf16.mxu0 0
  %1762 = vmatpush1.bf16.msra.mxu0 %v1491
  %1763 = vmatprep.subr.bf16.mxu0 0
  %1764 = vmatpush1.bf16.msra.mxu0 %v1492
  %1765 = vmatprep.mubr.bf16.mxu0 %v687
  %1766 = vmatmul.mubr.bf16.gmra.mrb[0].mxu0 %v686
  %v1767 = vpop.f32.mrb[0].mxu0
  %v1768 = vadd.f32 %v963, %v1767
  %v1769 = vpop.f32.mrb[0].mxu0
  %v1770 = vpop.f32.mrb[0].mxu0
  %v1771 = vadd.f32 %v963, %v1770
  %v1772 = vpop.f32.mrb[0].mxu0
  %1773 = vdwg.mxu0
  %1774 = vmatprep.subr.bf16.mxu0 0
  %1775 = vmatpush1.bf16.msra.mxu0 %v1493
  %1776 = vmatprep.subr.bf16.mxu0 0
  %1777 = vmatpush1.bf16.msra.mxu0 %v1494
  %1778 = vmatprep.subr.bf16.mxu0 0
  %1779 = vmatpush1.bf16.msra.mxu0 %v1495
  %1780 = vmatprep.subr.bf16.mxu0 0
  %1781 = vmatpush1.bf16.msra.mxu0 %v1496
  %1782 = vmatprep.subr.bf16.mxu0 0
  %1783 = vmatpush1.bf16.msra.mxu0 %v1497
  %1784 = vmatprep.subr.bf16.mxu0 0
  %1785 = vmatpush1.bf16.msra.mxu0 %v1498
  %1786 = vmatprep.subr.bf16.mxu0 0
  %1787 = vmatpush1.bf16.msra.mxu0 %v1499
  %1788 = vmatprep.subr.bf16.mxu0 0
  %1789 = vmatpush1.bf16.msra.mxu0 %v1500
  %1790 = vmatprep.subr.bf16.mxu0 0
  %1791 = vmatpush1.bf16.msra.mxu0 %v1501
  %1792 = vmatprep.subr.bf16.mxu0 0
  %1793 = vmatpush1.bf16.msra.mxu0 %v1502
  %1794 = vmatprep.subr.bf16.mxu0 0
  %1795 = vmatpush1.bf16.msra.mxu0 %v1503
  %1796 = vmatprep.subr.bf16.mxu0 0
  %1797 = vmatpush1.bf16.msra.mxu0 %v1504
  %1798 = vmatprep.subr.bf16.mxu0 0
  %1799 = vmatpush1.bf16.msra.mxu0 %v1505
  %1800 = vmatprep.subr.bf16.mxu0 0
  %1801 = vmatpush1.bf16.msra.mxu0 %v1506
  %1802 = vmatprep.subr.bf16.mxu0 0
  %1803 = vmatpush1.bf16.msra.mxu0 %v1507
  %1804 = vmatprep.subr.bf16.mxu0 0
  %1805 = vmatpush1.bf16.msra.mxu0 %v1508
  %1806 = vmatprep.mubr.bf16.mxu0 %v689
  %1807 = vmatmul.mubr.bf16.gmra.mrb[0].mxu0 %v688
  %v1808 = vpop.f32.mrb[0].mxu0
  %v1809 = vadd.f32 %v1768, %v1808
  %v1810 = vpop.f32.mrb[0].mxu0
  %v1811 = vpop.f32.mrb[0].mxu0
  %v1812 = vadd.f32 %v1771, %v1811
  %v1813 = vpop.f32.mrb[0].mxu0
  %1814 = vdwg.mxu0
  %1815 = vmatprep.subr.bf16.mxu0 0
  %1816 = vmatpush1.bf16.msra.mxu0 %v1509
  %1817 = vmatprep.subr.bf16.mxu0 0
  %1818 = vmatpush1.bf16.msra.mxu0 %v1510
  %1819 = vmatprep.subr.bf16.mxu0 0
  %1820 = vmatpush1.bf16.msra.mxu0 %v1511
  %1821 = vmatprep.subr.bf16.mxu0 0
  %1822 = vmatpush1.bf16.msra.mxu0 %v1512
  %1823 = vmatprep.subr.bf16.mxu0 0
  %1824 = vmatpush1.bf16.msra.mxu0 %v1513
  %1825 = vmatprep.subr.bf16.mxu0 0
  %1826 = vmatpush1.bf16.msra.mxu0 %v1514
  %1827 = vmatprep.subr.bf16.mxu0 0
  %1828 = vmatpush1.bf16.msra.mxu0 %v1515
  %1829 = vmatprep.subr.bf16.mxu0 0
  %1830 = vmatpush1.bf16.msra.mxu0 %v1516
  %1831 = vmatprep.subr.bf16.mxu0 0
  %1832 = vmatpush1.bf16.msra.mxu0 %v1517
  %1833 = vmatprep.subr.bf16.mxu0 0
  %1834 = vmatpush1.bf16.msra.mxu0 %v1518
  %1835 = vmatprep.subr.bf16.mxu0 0
  %1836 = vmatpush1.bf16.msra.mxu0 %v1519
  %1837 = vmatprep.subr.bf16.mxu0 0
  %1838 = vmatpush1.bf16.msra.mxu0 %v1520
  %1839 = vmatprep.subr.bf16.mxu0 0
  %1840 = vmatpush1.bf16.msra.mxu0 %v1521
  %1841 = vmatprep.subr.bf16.mxu0 0
  %1842 = vmatpush1.bf16.msra.mxu0 %v1522
  %1843 = vmatprep.subr.bf16.mxu0 0
  %1844 = vmatpush1.bf16.msra.mxu0 %v1523
  %1845 = vmatprep.subr.bf16.mxu0 0
  %1846 = vmatpush1.bf16.msra.mxu0 %v1524
  %1847 = vmatprep.mubr.bf16.mxu0 %v691
  %1848 = vmatmul.mubr.bf16.gmra.mrb[0].mxu0 %v690
  %v1849 = vpop.f32.mrb[0].mxu0
  %v1850 = vadd.f32 %v1809, %v1849
  %v1851 = vpop.f32.mrb[0].mxu0
  %v1852 = vpop.f32.mrb[0].mxu0
  %v1853 = vadd.f32 %v1812, %v1852
  %v1854 = vpop.f32.mrb[0].mxu0
  %1855 = vdwg.mxu0
  %1856 = vmatprep.subr.bf16.mxu0 0
  %1857 = vmatpush1.bf16.msra.mxu0 %v1525
  %1858 = vmatprep.subr.bf16.mxu0 0
  %1859 = vmatpush1.bf16.msra.mxu0 %v1526
  %1860 = vmatprep.subr.bf16.mxu0 0
  %1861 = vmatpush1.bf16.msra.mxu0 %v1527
  %1862 = vmatprep.subr.bf16.mxu0 0
  %1863 = vmatpush1.bf16.msra.mxu0 %v1528
  %1864 = vmatprep.subr.bf16.mxu0 0
  %1865 = vmatpush1.bf16.msra.mxu0 %v1529
  %1866 = vmatprep.subr.bf16.mxu0 0
  %1867 = vmatpush1.bf16.msra.mxu0 %v1530
  %1868 = vmatprep.subr.bf16.mxu0 0
  %1869 = vmatpush1.bf16.msra.mxu0 %v1531
  %1870 = vmatprep.subr.bf16.mxu0 0
  %1871 = vmatpush1.bf16.msra.mxu0 %v1532
  %1872 = vmatprep.subr.bf16.mxu0 0
  %1873 = vmatpush1.bf16.msra.mxu0 %v1533
  %1874 = vmatprep.subr.bf16.mxu0 0
  %1875 = vmatpush1.bf16.msra.mxu0 %v1534
  %1876 = vmatprep.subr.bf16.mxu0 0
  %1877 = vmatpush1.bf16.msra.mxu0 %v1535
  %1878 = vmatprep.subr.bf16.mxu0 0
  %1879 = vmatpush1.bf16.msra.mxu0 %v1536
  %1880 = vmatprep.subr.bf16.mxu0 0
  %1881 = vmatpush1.bf16.msra.mxu0 %v1537
  %1882 = vmatprep.subr.bf16.mxu0 0
  %1883 = vmatpush1.bf16.msra.mxu0 %v1538
  %1884 = vmatprep.subr.bf16.mxu0 0
  %1885 = vmatpush1.bf16.msra.mxu0 %v1539
  %1886 = vmatprep.subr.bf16.mxu0 0
  %1887 = vmatpush1.bf16.msra.mxu0 %v1540
  %1888 = vmatprep.mubr.bf16.mxu0 %v693
  %1889 = vmatmul.mubr.bf16.gmra.mrb[0].mxu0 %v692
  %v1890 = vpop.f32.mrb[0].mxu0
  %v1891 = vadd.f32 %v1850, %v1890
  %v1892 = vpop.f32.mrb[0].mxu0
  %v1893 = vpop.f32.mrb[0].mxu0
  %v1894 = vadd.f32 %v1853, %v1893
  %v1895 = vpop.f32.mrb[0].mxu0
  %1896 = vdwg.mxu0
  %1897 = vmatprep.subr.bf16.mxu0 0
  %1898 = vmatpush1.bf16.msra.mxu0 %v1541
  %1899 = vmatprep.subr.bf16.mxu0 0
  %1900 = vmatpush1.bf16.msra.mxu0 %v1542
  %1901 = vmatprep.subr.bf16.mxu0 0
  %1902 = vmatpush1.bf16.msra.mxu0 %v1543
  %1903 = vmatprep.subr.bf16.mxu0 0
  %1904 = vmatpush1.bf16.msra.mxu0 %v1544
  %1905 = vmatprep.subr.bf16.mxu0 0
  %1906 = vmatpush1.bf16.msra.mxu0 %v1545
  %1907 = vmatprep.subr.bf16.mxu0 0
  %1908 = vmatpush1.bf16.msra.mxu0 %v1546
  %1909 = vmatprep.subr.bf16.mxu0 0
  %1910 = vmatpush1.bf16.msra.mxu0 %v1547
  %1911 = vmatprep.subr.bf16.mxu0 0
  %1912 = vmatpush1.bf16.msra.mxu0 %v1548
  %1913 = vmatprep.subr.bf16.mxu0 0
  %1914 = vmatpush1.bf16.msra.mxu0 %v1549
  %1915 = vmatprep.subr.bf16.mxu0 0
  %1916 = vmatpush1.bf16.msra.mxu0 %v1550
  %1917 = vmatprep.subr.bf16.mxu0 0
  %1918 = vmatpush1.bf16.msra.mxu0 %v1551
  %1919 = vmatprep.subr.bf16.mxu0 0
  %1920 = vmatpush1.bf16.msra.mxu0 %v1552
  %1921 = vmatprep.subr.bf16.mxu0 0
  %1922 = vmatpush1.bf16.msra.mxu0 %v1553
  %1923 = vmatprep.subr.bf16.mxu0 0
  %1924 = vmatpush1.bf16.msra.mxu0 %v1554
  %1925 = vmatprep.subr.bf16.mxu0 0
  %1926 = vmatpush1.bf16.msra.mxu0 %v1555
  %1927 = vmatprep.subr.bf16.mxu0 0
  %1928 = vmatpush1.bf16.msra.mxu0 %v1556
  %1929 = vmatprep.mubr.bf16.mxu0 %v695
  %1930 = vmatmul.mubr.bf16.gmra.mrb[0].mxu0 %v694
  %v1931 = vpop.f32.mrb[0].mxu0
  %v1932 = vadd.f32 %v1891, %v1931
  %v1933 = vpop.f32.mrb[0].mxu0
  %v1934 = vpop.f32.mrb[0].mxu0
  %v1935 = vadd.f32 %v1894, %v1934
  %v1936 = vpop.f32.mrb[0].mxu0
  %1937 = vdwg.mxu0
  %1938 = vmatprep.subr.bf16.mxu0 0
  %1939 = vmatpush1.bf16.msra.mxu0 %v1557
  %1940 = vmatprep.subr.bf16.mxu0 0
  %1941 = vmatpush1.bf16.msra.mxu0 %v1558
  %1942 = vmatprep.subr.bf16.mxu0 0
  %1943 = vmatpush1.bf16.msra.mxu0 %v1559
  %1944 = vmatprep.subr.bf16.mxu0 0
  %1945 = vmatpush1.bf16.msra.mxu0 %v1560
  %1946 = vmatprep.subr.bf16.mxu0 0
  %1947 = vmatpush1.bf16.msra.mxu0 %v1561
  %1948 = vmatprep.subr.bf16.mxu0 0
  %1949 = vmatpush1.bf16.msra.mxu0 %v1562
  %1950 = vmatprep.subr.bf16.mxu0 0
  %1951 = vmatpush1.bf16.msra.mxu0 %v1563
  %1952 = vmatprep.subr.bf16.mxu0 0
  %1953 = vmatpush1.bf16.msra.mxu0 %v1564
  %1954 = vmatprep.subr.bf16.mxu0 0
  %1955 = vmatpush1.bf16.msra.mxu0 %v1565
  %1956 = vmatprep.subr.bf16.mxu0 0
  %1957 = vmatpush1.bf16.msra.mxu0 %v1566
  %1958 = vmatprep.subr.bf16.mxu0 0
  %1959 = vmatpush1.bf16.msra.mxu0 %v1567
  %1960 = vmatprep.subr.bf16.mxu0 0
  %1961 = vmatpush1.bf16.msra.mxu0 %v1568
  %1962 = vmatprep.subr.bf16.mxu0 0
  %1963 = vmatpush1.bf16.msra.mxu0 %v1569
  %1964 = vmatprep.subr.bf16.mxu0 0
  %1965 = vmatpush1.bf16.msra.mxu0 %v1570
  %1966 = vmatprep.subr.bf16.mxu0 0
  %1967 = vmatpush1.bf16.msra.mxu0 %v1571
  %1968 = vmatprep.subr.bf16.mxu0 0
  %1969 = vmatpush1.bf16.msra.mxu0 %v1572
  %1970 = vmatprep.mubr.bf16.mxu0 %v697
  %1971 = vmatmul.mubr.bf16.gmra.mrb[0].mxu0 %v696
  %v1972 = vpop.f32.mrb[0].mxu0
  %v1973 = vadd.f32 %v1932, %v1972
  %v1974 = vpop.f32.mrb[0].mxu0
  %v1975 = vpop.f32.mrb[0].mxu0
  %v1976 = vadd.f32 %v1935, %v1975
  %v1977 = vpop.f32.mrb[0].mxu0
  %1978 = vdwg.mxu0
  %1979 = vmatprep.subr.bf16.mxu0 0
  %1980 = vmatpush1.bf16.msra.mxu0 %v1573
  %1981 = vmatprep.subr.bf16.mxu0 0
  %1982 = vmatpush1.bf16.msra.mxu0 %v1574
  %1983 = vmatprep.subr.bf16.mxu0 0
  %1984 = vmatpush1.bf16.msra.mxu0 %v1575
  %1985 = vmatprep.subr.bf16.mxu0 0
  %1986 = vmatpush1.bf16.msra.mxu0 %v1576
  %1987 = vmatprep.subr.bf16.mxu0 0
  %1988 = vmatpush1.bf16.msra.mxu0 %v1577
  %1989 = vmatprep.subr.bf16.mxu0 0
  %1990 = vmatpush1.bf16.msra.mxu0 %v1578
  %1991 = vmatprep.subr.bf16.mxu0 0
  %1992 = vmatpush1.bf16.msra.mxu0 %v1579
  %1993 = vmatprep.subr.bf16.mxu0 0
  %1994 = vmatpush1.bf16.msra.mxu0 %v1580
  %1995 = vmatprep.subr.bf16.mxu0 0
  %1996 = vmatpush1.bf16.msra.mxu0 %v1581
  %1997 = vmatprep.subr.bf16.mxu0 0
  %1998 = vmatpush1.bf16.msra.mxu0 %v1582
  %1999 = vmatprep.subr.bf16.mxu0 0
  %2000 = vmatpush1.bf16.msra.mxu0 %v1583
  %2001 = vmatprep.subr.bf16.mxu0 0
  %2002 = vmatpush1.bf16.msra.mxu0 %v1584
  %2003 = vmatprep.subr.bf16.mxu0 0
  %2004 = vmatpush1.bf16.msra.mxu0 %v1585
  %2005 = vmatprep.subr.bf16.mxu0 0
  %2006 = vmatpush1.bf16.msra.mxu0 %v1586
  %2007 = vmatprep.subr.bf16.mxu0 0
  %2008 = vmatpush1.bf16.msra.mxu0 %v1587
  %2009 = vmatprep.subr.bf16.mxu0 0
  %2010 = vmatpush1.bf16.msra.mxu0 %v1588
  %2011 = vmatprep.mubr.bf16.mxu0 %v699
  %2012 = vmatmul.mubr.bf16.gmra.mrb[0].mxu0 %v698
  %v2013 = vpop.f32.mrb[0].mxu0
  %v2014 = vadd.f32 %v1973, %v2013
  %v2015 = vpop.f32.mrb[0].mxu0
  %v2016 = vpop.f32.mrb[0].mxu0
  %v2017 = vadd.f32 %v1976, %v2016
  %v2018 = vpop.f32.mrb[0].mxu0
  %2019 = vdwg.mxu0
  %2020 = vmatprep.subr.bf16.mxu0 0
  %2021 = vmatpush1.bf16.msra.mxu0 %v1589
  %2022 = vmatprep.subr.bf16.mxu0 0
  %2023 = vmatpush1.bf16.msra.mxu0 %v1590
  %2024 = vmatprep.subr.bf16.mxu0 0
  %2025 = vmatpush1.bf16.msra.mxu0 %v1591
  %2026 = vmatprep.subr.bf16.mxu0 0
  %2027 = vmatpush1.bf16.msra.mxu0 %v1592
  %2028 = vmatprep.subr.bf16.mxu0 0
  %2029 = vmatpush1.bf16.msra.mxu0 %v1593
  %2030 = vmatprep.subr.bf16.mxu0 0
  %2031 = vmatpush1.bf16.msra.mxu0 %v1594
  %2032 = vmatprep.subr.bf16.mxu0 0
  %2033 = vmatpush1.bf16.msra.mxu0 %v1595
  %2034 = vmatprep.subr.bf16.mxu0 0
  %2035 = vmatpush1.bf16.msra.mxu0 %v1596
  %2036 = vmatprep.subr.bf16.mxu0 0
  %2037 = vmatpush1.bf16.msra.mxu0 %v1597
  %2038 = vmatprep.subr.bf16.mxu0 0
  %2039 = vmatpush1.bf16.msra.mxu0 %v1598
  %2040 = vmatprep.subr.bf16.mxu0 0
  %2041 = vmatpush1.bf16.msra.mxu0 %v1599
  %2042 = vmatprep.subr.bf16.mxu0 0
  %2043 = vmatpush1.bf16.msra.mxu0 %v1600
  %2044 = vmatprep.subr.bf16.mxu0 0
  %2045 = vmatpush1.bf16.msra.mxu0 %v1601
  %2046 = vmatprep.subr.bf16.mxu0 0
  %2047 = vmatpush1.bf16.msra.mxu0 %v1602
  %2048 = vmatprep.subr.bf16.mxu0 0
  %2049 = vmatpush1.bf16.msra.mxu0 %v1603
  %2050 = vmatprep.subr.bf16.mxu0 0
  %2051 = vmatpush1.bf16.msra.mxu0 %v1604
  %2052 = vmatprep.mubr.bf16.mxu0 %v701
  %2053 = vmatmul.mubr.bf16.gmra.mrb[0].mxu0 %v700
  %v2054 = vpop.f32.mrb[0].mxu0
  %v2055 = vadd.f32 %v2014, %v2054
  %v2056 = vpop.f32.mrb[0].mxu0
  %v2057 = vpop.f32.mrb[0].mxu0
  %v2058 = vadd.f32 %v2017, %v2057
  %v2059 = vpop.f32.mrb[0].mxu0
  %2060 = vdwg.mxu0
  %v2061 = vadd.f32 %v27, %v2055
  %v2062 = vadd.f32 %v28, %v2058
  %v2063 = vsel %vm306, %v2061, 0.0
  %2064 = vadd.xlane.f32.xlu0 %v2063
  %v2065 = vpop.xlane.xlu0 %2064
  %v2066 = vsel %vm306, %v2062, 0.0
  %2067 = vadd.xlane.f32.xlu0 %v2066
  %v2068 = vpop.xlane.xlu0 %2067
  %v2069 = vrcp.pop 32.0
  %v2070 = vmul.f32 %v2065, %v2069
  %v2071 = vmul.f32 %v2068, %v2069
  %v2072 = vsub.f32 %v2061, %v2070
  %v2073 = vsub.f32 %v2062, %v2071
  %v2074 = vmul.f32 %v2072, %v2072
  %v2075 = vmul.f32 %v2073, %v2073
  %v2076 = vsel %vm306, %v2074, 0.0
  %2077 = vadd.xlane.f32.xlu0 %v2076
  %v2078 = vpop.xlane.xlu0 %2077
  %v2079 = vsel %vm306, %v2075, 0.0
  %2080 = vadd.xlane.f32.xlu0 %v2079
  %v2081 = vpop.xlane.xlu0 %2080
  %v2082 = vmul.f32 %v2078, %v2069
  %v2083 = vmul.f32 %v2081, %v2069
  %v2084 = vadd.f32 %v2082, 1e-05
  %v2085 = vadd.f32 %v2083, 1e-05
  %v2086 = vrsqrt.pop %v2084
  %v2087 = vrsqrt.pop %v2085
  %v2088 = vmul.f32 %v2072, %v2086
  %v2089 = vmul.f32 %v2073, %v2087
  %v2090 = vld [vmem:[%s5] sm:$0x1]
  %v2092 = vlaneseq
  %v2093 = vshrl.u32 %v2092, 7
  %v2094 = vsub.s32 0, %v2093
  %v2095 = vrot.slane %v2090, %v2094
  %v2097 = vmul.f32 %v2088, %v2095
  %v2098 = vmul.f32 %v2089, %v2095
  %v2099 = vld [vmem:[%s6] sm:$0x1]
  %v2101 = vlaneseq
  %v2102 = vshrl.u32 %v2101, 7
  %v2103 = vsub.s32 0, %v2102
  %v2104 = vrot.slane %v2099, %v2103
  %v2106 = vadd.f32 %v2097, %v2104
  %v2107 = vadd.f32 %v2098, %v2104
  %2108 = vst.msk [vmem:[%s7] sm:$0xff] %vm306, %v2106
  %2109 = vst.msk [vmem:[%s7 + $0x8] sm:$0xff] %vm306, %v2107
  // Predicated region
  $region30: #{decoder_forward.9} parent=0 // pred_check
    _
  $region31: #{decoder_forward.9} parent=0 // pred_check_branch
    %2111 = sbr.rel (0) target = $region33
  $region32: #{decoder_forward.9} parent=0 // pred_region
    _
  $region33: #{decoder_forward.9} parent=0 // pred_fallthru
    _
  // Predicated region
  $region34: #{decoder_forward.9} parent=0 // pred_check
    _
  $region35: #{decoder_forward.9} parent=0 // pred_check_branch
    %2113 = sbr.rel (0) target = $region37
  $region36: #{decoder_forward.9} parent=0 // pred_region
    _
  $region37: #{decoder_forward.9} parent=0 // pred_fallthru
    _

</llo_original>
